<compile_context>
chip_gen: v5e
topology: v5e:2x2
jax: 0.10.0
libtpu: 0.0.40
codegen_flags: <defaults>
</compile_context>

<pallas_src>
import jax
import jax.numpy as jnp
from jax.experimental import pallas as pl
from jax.experimental.pallas import tpu as pltpu

LATENT = 8      # latent_dim
COND = 8        # condition_dim
HIDDEN = 32     # hidden_dim
LAYERS = 3      # num_layers
BATCH = 2
SEQ = 8
FC_PAD = 128    # lane-dense output width for the fc head
SUBLANE = 8     # rows reserved per time step (tile-aligned row groups)


def gru_dynamic_kernel(z_ref, a_ref, h0_ref, wz0_ref, wa0_ref, w_ihr_ref,
                       w_hh_ref, gb_ref, bhn_ref, wfc_ref, bfc_ref,
                       zout_ref, hout_ref,
                       seq_a_ref, seq_b_ref):
    """Whole GRU_Dynamic forward in VMEM.

    Row layout: every time step t owns rows [t*8, t*8+B) of each (T*8, ·) slab
    (rows t*8+B .. t*8+8 are zero padding), so per-step accesses are tile-aligned.

    z_ref:   (T*8, latent)   time-major, sublane-padded
    a_ref:   (T*8, cond)
    h0_ref:  (L, B, H)
    wz0/wa0: (latent, 3H) / (cond, 3H)   layer-0 input weights, gate lanes r|z|n
    w_ihr:   (L-1, H, 3H)                input weights of layers 1..L-1
    w_hh:    (L, H, 3H)                  recurrent weights (loop-invariant RHS)
    gb:      (L, 1, 3H)  [b_ir+b_hr | b_iz+b_hz | b_in]
    bhn:     (L, 1, 3H)  [0 | 0 | b_hn]   (kept inside the r-scaled term)
    wfc:     (H, FC_PAD) fc weight^T, zero-padded to 128 lanes;  bfc: (1, FC_PAD)
    zout:    (T*8, FC_PAD) lane-dense output slab
    hout:    (L, B, H)   aliased with h0
    seq_a/b: (T*8, H)    ping-pong per-layer sequence scratches
    PyTorch gate order: r (reset), z (update), n (new).
    """
    L, B, H = h0_ref.shape
    T = seq_a_ref.shape[0] // SUBLANE
    H2 = 2 * H

    # Zero the padded scratch rows once so the next layer's bulk matmul never
    # touches uninitialised memory (padding rows are never read downstream).
    seq_a_ref[...] = jnp.zeros_like(seq_a_ref)
    seq_b_ref[...] = jnp.zeros_like(seq_b_ref)
    seq_bufs = [seq_a_ref, seq_b_ref]

    for l in range(L):                                   # static layer loop
        gb = gb_ref[l]                                   # (1, 3H)
        bhn = bhn_ref[l]                                 # (1, 3H), zero on r/z lanes
        whh = w_hh_ref[l]                                # (H, 3H) hoisted, loop-invariant

        # One fused bulk input->gate projection for the whole sequence.
        if l == 0:
            gx = (jnp.dot(z_ref[...], wz0_ref[...], preferred_element_type=jnp.float32)
                  + jnp.dot(a_ref[...], wa0_ref[...], preferred_element_type=jnp.float32)
                  + gb)                                  # (T*8, 3H)
        else:
            inp = seq_bufs[(l - 1) % 2][...]             # previous layer's sequence
            gx = jnp.dot(inp, w_ihr_ref[l - 1],
                         preferred_element_type=jnp.float32) + gb

        out_buf = seq_bufs[l % 2]
        h = h0_ref[l]                                    # (B, H)
        for t in range(T):                               # statically unrolled recurrence
            r0 = t * SUBLANE                             # tile-aligned row offset
            ga = gx[r0:r0 + B, :]                        # (B, 3H), static vreg slice
            # Single fused recurrent matmul per step; b_hn folded into its n lanes.
            rec = jnp.dot(h, whh, preferred_element_type=jnp.float32) + bhn
            rz = jax.nn.sigmoid(ga[:, :H2] + rec[:, :H2])          # [r | z]
            n = jnp.tanh(ga[:, H2:] + rz[:, :H] * rec[:, H2:])     # n = tanh(gx_n + r*(Wh h + b_hn))
            h = n + rz[:, H:] * (h - n)                            # (1-z)*n + z*h
            out_buf[r0:r0 + B, :] = h                    # tile-aligned store
        hout_ref[l] = h

    # Final linear head over the whole sequence; full unmasked 128-lane store.
    seq_last = seq_bufs[(L - 1) % 2][...]
    zout_ref[...] = (jnp.dot(seq_last, wfc_ref[...],
                             preferred_element_type=jnp.float32) + bfc_ref[...])


def prepare_params(p):
    """One-time wrapper-side prep: fuse gates, transpose, fold biases, pad fc."""
    H = p["w_hh"].shape[-1]
    latent = p["w_fc"].shape[0]

    wih0_t = p["w_ih0"].T                                 # (D_in, 3H), lanes r|z|n
    wz0 = wih0_t[:latent, :]                              # (latent, 3H)
    wa0 = wih0_t[latent:, :]                              # (cond, 3H)
    w_ihr = jnp.transpose(p["w_ihr"], (0, 2, 1))          # (L-1, H, 3H)
    w_hh = jnp.transpose(p["w_hh"], (0, 2, 1))            # (L, H, 3H)

    b_ih, b_hh = p["b_ih"], p["b_hh"]                     # (L, 1, 3H)
    gb = jnp.concatenate([b_ih[:, :, :2 * H] + b_hh[:, :, :2 * H],   # r,z: fold both
                          b_ih[:, :, 2 * H:]], axis=-1)              # n: b_in only
    bhn = jnp.concatenate([jnp.zeros_like(b_hh[:, :, :2 * H]),
                           b_hh[:, :, 2 * H:]], axis=-1)             # [0|0|b_hn]

    wfc = jnp.zeros((H, FC_PAD), jnp.float32).at[:, :latent].set(p["w_fc"].T)
    bfc = jnp.zeros((1, FC_PAD), jnp.float32).at[:, :latent].set(p["b_fc"])
    return dict(wz0=wz0, wa0=wa0, w_ihr=w_ihr, w_hh=w_hh,
                gb=gb, bhn=bhn, wfc=wfc, bfc=bfc)


@jax.jit
def gru_dynamic_forward(z, a, h0, prep):
    B, T, latent = z.shape
    L, _, H = h0.shape

    def pad_tm(x):
        # (B, T, D) -> time-major, sublane-padded (T*8, D); row = t*8 + b.
        x_tm = jnp.transpose(x, (1, 0, 2))                           # (T, B, D)
        x_p = jnp.zeros((T, SUBLANE, x.shape[-1]), x.dtype).at[:, :B, :].set(x_tm)
        return x_p.reshape(T * SUBLANE, x.shape[-1])

    z_p, a_p = pad_tm(z), pad_tm(a)

    vmem = pl.BlockSpec(memory_space=pltpu.MemorySpace.VMEM)
    z_pad, h_out = pl.pallas_call(
        gru_dynamic_kernel,
        out_shape=(jax.ShapeDtypeStruct((T * SUBLANE, FC_PAD), jnp.float32),
                   jax.ShapeDtypeStruct((L, B, H), jnp.float32)),
        in_specs=[vmem] * 11,
        out_specs=(vmem, vmem),
        scratch_shapes=[pltpu.VMEM((T * SUBLANE, H), jnp.float32),   # seq ping
                        pltpu.VMEM((T * SUBLANE, H), jnp.float32)],  # seq pong
        input_output_aliases={2: 1},                      # h0 buffer -> h_out
    )(z_p, a_p, h0, prep["wz0"], prep["wa0"], prep["w_ihr"], prep["w_hh"],
      prep["gb"], prep["bhn"], prep["wfc"], prep["bfc"])

    z_out = z_pad.reshape(T, SUBLANE, FC_PAD)[:, :B, :latent]        # drop padding
    return jnp.transpose(z_out, (1, 0, 2)), h_out                    # (B, T, latent)


def gru_dynamic_ref(z, a, h0, p):
    """Pure-JAX reference (same math as PyTorch nn.GRU + nn.Linear)."""
    x = jnp.concatenate([z, a], axis=-1)
    B, T, _ = x.shape
    L, _, H = h0.shape
    layer_in = x
    h_fin = []
    for l in range(L):
        w_ih = p["w_ih0"] if l == 0 else p["w_ihr"][l - 1]
        w_hh, b_ih, b_hh = p["w_hh"][l], p["b_ih"][l], p["b_hh"][l]
        h = h0[l]
        outs = []
        for t in range(T):
            xg = layer_in[:, t, :] @ w_ih.T + b_ih
            hg = h @ w_hh.T + b_hh
            r = jax.nn.sigmoid(xg[:, :H] + hg[:, :H])
            zg = jax.nn.sigmoid(xg[:, H:2 * H] + hg[:, H:2 * H])
            n = jnp.tanh(xg[:, 2 * H:] + r * hg[:, 2 * H:])
            h = (1.0 - zg) * n + zg * h
            outs.append(h[:, None, :])
        layer_in = jnp.concatenate(outs, axis=1)
        h_fin.append(h)
    z_out = layer_in @ p["w_fc"].T + p["b_fc"]
    return z_out, jnp.stack(h_fin, axis=0)


def init_params(key, latent, cond, hidden, layers):
    """Deterministic init, PyTorch-style uniform(-1/sqrt(H), 1/sqrt(H))."""
    k = 1.0 / jnp.sqrt(jnp.float32(hidden))
    keys = jax.random.split(key, 8)
    d_in = latent + cond
    u = lambda kk, shape: jax.random.uniform(kk, shape, jnp.float32, -k, k)
    return {
        "w_ih0": u(keys[0], (3 * hidden, d_in)),
        "w_ihr": u(keys[1], (layers - 1, 3 * hidden, hidden)),
        "w_hh":  u(keys[2], (layers, 3 * hidden, hidden)),
        "b_ih":  u(keys[3], (layers, 1, 3 * hidden)),
        "b_hh":  u(keys[4], (layers, 1, 3 * hidden)),
        "w_fc":  u(keys[5], (latent, hidden)),
        "b_fc":  u(keys[6], (1, latent)),
    }


if __name__ == "__main__":
    key = jax.random.PRNGKey(0)
    kz, ka, kp = jax.random.split(key, 3)

    z = jax.random.normal(kz, (BATCH, SEQ, LATENT), jnp.float32)
    a = jax.random.normal(ka, (BATCH, SEQ, COND), jnp.float32)
    h0 = jnp.zeros((LAYERS, BATCH, HIDDEN), jnp.float32)   # init_hidden
    params = init_params(kp, LATENT, COND, HIDDEN, LAYERS)
    prep = prepare_params(params)                          # one-time weight prep

    # Reference first (h0 is aliased into h_out; don't reuse it after the call).
    z_ref, h_ref = gru_dynamic_ref(z, a, h0, params)

    z_out, h_out = gru_dynamic_forward(z, a, h0, prep)
    jax.block_until_ready((z_out, h_out))

    assert z_out.shape == (BATCH, SEQ, LATENT)
    assert h_out.shape == (LAYERS, BATCH, HIDDEN)
    assert jnp.allclose(z_out, z_ref, rtol=1e-4, atol=1e-4)
    assert jnp.allclose(h_out, h_ref, rtol=1e-4, atol=1e-4)

    print("KERNEL_OK")
</pallas_src>

<mosaic_0001>
module attributes {stable_mosaic.version = 11 : i64} {
  func.func @gru_dynamic_kernel(%arg0: memref<64x8xf32, #tpu.memory_space<vmem>>, %arg1: memref<64x8xf32, #tpu.memory_space<vmem>>, %arg2: memref<3x2x32xf32, #tpu.memory_space<vmem>>, %arg3: memref<8x96xf32, #tpu.memory_space<vmem>>, %arg4: memref<8x96xf32, #tpu.memory_space<vmem>>, %arg5: memref<2x32x96xf32, #tpu.memory_space<vmem>>, %arg6: memref<3x32x96xf32, #tpu.memory_space<vmem>>, %arg7: memref<3x1x96xf32, #tpu.memory_space<vmem>>, %arg8: memref<3x1x96xf32, #tpu.memory_space<vmem>>, %arg9: memref<32x128xf32, #tpu.memory_space<vmem>>, %arg10: memref<1x128xf32, #tpu.memory_space<vmem>>, %arg11: memref<64x128xf32, #tpu.memory_space<vmem>>, %arg12: memref<3x2x32xf32, #tpu.memory_space<vmem>>, %arg13: memref<64x32xf32, #tpu.memory_space<vmem>>, %arg14: memref<64x32xf32, #tpu.memory_space<vmem>>) attributes {dimension_semantics = [], scalar_prefetch = 0 : i64, scratch_operands = 2 : i64, tpu.core_type = #tpu.core_type<tc>} {
    %cst = arith.constant 0.000000e+00 : f32
    %0 = vector.broadcast %cst : f32 to vector<64x32xf32>
    %c0 = arith.constant 0 : index
    %c0_0 = arith.constant 0 : index
    %1 = vector.load %arg13[%c0, %c0_0] : memref<64x32xf32, #tpu.memory_space<vmem>>, vector<64x32xf32>
    tpu.vector_store %arg13[%c0, %c0_0], %0 {strides = array<i32>} : memref<64x32xf32, #tpu.memory_space<vmem>>, vector<64x32xf32>,
    %cst_1 = arith.constant 0.000000e+00 : f32
    %2 = vector.broadcast %cst_1 : f32 to vector<64x32xf32>
    %c0_2 = arith.constant 0 : index
    %c0_3 = arith.constant 0 : index
    %3 = vector.load %arg14[%c0_2, %c0_3] : memref<64x32xf32, #tpu.memory_space<vmem>>, vector<64x32xf32>
    tpu.vector_store %arg14[%c0_2, %c0_3], %2 {strides = array<i32>} : memref<64x32xf32, #tpu.memory_space<vmem>>, vector<64x32xf32>,
    %c0_4 = arith.constant 0 : index
    %c0_5 = arith.constant 0 : index
    %c0_6 = arith.constant 0 : index
    %4 = vector.load %arg7[%c0_4, %c0_5, %c0_6] : memref<3x1x96xf32, #tpu.memory_space<vmem>>, vector<1x1x96xf32>
    %5 = vector.shape_cast %4 : vector<1x1x96xf32> to vector<1x96xf32>
    %c0_7 = arith.constant 0 : index
    %c0_8 = arith.constant 0 : index
    %c0_9 = arith.constant 0 : index
    %6 = vector.load %arg8[%c0_7, %c0_8, %c0_9] : memref<3x1x96xf32, #tpu.memory_space<vmem>>, vector<1x1x96xf32>
    %7 = vector.shape_cast %6 : vector<1x1x96xf32> to vector<1x96xf32>
    %c0_10 = arith.constant 0 : index
    %c0_11 = arith.constant 0 : index
    %c0_12 = arith.constant 0 : index
    %8 = vector.load %arg6[%c0_10, %c0_11, %c0_12] : memref<3x32x96xf32, #tpu.memory_space<vmem>>, vector<1x32x96xf32>
    %9 = vector.shape_cast %8 : vector<1x32x96xf32> to vector<32x96xf32>
    %c0_13 = arith.constant 0 : index
    %c0_14 = arith.constant 0 : index
    %10 = vector.load %arg0[%c0_13, %c0_14] : memref<64x8xf32, #tpu.memory_space<vmem>>, vector<64x8xf32>
    %c0_15 = arith.constant 0 : index
    %c0_16 = arith.constant 0 : index
    %11 = vector.load %arg3[%c0_15, %c0_16] : memref<8x96xf32, #tpu.memory_space<vmem>>, vector<8x96xf32>
    %cst_17 = arith.constant dense<0.000000e+00> : vector<64x96xf32>
    %12 = tpu.matmul %10, %11, %cst_17 {dimension_numbers = #tpu.dot_dimension_numbers<[1], [0], [0], [1], [0, 0, 1, 1], [], []>} : vector<64x8xf32>, vector<8x96xf32>, vector<64x96xf32> -> vector<64x96xf32>
    %c0_18 = arith.constant 0 : index
    %c0_19 = arith.constant 0 : index
    %13 = vector.load %arg1[%c0_18, %c0_19] : memref<64x8xf32, #tpu.memory_space<vmem>>, vector<64x8xf32>
    %c0_20 = arith.constant 0 : index
    %c0_21 = arith.constant 0 : index
    %14 = vector.load %arg4[%c0_20, %c0_21] : memref<8x96xf32, #tpu.memory_space<vmem>>, vector<8x96xf32>
    %cst_22 = arith.constant dense<0.000000e+00> : vector<64x96xf32>
    %15 = tpu.matmul %13, %14, %cst_22 {dimension_numbers = #tpu.dot_dimension_numbers<[1], [0], [0], [1], [0, 0, 1, 1], [], []>} : vector<64x8xf32>, vector<8x96xf32>, vector<64x96xf32> -> vector<64x96xf32>
    %16 = arith.addf %12, %15 : vector<64x96xf32>
    %17 = vector.broadcast %5 : vector<1x96xf32> to vector<64x96xf32>
    %18 = arith.addf %16, %17 : vector<64x96xf32>
    %c0_23 = arith.constant 0 : index
    %c0_24 = arith.constant 0 : index
    %c0_25 = arith.constant 0 : index
    %19 = vector.load %arg2[%c0_23, %c0_24, %c0_25] : memref<3x2x32xf32, #tpu.memory_space<vmem>>, vector<1x2x32xf32>
    %20 = vector.shape_cast %19 : vector<1x2x32xf32> to vector<2x32xf32>
    %21 = vector.extract_strided_slice %18 {offsets = [0, 0], sizes = [2, 96], strides = [1, 1]} : vector<64x96xf32> to vector<2x96xf32>
    %cst_26 = arith.constant dense<0.000000e+00> : vector<2x96xf32>
    %22 = tpu.matmul %20, %9, %cst_26 {dimension_numbers = #tpu.dot_dimension_numbers<[1], [0], [0], [1], [0, 0, 1, 1], [], []>} : vector<2x32xf32>, vector<32x96xf32>, vector<2x96xf32> -> vector<2x96xf32>
    %23 = vector.broadcast %7 : vector<1x96xf32> to vector<2x96xf32>
    %24 = arith.addf %22, %23 : vector<2x96xf32>
    %25 = vector.extract_strided_slice %21 {offsets = [0, 0], sizes = [2, 64], strides = [1, 1]} : vector<2x96xf32> to vector<2x64xf32>
    %26 = vector.extract_strided_slice %24 {offsets = [0, 0], sizes = [2, 64], strides = [1, 1]} : vector<2x96xf32> to vector<2x64xf32>
    %27 = arith.addf %25, %26 : vector<2x64xf32>
    %28 = arith.negf %27 : vector<2x64xf32>
    %29 = math.exp %28 : vector<2x64xf32>
    %cst_27 = arith.constant 1.000000e+00 : f32
    %30 = vector.broadcast %cst_27 : f32 to vector<2x64xf32>
    %31 = arith.addf %30, %29 : vector<2x64xf32>
    %32 = arith.divf %30, %31 : vector<2x64xf32>
    %33 = vector.extract_strided_slice %21 {offsets = [0, 64], sizes = [2, 32], strides = [1, 1]} : vector<2x96xf32> to vector<2x32xf32>
    %34 = vector.extract_strided_slice %32 {offsets = [0, 0], sizes = [2, 32], strides = [1, 1]} : vector<2x64xf32> to vector<2x32xf32>
    %35 = vector.extract_strided_slice %24 {offsets = [0, 64], sizes = [2, 32], strides = [1, 1]} : vector<2x96xf32> to vector<2x32xf32>
    %36 = arith.mulf %34, %35 : vector<2x32xf32>
    %37 = arith.addf %33, %36 : vector<2x32xf32>
    %38 = math.tanh %37 : vector<2x32xf32>
    %39 = vector.extract_strided_slice %32 {offsets = [0, 32], sizes = [2, 32], strides = [1, 1]} : vector<2x64xf32> to vector<2x32xf32>
    %40 = arith.subf %20, %38 : vector<2x32xf32>
    %41 = arith.mulf %39, %40 : vector<2x32xf32>
    %42 = arith.addf %38, %41 : vector<2x32xf32>
    %c0_28 = arith.constant 0 : index
    %c0_29 = arith.constant 0 : index
    %43 = vector.load %arg13[%c0_28, %c0_29] : memref<64x32xf32, #tpu.memory_space<vmem>>, vector<2x32xf32>
    tpu.vector_store %arg13[%c0_28, %c0_29], %42 {strides = array<i32>} : memref<64x32xf32, #tpu.memory_space<vmem>>, vector<2x32xf32>,
    %44 = vector.extract_strided_slice %18 {offsets = [8, 0], sizes = [2, 96], strides = [1, 1]} : vector<64x96xf32> to vector<2x96xf32>
    %cst_30 = arith.constant dense<0.000000e+00> : vector<2x96xf32>
    %45 = tpu.matmul %42, %9, %cst_30 {dimension_numbers = #tpu.dot_dimension_numbers<[1], [0], [0], [1], [0, 0, 1, 1], [], []>} : vector<2x32xf32>, vector<32x96xf32>, vector<2x96xf32> -> vector<2x96xf32>
    %46 = vector.broadcast %7 : vector<1x96xf32> to vector<2x96xf32>
    %47 = arith.addf %45, %46 : vector<2x96xf32>
    %48 = vector.extract_strided_slice %44 {offsets = [0, 0], sizes = [2, 64], strides = [1, 1]} : vector<2x96xf32> to vector<2x64xf32>
    %49 = vector.extract_strided_slice %47 {offsets = [0, 0], sizes = [2, 64], strides = [1, 1]} : vector<2x96xf32> to vector<2x64xf32>
    %50 = arith.addf %48, %49 : vector<2x64xf32>
    %51 = arith.negf %50 : vector<2x64xf32>
    %52 = math.exp %51 : vector<2x64xf32>
    %cst_31 = arith.constant 1.000000e+00 : f32
    %53 = vector.broadcast %cst_31 : f32 to vector<2x64xf32>
    %54 = arith.addf %53, %52 : vector<2x64xf32>
    %55 = arith.divf %53, %54 : vector<2x64xf32>
    %56 = vector.extract_strided_slice %44 {offsets = [0, 64], sizes = [2, 32], strides = [1, 1]} : vector<2x96xf32> to vector<2x32xf32>
    %57 = vector.extract_strided_slice %55 {offsets = [0, 0], sizes = [2, 32], strides = [1, 1]} : vector<2x64xf32> to vector<2x32xf32>
    %58 = vector.extract_strided_slice %47 {offsets = [0, 64], sizes = [2, 32], strides = [1, 1]} : vector<2x96xf32> to vector<2x32xf32>
    %59 = arith.mulf %57, %58 : vector<2x32xf32>
    %60 = arith.addf %56, %59 : vector<2x32xf32>
    %61 = math.tanh %60 : vector<2x32xf32>
    %62 = vector.extract_strided_slice %55 {offsets = [0, 32], sizes = [2, 32], strides = [1, 1]} : vector<2x64xf32> to vector<2x32xf32>
    %63 = arith.subf %42, %61 : vector<2x32xf32>
    %64 = arith.mulf %62, %63 : vector<2x32xf32>
    %65 = arith.addf %61, %64 : vector<2x32xf32>
    %c8 = arith.constant 8 : index
    %c0_32 = arith.constant 0 : index
    %66 = vector.load %arg13[%c8, %c0_32] : memref<64x32xf32, #tpu.memory_space<vmem>>, vector<2x32xf32>
    tpu.vector_store %arg13[%c8, %c0_32], %65 {strides = array<i32>} : memref<64x32xf32, #tpu.memory_space<vmem>>, vector<2x32xf32>,
    %67 = vector.extract_strided_slice %18 {offsets = [16, 0], sizes = [2, 96], strides = [1, 1]} : vector<64x96xf32> to vector<2x96xf32>
    %cst_33 = arith.constant dense<0.000000e+00> : vector<2x96xf32>
    %68 = tpu.matmul %65, %9, %cst_33 {dimension_numbers = #tpu.dot_dimension_numbers<[1], [0], [0], [1], [0, 0, 1, 1], [], []>} : vector<2x32xf32>, vector<32x96xf32>, vector<2x96xf32> -> vector<2x96xf32>
    %69 = vector.broadcast %7 : vector<1x96xf32> to vector<2x96xf32>
    %70 = arith.addf %68, %69 : vector<2x96xf32>
    %71 = vector.extract_strided_slice %67 {offsets = [0, 0], sizes = [2, 64], strides = [1, 1]} : vector<2x96xf32> to vector<2x64xf32>
    %72 = vector.extract_strided_slice %70 {offsets = [0, 0], sizes = [2, 64], strides = [1, 1]} : vector<2x96xf32> to vector<2x64xf32>
    %73 = arith.addf %71, %72 : vector<2x64xf32>
    %74 = arith.negf %73 : vector<2x64xf32>
    %75 = math.exp %74 : vector<2x64xf32>
    %cst_34 = arith.constant 1.000000e+00 : f32
    %76 = vector.broadcast %cst_34 : f32 to vector<2x64xf32>
    %77 = arith.addf %76, %75 : vector<2x64xf32>
    %78 = arith.divf %76, %77 : vector<2x64xf32>
    %79 = vector.extract_strided_slice %67 {offsets = [0, 64], sizes = [2, 32], strides = [1, 1]} : vector<2x96xf32> to vector<2x32xf32>
    %80 = vector.extract_strided_slice %78 {offsets = [0, 0], sizes = [2, 32], strides = [1, 1]} : vector<2x64xf32> to vector<2x32xf32>
    %81 = vector.extract_strided_slice %70 {offsets = [0, 64], sizes = [2, 32], strides = [1, 1]} : vector<2x96xf32> to vector<2x32xf32>
    %82 = arith.mulf %80, %81 : vector<2x32xf32>
    %83 = arith.addf %79, %82 : vector<2x32xf32>
    %84 = math.tanh %83 : vector<2x32xf32>
    %85 = vector.extract_strided_slice %78 {offsets = [0, 32], sizes = [2, 32], strides = [1, 1]} : vector<2x64xf32> to vector<2x32xf32>
    %86 = arith.subf %65, %84 : vector<2x32xf32>
    %87 = arith.mulf %85, %86 : vector<2x32xf32>
    %88 = arith.addf %84, %87 : vector<2x32xf32>
    %c16 = arith.constant 16 : index
    %c0_35 = arith.constant 0 : index
    %89 = vector.load %arg13[%c16, %c0_35] : memref<64x32xf32, #tpu.memory_space<vmem>>, vector<2x32xf32>
    tpu.vector_store %arg13[%c16, %c0_35], %88 {strides = array<i32>} : memref<64x32xf32, #tpu.memory_space<vmem>>, vector<2x32xf32>,
    %90 = vector.extract_strided_slice %18 {offsets = [24, 0], sizes = [2, 96], strides = [1, 1]} : vector<64x96xf32> to vector<2x96xf32>
    %cst_36 = arith.constant dense<0.000000e+00> : vector<2x96xf32>
    %91 = tpu.matmul %88, %9, %cst_36 {dimension_numbers = #tpu.dot_dimension_numbers<[1], [0], [0], [1], [0, 0, 1, 1], [], []>} : vector<2x32xf32>, vector<32x96xf32>, vector<2x96xf32> -> vector<2x96xf32>
    %92 = vector.broadcast %7 : vector<1x96xf32> to vector<2x96xf32>
    %93 = arith.addf %91, %92 : vector<2x96xf32>
    %94 = vector.extract_strided_slice %90 {offsets = [0, 0], sizes = [2, 64], strides = [1, 1]} : vector<2x96xf32> to vector<2x64xf32>
    %95 = vector.extract_strided_slice %93 {offsets = [0, 0], sizes = [2, 64], strides = [1, 1]} : vector<2x96xf32> to vector<2x64xf32>
    %96 = arith.addf %94, %95 : vector<2x64xf32>
    %97 = arith.negf %96 : vector<2x64xf32>
    %98 = math.exp %97 : vector<2x64xf32>
    %cst_37 = arith.constant 1.000000e+00 : f32
    %99 = vector.broadcast %cst_37 : f32 to vector<2x64xf32>
    %100 = arith.addf %99, %98 : vector<2x64xf32>
    %101 = arith.divf %99, %100 : vector<2x64xf32>
    %102 = vector.extract_strided_slice %90 {offsets = [0, 64], sizes = [2, 32], strides = [1, 1]} : vector<2x96xf32> to vector<2x32xf32>
    %103 = vector.extract_strided_slice %101 {offsets = [0, 0], sizes = [2, 32], strides = [1, 1]} : vector<2x64xf32> to vector<2x32xf32>
    %104 = vector.extract_strided_slice %93 {offsets = [0, 64], sizes = [2, 32], strides = [1, 1]} : vector<2x96xf32> to vector<2x32xf32>
    %105 = arith.mulf %103, %104 : vector<2x32xf32>
    %106 = arith.addf %102, %105 : vector<2x32xf32>
    %107 = math.tanh %106 : vector<2x32xf32>
    %108 = vector.extract_strided_slice %101 {offsets = [0, 32], sizes = [2, 32], strides = [1, 1]} : vector<2x64xf32> to vector<2x32xf32>
    %109 = arith.subf %88, %107 : vector<2x32xf32>
    %110 = arith.mulf %108, %109 : vector<2x32xf32>
    %111 = arith.addf %107, %110 : vector<2x32xf32>
    %c24 = arith.constant 24 : index
    %c0_38 = arith.constant 0 : index
    %112 = vector.load %arg13[%c24, %c0_38] : memref<64x32xf32, #tpu.memory_space<vmem>>, vector<2x32xf32>
    tpu.vector_store %arg13[%c24, %c0_38], %111 {strides = array<i32>} : memref<64x32xf32, #tpu.memory_space<vmem>>, vector<2x32xf32>,
    %113 = vector.extract_strided_slice %18 {offsets = [32, 0], sizes = [2, 96], strides = [1, 1]} : vector<64x96xf32> to vector<2x96xf32>
    %cst_39 = arith.constant dense<0.000000e+00> : vector<2x96xf32>
    %114 = tpu.matmul %111, %9, %cst_39 {dimension_numbers = #tpu.dot_dimension_numbers<[1], [0], [0], [1], [0, 0, 1, 1], [], []>} : vector<2x32xf32>, vector<32x96xf32>, vector<2x96xf32> -> vector<2x96xf32>
    %115 = vector.broadcast %7 : vector<1x96xf32> to vector<2x96xf32>
    %116 = arith.addf %114, %115 : vector<2x96xf32>
    %117 = vector.extract_strided_slice %113 {offsets = [0, 0], sizes = [2, 64], strides = [1, 1]} : vector<2x96xf32> to vector<2x64xf32>
    %118 = vector.extract_strided_slice %116 {offsets = [0, 0], sizes = [2, 64], strides = [1, 1]} : vector<2x96xf32> to vector<2x64xf32>
    %119 = arith.addf %117, %118 : vector<2x64xf32>
    %120 = arith.negf %119 : vector<2x64xf32>
    %121 = math.exp %120 : vector<2x64xf32>
    %cst_40 = arith.constant 1.000000e+00 : f32
    %122 = vector.broadcast %cst_40 : f32 to vector<2x64xf32>
    %123 = arith.addf %122, %121 : vector<2x64xf32>
    %124 = arith.divf %122, %123 : vector<2x64xf32>
    %125 = vector.extract_strided_slice %113 {offsets = [0, 64], sizes = [2, 32], strides = [1, 1]} : vector<2x96xf32> to vector<2x32xf32>
    %126 = vector.extract_strided_slice %124 {offsets = [0, 0], sizes = [2, 32], strides = [1, 1]} : vector<2x64xf32> to vector<2x32xf32>
    %127 = vector.extract_strided_slice %116 {offsets = [0, 64], sizes = [2, 32], strides = [1, 1]} : vector<2x96xf32> to vector<2x32xf32>
    %128 = arith.mulf %126, %127 : vector<2x32xf32>
    %129 = arith.addf %125, %128 : vector<2x32xf32>
    %130 = math.tanh %129 : vector<2x32xf32>
    %131 = vector.extract_strided_slice %124 {offsets = [0, 32], sizes = [2, 32], strides = [1, 1]} : vector<2x64xf32> to vector<2x32xf32>
    %132 = arith.subf %111, %130 : vector<2x32xf32>
    %133 = arith.mulf %131, %132 : vector<2x32xf32>
    %134 = arith.addf %130, %133 : vector<2x32xf32>
    %c32 = arith.constant 32 : index
    %c0_41 = arith.constant 0 : index
    %135 = vector.load %arg13[%c32, %c0_41] : memref<64x32xf32, #tpu.memory_space<vmem>>, vector<2x32xf32>
    tpu.vector_store %arg13[%c32, %c0_41], %134 {strides = array<i32>} : memref<64x32xf32, #tpu.memory_space<vmem>>, vector<2x32xf32>,
    %136 = vector.extract_strided_slice %18 {offsets = [40, 0], sizes = [2, 96], strides = [1, 1]} : vector<64x96xf32> to vector<2x96xf32>
    %cst_42 = arith.constant dense<0.000000e+00> : vector<2x96xf32>
    %137 = tpu.matmul %134, %9, %cst_42 {dimension_numbers = #tpu.dot_dimension_numbers<[1], [0], [0], [1], [0, 0, 1, 1], [], []>} : vector<2x32xf32>, vector<32x96xf32>, vector<2x96xf32> -> vector<2x96xf32>
    %138 = vector.broadcast %7 : vector<1x96xf32> to vector<2x96xf32>
    %139 = arith.addf %137, %138 : vector<2x96xf32>
    %140 = vector.extract_strided_slice %136 {offsets = [0, 0], sizes = [2, 64], strides = [1, 1]} : vector<2x96xf32> to vector<2x64xf32>
    %141 = vector.extract_strided_slice %139 {offsets = [0, 0], sizes = [2, 64], strides = [1, 1]} : vector<2x96xf32> to vector<2x64xf32>
    %142 = arith.addf %140, %141 : vector<2x64xf32>
    %143 = arith.negf %142 : vector<2x64xf32>
    %144 = math.exp %143 : vector<2x64xf32>
    %cst_43 = arith.constant 1.000000e+00 : f32
    %145 = vector.broadcast %cst_43 : f32 to vector<2x64xf32>
    %146 = arith.addf %145, %144 : vector<2x64xf32>
    %147 = arith.divf %145, %146 : vector<2x64xf32>
    %148 = vector.extract_strided_slice %136 {offsets = [0, 64], sizes = [2, 32], strides = [1, 1]} : vector<2x96xf32> to vector<2x32xf32>
    %149 = vector.extract_strided_slice %147 {offsets = [0, 0], sizes = [2, 32], strides = [1, 1]} : vector<2x64xf32> to vector<2x32xf32>
    %150 = vector.extract_strided_slice %139 {offsets = [0, 64], sizes = [2, 32], strides = [1, 1]} : vector<2x96xf32> to vector<2x32xf32>
    %151 = arith.mulf %149, %150 : vector<2x32xf32>
    %152 = arith.addf %148, %151 : vector<2x32xf32>
    %153 = math.tanh %152 : vector<2x32xf32>
    %154 = vector.extract_strided_slice %147 {offsets = [0, 32], sizes = [2, 32], strides = [1, 1]} : vector<2x64xf32> to vector<2x32xf32>
    %155 = arith.subf %134, %153 : vector<2x32xf32>
    %156 = arith.mulf %154, %155 : vector<2x32xf32>
    %157 = arith.addf %153, %156 : vector<2x32xf32>
    %c40 = arith.constant 40 : index
    %c0_44 = arith.constant 0 : index
    %158 = vector.load %arg13[%c40, %c0_44] : memref<64x32xf32, #tpu.memory_space<vmem>>, vector<2x32xf32>
    tpu.vector_store %arg13[%c40, %c0_44], %157 {strides = array<i32>} : memref<64x32xf32, #tpu.memory_space<vmem>>, vector<2x32xf32>,
    %159 = vector.extract_strided_slice %18 {offsets = [48, 0], sizes = [2, 96], strides = [1, 1]} : vector<64x96xf32> to vector<2x96xf32>
    %cst_45 = arith.constant dense<0.000000e+00> : vector<2x96xf32>
    %160 = tpu.matmul %157, %9, %cst_45 {dimension_numbers = #tpu.dot_dimension_numbers<[1], [0], [0], [1], [0, 0, 1, 1], [], []>} : vector<2x32xf32>, vector<32x96xf32>, vector<2x96xf32> -> vector<2x96xf32>
    %161 = vector.broadcast %7 : vector<1x96xf32> to vector<2x96xf32>
    %162 = arith.addf %160, %161 : vector<2x96xf32>
    %163 = vector.extract_strided_slice %159 {offsets = [0, 0], sizes = [2, 64], strides = [1, 1]} : vector<2x96xf32> to vector<2x64xf32>
    %164 = vector.extract_strided_slice %162 {offsets = [0, 0], sizes = [2, 64], strides = [1, 1]} : vector<2x96xf32> to vector<2x64xf32>
    %165 = arith.addf %163, %164 : vector<2x64xf32>
    %166 = arith.negf %165 : vector<2x64xf32>
    %167 = math.exp %166 : vector<2x64xf32>
    %cst_46 = arith.constant 1.000000e+00 : f32
    %168 = vector.broadcast %cst_46 : f32 to vector<2x64xf32>
    %169 = arith.addf %168, %167 : vector<2x64xf32>
    %170 = arith.divf %168, %169 : vector<2x64xf32>
    %171 = vector.extract_strided_slice %159 {offsets = [0, 64], sizes = [2, 32], strides = [1, 1]} : vector<2x96xf32> to vector<2x32xf32>
    %172 = vector.extract_strided_slice %170 {offsets = [0, 0], sizes = [2, 32], strides = [1, 1]} : vector<2x64xf32> to vector<2x32xf32>
    %173 = vector.extract_strided_slice %162 {offsets = [0, 64], sizes = [2, 32], strides = [1, 1]} : vector<2x96xf32> to vector<2x32xf32>
    %174 = arith.mulf %172, %173 : vector<2x32xf32>
    %175 = arith.addf %171, %174 : vector<2x32xf32>
    %176 = math.tanh %175 : vector<2x32xf32>
    %177 = vector.extract_strided_slice %170 {offsets = [0, 32], sizes = [2, 32], strides = [1, 1]} : vector<2x64xf32> to vector<2x32xf32>
    %178 = arith.subf %157, %176 : vector<2x32xf32>
    %179 = arith.mulf %177, %178 : vector<2x32xf32>
    %180 = arith.addf %176, %179 : vector<2x32xf32>
    %c48 = arith.constant 48 : index
    %c0_47 = arith.constant 0 : index
    %181 = vector.load %arg13[%c48, %c0_47] : memref<64x32xf32, #tpu.memory_space<vmem>>, vector<2x32xf32>
    tpu.vector_store %arg13[%c48, %c0_47], %180 {strides = array<i32>} : memref<64x32xf32, #tpu.memory_space<vmem>>, vector<2x32xf32>,
    %182 = vector.extract_strided_slice %18 {offsets = [56, 0], sizes = [2, 96], strides = [1, 1]} : vector<64x96xf32> to vector<2x96xf32>
    %cst_48 = arith.constant dense<0.000000e+00> : vector<2x96xf32>
    %183 = tpu.matmul %180, %9, %cst_48 {dimension_numbers = #tpu.dot_dimension_numbers<[1], [0], [0], [1], [0, 0, 1, 1], [], []>} : vector<2x32xf32>, vector<32x96xf32>, vector<2x96xf32> -> vector<2x96xf32>
    %184 = vector.broadcast %7 : vector<1x96xf32> to vector<2x96xf32>
    %185 = arith.addf %183, %184 : vector<2x96xf32>
    %186 = vector.extract_strided_slice %182 {offsets = [0, 0], sizes = [2, 64], strides = [1, 1]} : vector<2x96xf32> to vector<2x64xf32>
    %187 = vector.extract_strided_slice %185 {offsets = [0, 0], sizes = [2, 64], strides = [1, 1]} : vector<2x96xf32> to vector<2x64xf32>
    %188 = arith.addf %186, %187 : vector<2x64xf32>
    %189 = arith.negf %188 : vector<2x64xf32>
    %190 = math.exp %189 : vector<2x64xf32>
    %cst_49 = arith.constant 1.000000e+00 : f32
    %191 = vector.broadcast %cst_49 : f32 to vector<2x64xf32>
    %192 = arith.addf %191, %190 : vector<2x64xf32>
    %193 = arith.divf %191, %192 : vector<2x64xf32>
    %194 = vector.extract_strided_slice %182 {offsets = [0, 64], sizes = [2, 32], strides = [1, 1]} : vector<2x96xf32> to vector<2x32xf32>
    %195 = vector.extract_strided_slice %193 {offsets = [0, 0], sizes = [2, 32], strides = [1, 1]} : vector<2x64xf32> to vector<2x32xf32>
    %196 = vector.extract_strided_slice %185 {offsets = [0, 64], sizes = [2, 32], strides = [1, 1]} : vector<2x96xf32> to vector<2x32xf32>
    %197 = arith.mulf %195, %196 : vector<2x32xf32>
    %198 = arith.addf %194, %197 : vector<2x32xf32>
    %199 = math.tanh %198 : vector<2x32xf32>
    %200 = vector.extract_strided_slice %193 {offsets = [0, 32], sizes = [2, 32], strides = [1, 1]} : vector<2x64xf32> to vector<2x32xf32>
    %201 = arith.subf %180, %199 : vector<2x32xf32>
    %202 = arith.mulf %200, %201 : vector<2x32xf32>
    %203 = arith.addf %199, %202 : vector<2x32xf32>
    %c56 = arith.constant 56 : index
    %c0_50 = arith.constant 0 : index
    %204 = vector.load %arg13[%c56, %c0_50] : memref<64x32xf32, #tpu.memory_space<vmem>>, vector<2x32xf32>
    tpu.vector_store %arg13[%c56, %c0_50], %203 {strides = array<i32>} : memref<64x32xf32, #tpu.memory_space<vmem>>, vector<2x32xf32>,
    %c0_51 = arith.constant 0 : index
    %c0_52 = arith.constant 0 : index
    %c0_53 = arith.constant 0 : index
    %205 = vector.load %arg12[%c0_51, %c0_52, %c0_53] : memref<3x2x32xf32, #tpu.memory_space<vmem>>, vector<1x2x32xf32>
    %206 = vector.shape_cast %205 : vector<1x2x32xf32> to vector<2x32xf32>
    %207 = vector.shape_cast %203 : vector<2x32xf32> to vector<1x2x32xf32>
    tpu.vector_store %arg12[%c0_51, %c0_52, %c0_53], %207 {strides = array<i32>} : memref<3x2x32xf32, #tpu.memory_space<vmem>>, vector<1x2x32xf32>,
    %c1 = arith.constant 1 : index
    %c0_54 = arith.constant 0 : index
    %c0_55 = arith.constant 0 : index
    %208 = vector.load %arg7[%c1, %c0_54, %c0_55] : memref<3x1x96xf32, #tpu.memory_space<vmem>>, vector<1x1x96xf32>
    %209 = vector.shape_cast %208 : vector<1x1x96xf32> to vector<1x96xf32>
    %c1_56 = arith.constant 1 : index
    %c0_57 = arith.constant 0 : index
    %c0_58 = arith.constant 0 : index
    %210 = vector.load %arg8[%c1_56, %c0_57, %c0_58] : memref<3x1x96xf32, #tpu.memory_space<vmem>>, vector<1x1x96xf32>
    %211 = vector.shape_cast %210 : vector<1x1x96xf32> to vector<1x96xf32>
    %c1_59 = arith.constant 1 : index
    %c0_60 = arith.constant 0 : index
    %c0_61 = arith.constant 0 : index
    %212 = vector.load %arg6[%c1_59, %c0_60, %c0_61] : memref<3x32x96xf32, #tpu.memory_space<vmem>>, vector<1x32x96xf32>
    %213 = vector.shape_cast %212 : vector<1x32x96xf32> to vector<32x96xf32>
    %c0_62 = arith.constant 0 : index
    %c0_63 = arith.constant 0 : index
    %214 = vector.load %arg13[%c0_62, %c0_63] : memref<64x32xf32, #tpu.memory_space<vmem>>, vector<64x32xf32>
    %c0_64 = arith.constant 0 : index
    %c0_65 = arith.constant 0 : index
    %c0_66 = arith.constant 0 : index
    %215 = vector.load %arg5[%c0_64, %c0_65, %c0_66] : memref<2x32x96xf32, #tpu.memory_space<vmem>>, vector<1x32x96xf32>
    %216 = vector.shape_cast %215 : vector<1x32x96xf32> to vector<32x96xf32>
    %cst_67 = arith.constant dense<0.000000e+00> : vector<64x96xf32>
    %217 = tpu.matmul %214, %216, %cst_67 {dimension_numbers = #tpu.dot_dimension_numbers<[1], [0], [0], [1], [0, 0, 1, 1], [], []>} : vector<64x32xf32>, vector<32x96xf32>, vector<64x96xf32> -> vector<64x96xf32>
    %218 = vector.broadcast %209 : vector<1x96xf32> to vector<64x96xf32>
    %219 = arith.addf %217, %218 : vector<64x96xf32>
    %c1_68 = arith.constant 1 : index
    %c0_69 = arith.constant 0 : index
    %c0_70 = arith.constant 0 : index
    %220 = vector.load %arg2[%c1_68, %c0_69, %c0_70] : memref<3x2x32xf32, #tpu.memory_space<vmem>>, vector<1x2x32xf32>
    %221 = vector.shape_cast %220 : vector<1x2x32xf32> to vector<2x32xf32>
    %222 = vector.extract_strided_slice %219 {offsets = [0, 0], sizes = [2, 96], strides = [1, 1]} : vector<64x96xf32> to vector<2x96xf32>
    %cst_71 = arith.constant dense<0.000000e+00> : vector<2x96xf32>
    %223 = tpu.matmul %221, %213, %cst_71 {dimension_numbers = #tpu.dot_dimension_numbers<[1], [0], [0], [1], [0, 0, 1, 1], [], []>} : vector<2x32xf32>, vector<32x96xf32>, vector<2x96xf32> -> vector<2x96xf32>
    %224 = vector.broadcast %211 : vector<1x96xf32> to vector<2x96xf32>
    %225 = arith.addf %223, %224 : vector<2x96xf32>
    %226 = vector.extract_strided_slice %222 {offsets = [0, 0], sizes = [2, 64], strides = [1, 1]} : vector<2x96xf32> to vector<2x64xf32>
    %227 = vector.extract_strided_slice %225 {offsets = [0, 0], sizes = [2, 64], strides = [1, 1]} : vector<2x96xf32> to vector<2x64xf32>
    %228 = arith.addf %226, %227 : vector<2x64xf32>
    %229 = arith.negf %228 : vector<2x64xf32>
    %230 = math.exp %229 : vector<2x64xf32>
    %cst_72 = arith.constant 1.000000e+00 : f32
    %231 = vector.broadcast %cst_72 : f32 to vector<2x64xf32>
    %232 = arith.addf %231, %230 : vector<2x64xf32>
    %233 = arith.divf %231, %232 : vector<2x64xf32>
    %234 = vector.extract_strided_slice %222 {offsets = [0, 64], sizes = [2, 32], strides = [1, 1]} : vector<2x96xf32> to vector<2x32xf32>
    %235 = vector.extract_strided_slice %233 {offsets = [0, 0], sizes = [2, 32], strides = [1, 1]} : vector<2x64xf32> to vector<2x32xf32>
    %236 = vector.extract_strided_slice %225 {offsets = [0, 64], sizes = [2, 32], strides = [1, 1]} : vector<2x96xf32> to vector<2x32xf32>
    %237 = arith.mulf %235, %236 : vector<2x32xf32>
    %238 = arith.addf %234, %237 : vector<2x32xf32>
    %239 = math.tanh %238 : vector<2x32xf32>
    %240 = vector.extract_strided_slice %233 {offsets = [0, 32], sizes = [2, 32], strides = [1, 1]} : vector<2x64xf32> to vector<2x32xf32>
    %241 = arith.subf %221, %239 : vector<2x32xf32>
    %242 = arith.mulf %240, %241 : vector<2x32xf32>
    %243 = arith.addf %239, %242 : vector<2x32xf32>
    %c0_73 = arith.constant 0 : index
    %c0_74 = arith.constant 0 : index
    %244 = vector.load %arg14[%c0_73, %c0_74] : memref<64x32xf32, #tpu.memory_space<vmem>>, vector<2x32xf32>
    tpu.vector_store %arg14[%c0_73, %c0_74], %243 {strides = array<i32>} : memref<64x32xf32, #tpu.memory_space<vmem>>, vector<2x32xf32>,
    %245 = vector.extract_strided_slice %219 {offsets = [8, 0], sizes = [2, 96], strides = [1, 1]} : vector<64x96xf32> to vector<2x96xf32>
    %cst_75 = arith.constant dense<0.000000e+00> : vector<2x96xf32>
    %246 = tpu.matmul %243, %213, %cst_75 {dimension_numbers = #tpu.dot_dimension_numbers<[1], [0], [0], [1], [0, 0, 1, 1], [], []>} : vector<2x32xf32>, vector<32x96xf32>, vector<2x96xf32> -> vector<2x96xf32>
    %247 = vector.broadcast %211 : vector<1x96xf32> to vector<2x96xf32>
    %248 = arith.addf %246, %247 : vector<2x96xf32>
    %249 = vector.extract_strided_slice %245 {offsets = [0, 0], sizes = [2, 64], strides = [1, 1]} : vector<2x96xf32> to vector<2x64xf32>
    %250 = vector.extract_strided_slice %248 {offsets = [0, 0], sizes = [2, 64], strides = [1, 1]} : vector<2x96xf32> to vector<2x64xf32>
    %251 = arith.addf %249, %250 : vector<2x64xf32>
    %252 = arith.negf %251 : vector<2x64xf32>
    %253 = math.exp %252 : vector<2x64xf32>
    %cst_76 = arith.constant 1.000000e+00 : f32
    %254 = vector.broadcast %cst_76 : f32 to vector<2x64xf32>
    %255 = arith.addf %254, %253 : vector<2x64xf32>
    %256 = arith.divf %254, %255 : vector<2x64xf32>
    %257 = vector.extract_strided_slice %245 {offsets = [0, 64], sizes = [2, 32], strides = [1, 1]} : vector<2x96xf32> to vector<2x32xf32>
    %258 = vector.extract_strided_slice %256 {offsets = [0, 0], sizes = [2, 32], strides = [1, 1]} : vector<2x64xf32> to vector<2x32xf32>
    %259 = vector.extract_strided_slice %248 {offsets = [0, 64], sizes = [2, 32], strides = [1, 1]} : vector<2x96xf32> to vector<2x32xf32>
    %260 = arith.mulf %258, %259 : vector<2x32xf32>
    %261 = arith.addf %257, %260 : vector<2x32xf32>
    %262 = math.tanh %261 : vector<2x32xf32>
    %263 = vector.extract_strided_slice %256 {offsets = [0, 32], sizes = [2, 32], strides = [1, 1]} : vector<2x64xf32> to vector<2x32xf32>
    %264 = arith.subf %243, %262 : vector<2x32xf32>
    %265 = arith.mulf %263, %264 : vector<2x32xf32>
    %266 = arith.addf %262, %265 : vector<2x32xf32>
    %c8_77 = arith.constant 8 : index
    %c0_78 = arith.constant 0 : index
    %267 = vector.load %arg14[%c8_77, %c0_78] : memref<64x32xf32, #tpu.memory_space<vmem>>, vector<2x32xf32>
    tpu.vector_store %arg14[%c8_77, %c0_78], %266 {strides = array<i32>} : memref<64x32xf32, #tpu.memory_space<vmem>>, vector<2x32xf32>,
    %268 = vector.extract_strided_slice %219 {offsets = [16, 0], sizes = [2, 96], strides = [1, 1]} : vector<64x96xf32> to vector<2x96xf32>
    %cst_79 = arith.constant dense<0.000000e+00> : vector<2x96xf32>
    %269 = tpu.matmul %266, %213, %cst_79 {dimension_numbers = #tpu.dot_dimension_numbers<[1], [0], [0], [1], [0, 0, 1, 1], [], []>} : vector<2x32xf32>, vector<32x96xf32>, vector<2x96xf32> -> vector<2x96xf32>
    %270 = vector.broadcast %211 : vector<1x96xf32> to vector<2x96xf32>
    %271 = arith.addf %269, %270 : vector<2x96xf32>
    %272 = vector.extract_strided_slice %268 {offsets = [0, 0], sizes = [2, 64], strides = [1, 1]} : vector<2x96xf32> to vector<2x64xf32>
    %273 = vector.extract_strided_slice %271 {offsets = [0, 0], sizes = [2, 64], strides = [1, 1]} : vector<2x96xf32> to vector<2x64xf32>
    %274 = arith.addf %272, %273 : vector<2x64xf32>
    %275 = arith.negf %274 : vector<2x64xf32>
    %276 = math.exp %275 : vector<2x64xf32>
    %cst_80 = arith.constant 1.000000e+00 : f32
    %277 = vector.broadcast %cst_80 : f32 to vector<2x64xf32>
    %278 = arith.addf %277, %276 : vector<2x64xf32>
    %279 = arith.divf %277, %278 : vector<2x64xf32>
    %280 = vector.extract_strided_slice %268 {offsets = [0, 64], sizes = [2, 32], strides = [1, 1]} : vector<2x96xf32> to vector<2x32xf32>
    %281 = vector.extract_strided_slice %279 {offsets = [0, 0], sizes = [2, 32], strides = [1, 1]} : vector<2x64xf32> to vector<2x32xf32>
    %282 = vector.extract_strided_slice %271 {offsets = [0, 64], sizes = [2, 32], strides = [1, 1]} : vector<2x96xf32> to vector<2x32xf32>
    %283 = arith.mulf %281, %282 : vector<2x32xf32>
    %284 = arith.addf %280, %283 : vector<2x32xf32>
    %285 = math.tanh %284 : vector<2x32xf32>
    %286 = vector.extract_strided_slice %279 {offsets = [0, 32], sizes = [2, 32], strides = [1, 1]} : vector<2x64xf32> to vector<2x32xf32>
    %287 = arith.subf %266, %285 : vector<2x32xf32>
    %288 = arith.mulf %286, %287 : vector<2x32xf32>
    %289 = arith.addf %285, %288 : vector<2x32xf32>
    %c16_81 = arith.constant 16 : index
    %c0_82 = arith.constant 0 : index
    %290 = vector.load %arg14[%c16_81, %c0_82] : memref<64x32xf32, #tpu.memory_space<vmem>>, vector<2x32xf32>
    tpu.vector_store %arg14[%c16_81, %c0_82], %289 {strides = array<i32>} : memref<64x32xf32, #tpu.memory_space<vmem>>, vector<2x32xf32>,
    %291 = vector.extract_strided_slice %219 {offsets = [24, 0], sizes = [2, 96], strides = [1, 1]} : vector<64x96xf32> to vector<2x96xf32>
    %cst_83 = arith.constant dense<0.000000e+00> : vector<2x96xf32>
    %292 = tpu.matmul %289, %213, %cst_83 {dimension_numbers = #tpu.dot_dimension_numbers<[1], [0], [0], [1], [0, 0, 1, 1], [], []>} : vector<2x32xf32>, vector<32x96xf32>, vector<2x96xf32> -> vector<2x96xf32>
    %293 = vector.broadcast %211 : vector<1x96xf32> to vector<2x96xf32>
    %294 = arith.addf %292, %293 : vector<2x96xf32>
    %295 = vector.extract_strided_slice %291 {offsets = [0, 0], sizes = [2, 64], strides = [1, 1]} : vector<2x96xf32> to vector<2x64xf32>
    %296 = vector.extract_strided_slice %294 {offsets = [0, 0], sizes = [2, 64], strides = [1, 1]} : vector<2x96xf32> to vector<2x64xf32>
    %297 = arith.addf %295, %296 : vector<2x64xf32>
    %298 = arith.negf %297 : vector<2x64xf32>
    %299 = math.exp %298 : vector<2x64xf32>
    %cst_84 = arith.constant 1.000000e+00 : f32
    %300 = vector.broadcast %cst_84 : f32 to vector<2x64xf32>
    %301 = arith.addf %300, %299 : vector<2x64xf32>
    %302 = arith.divf %300, %301 : vector<2x64xf32>
    %303 = vector.extract_strided_slice %291 {offsets = [0, 64], sizes = [2, 32], strides = [1, 1]} : vector<2x96xf32> to vector<2x32xf32>
    %304 = vector.extract_strided_slice %302 {offsets = [0, 0], sizes = [2, 32], strides = [1, 1]} : vector<2x64xf32> to vector<2x32xf32>
    %305 = vector.extract_strided_slice %294 {offsets = [0, 64], sizes = [2, 32], strides = [1, 1]} : vector<2x96xf32> to vector<2x32xf32>
    %306 = arith.mulf %304, %305 : vector<2x32xf32>
    %307 = arith.addf %303, %306 : vector<2x32xf32>
    %308 = math.tanh %307 : vector<2x32xf32>
    %309 = vector.extract_strided_slice %302 {offsets = [0, 32], sizes = [2, 32], strides = [1, 1]} : vector<2x64xf32> to vector<2x32xf32>
    %310 = arith.subf %289, %308 : vector<2x32xf32>
    %311 = arith.mulf %309, %310 : vector<2x32xf32>
    %312 = arith.addf %308, %311 : vector<2x32xf32>
    %c24_85 = arith.constant 24 : index
    %c0_86 = arith.constant 0 : index
    %313 = vector.load %arg14[%c24_85, %c0_86] : memref<64x32xf32, #tpu.memory_space<vmem>>, vector<2x32xf32>
    tpu.vector_store %arg14[%c24_85, %c0_86], %312 {strides = array<i32>} : memref<64x32xf32, #tpu.memory_space<vmem>>, vector<2x32xf32>,
    %314 = vector.extract_strided_slice %219 {offsets = [32, 0], sizes = [2, 96], strides = [1, 1]} : vector<64x96xf32> to vector<2x96xf32>
    %cst_87 = arith.constant dense<0.000000e+00> : vector<2x96xf32>
    %315 = tpu.matmul %312, %213, %cst_87 {dimension_numbers = #tpu.dot_dimension_numbers<[1], [0], [0], [1], [0, 0, 1, 1], [], []>} : vector<2x32xf32>, vector<32x96xf32>, vector<2x96xf32> -> vector<2x96xf32>
    %316 = vector.broadcast %211 : vector<1x96xf32> to vector<2x96xf32>
    %317 = arith.addf %315, %316 : vector<2x96xf32>
    %318 = vector.extract_strided_slice %314 {offsets = [0, 0], sizes = [2, 64], strides = [1, 1]} : vector<2x96xf32> to vector<2x64xf32>
    %319 = vector.extract_strided_slice %317 {offsets = [0, 0], sizes = [2, 64], strides = [1, 1]} : vector<2x96xf32> to vector<2x64xf32>
    %320 = arith.addf %318, %319 : vector<2x64xf32>
    %321 = arith.negf %320 : vector<2x64xf32>
    %322 = math.exp %321 : vector<2x64xf32>
    %cst_88 = arith.constant 1.000000e+00 : f32
    %323 = vector.broadcast %cst_88 : f32 to vector<2x64xf32>
    %324 = arith.addf %323, %322 : vector<2x64xf32>
    %325 = arith.divf %323, %324 : vector<2x64xf32>
    %326 = vector.extract_strided_slice %314 {offsets = [0, 64], sizes = [2, 32], strides = [1, 1]} : vector<2x96xf32> to vector<2x32xf32>
    %327 = vector.extract_strided_slice %325 {offsets = [0, 0], sizes = [2, 32], strides = [1, 1]} : vector<2x64xf32> to vector<2x32xf32>
    %328 = vector.extract_strided_slice %317 {offsets = [0, 64], sizes = [2, 32], strides = [1, 1]} : vector<2x96xf32> to vector<2x32xf32>
    %329 = arith.mulf %327, %328 : vector<2x32xf32>
    %330 = arith.addf %326, %329 : vector<2x32xf32>
    %331 = math.tanh %330 : vector<2x32xf32>
    %332 = vector.extract_strided_slice %325 {offsets = [0, 32], sizes = [2, 32], strides = [1, 1]} : vector<2x64xf32> to vector<2x32xf32>
    %333 = arith.subf %312, %331 : vector<2x32xf32>
    %334 = arith.mulf %332, %333 : vector<2x32xf32>
    %335 = arith.addf %331, %334 : vector<2x32xf32>
    %c32_89 = arith.constant 32 : index
    %c0_90 = arith.constant 0 : index
    %336 = vector.load %arg14[%c32_89, %c0_90] : memref<64x32xf32, #tpu.memory_space<vmem>>, vector<2x32xf32>
    tpu.vector_store %arg14[%c32_89, %c0_90], %335 {strides = array<i32>} : memref<64x32xf32, #tpu.memory_space<vmem>>, vector<2x32xf32>,
    %337 = vector.extract_strided_slice %219 {offsets = [40, 0], sizes = [2, 96], strides = [1, 1]} : vector<64x96xf32> to vector<2x96xf32>
    %cst_91 = arith.constant dense<0.000000e+00> : vector<2x96xf32>
    %338 = tpu.matmul %335, %213, %cst_91 {dimension_numbers = #tpu.dot_dimension_numbers<[1], [0], [0], [1], [0, 0, 1, 1], [], []>} : vector<2x32xf32>, vector<32x96xf32>, vector<2x96xf32> -> vector<2x96xf32>
    %339 = vector.broadcast %211 : vector<1x96xf32> to vector<2x96xf32>
    %340 = arith.addf %338, %339 : vector<2x96xf32>
    %341 = vector.extract_strided_slice %337 {offsets = [0, 0], sizes = [2, 64], strides = [1, 1]} : vector<2x96xf32> to vector<2x64xf32>
    %342 = vector.extract_strided_slice %340 {offsets = [0, 0], sizes = [2, 64], strides = [1, 1]} : vector<2x96xf32> to vector<2x64xf32>
    %343 = arith.addf %341, %342 : vector<2x64xf32>
    %344 = arith.negf %343 : vector<2x64xf32>
    %345 = math.exp %344 : vector<2x64xf32>
    %cst_92 = arith.constant 1.000000e+00 : f32
    %346 = vector.broadcast %cst_92 : f32 to vector<2x64xf32>
    %347 = arith.addf %346, %345 : vector<2x64xf32>
    %348 = arith.divf %346, %347 : vector<2x64xf32>
    %349 = vector.extract_strided_slice %337 {offsets = [0, 64], sizes = [2, 32], strides = [1, 1]} : vector<2x96xf32> to vector<2x32xf32>
    %350 = vector.extract_strided_slice %348 {offsets = [0, 0], sizes = [2, 32], strides = [1, 1]} : vector<2x64xf32> to vector<2x32xf32>
    %351 = vector.extract_strided_slice %340 {offsets = [0, 64], sizes = [2, 32], strides = [1, 1]} : vector<2x96xf32> to vector<2x32xf32>
    %352 = arith.mulf %350, %351 : vector<2x32xf32>
    %353 = arith.addf %349, %352 : vector<2x32xf32>
    %354 = math.tanh %353 : vector<2x32xf32>
    %355 = vector.extract_strided_slice %348 {offsets = [0, 32], sizes = [2, 32], strides = [1, 1]} : vector<2x64xf32> to vector<2x32xf32>
    %356 = arith.subf %335, %354 : vector<2x32xf32>
    %357 = arith.mulf %355, %356 : vector<2x32xf32>
    %358 = arith.addf %354, %357 : vector<2x32xf32>
    %c40_93 = arith.constant 40 : index
    %c0_94 = arith.constant 0 : index
    %359 = vector.load %arg14[%c40_93, %c0_94] : memref<64x32xf32, #tpu.memory_space<vmem>>, vector<2x32xf32>
    tpu.vector_store %arg14[%c40_93, %c0_94], %358 {strides = array<i32>} : memref<64x32xf32, #tpu.memory_space<vmem>>, vector<2x32xf32>,
    %360 = vector.extract_strided_slice %219 {offsets = [48, 0], sizes = [2, 96], strides = [1, 1]} : vector<64x96xf32> to vector<2x96xf32>
    %cst_95 = arith.constant dense<0.000000e+00> : vector<2x96xf32>
    %361 = tpu.matmul %358, %213, %cst_95 {dimension_numbers = #tpu.dot_dimension_numbers<[1], [0], [0], [1], [0, 0, 1, 1], [], []>} : vector<2x32xf32>, vector<32x96xf32>, vector<2x96xf32> -> vector<2x96xf32>
    %362 = vector.broadcast %211 : vector<1x96xf32> to vector<2x96xf32>
    %363 = arith.addf %361, %362 : vector<2x96xf32>
    %364 = vector.extract_strided_slice %360 {offsets = [0, 0], sizes = [2, 64], strides = [1, 1]} : vector<2x96xf32> to vector<2x64xf32>
    %365 = vector.extract_strided_slice %363 {offsets = [0, 0], sizes = [2, 64], strides = [1, 1]} : vector<2x96xf32> to vector<2x64xf32>
    %366 = arith.addf %364, %365 : vector<2x64xf32>
    %367 = arith.negf %366 : vector<2x64xf32>
    %368 = math.exp %367 : vector<2x64xf32>
    %cst_96 = arith.constant 1.000000e+00 : f32
    %369 = vector.broadcast %cst_96 : f32 to vector<2x64xf32>
    %370 = arith.addf %369, %368 : vector<2x64xf32>
    %371 = arith.divf %369, %370 : vector<2x64xf32>
    %372 = vector.extract_strided_slice %360 {offsets = [0, 64], sizes = [2, 32], strides = [1, 1]} : vector<2x96xf32> to vector<2x32xf32>
    %373 = vector.extract_strided_slice %371 {offsets = [0, 0], sizes = [2, 32], strides = [1, 1]} : vector<2x64xf32> to vector<2x32xf32>
    %374 = vector.extract_strided_slice %363 {offsets = [0, 64], sizes = [2, 32], strides = [1, 1]} : vector<2x96xf32> to vector<2x32xf32>
    %375 = arith.mulf %373, %374 : vector<2x32xf32>
    %376 = arith.addf %372, %375 : vector<2x32xf32>
    %377 = math.tanh %376 : vector<2x32xf32>
    %378 = vector.extract_strided_slice %371 {offsets = [0, 32], sizes = [2, 32], strides = [1, 1]} : vector<2x64xf32> to vector<2x32xf32>
    %379 = arith.subf %358, %377 : vector<2x32xf32>
    %380 = arith.mulf %378, %379 : vector<2x32xf32>
    %381 = arith.addf %377, %380 : vector<2x32xf32>
    %c48_97 = arith.constant 48 : index
    %c0_98 = arith.constant 0 : index
    %382 = vector.load %arg14[%c48_97, %c0_98] : memref<64x32xf32, #tpu.memory_space<vmem>>, vector<2x32xf32>
    tpu.vector_store %arg14[%c48_97, %c0_98], %381 {strides = array<i32>} : memref<64x32xf32, #tpu.memory_space<vmem>>, vector<2x32xf32>,
    %383 = vector.extract_strided_slice %219 {offsets = [56, 0], sizes = [2, 96], strides = [1, 1]} : vector<64x96xf32> to vector<2x96xf32>
    %cst_99 = arith.constant dense<0.000000e+00> : vector<2x96xf32>
    %384 = tpu.matmul %381, %213, %cst_99 {dimension_numbers = #tpu.dot_dimension_numbers<[1], [0], [0], [1], [0, 0, 1, 1], [], []>} : vector<2x32xf32>, vector<32x96xf32>, vector<2x96xf32> -> vector<2x96xf32>
    %385 = vector.broadcast %211 : vector<1x96xf32> to vector<2x96xf32>
    %386 = arith.addf %384, %385 : vector<2x96xf32>
    %387 = vector.extract_strided_slice %383 {offsets = [0, 0], sizes = [2, 64], strides = [1, 1]} : vector<2x96xf32> to vector<2x64xf32>
    %388 = vector.extract_strided_slice %386 {offsets = [0, 0], sizes = [2, 64], strides = [1, 1]} : vector<2x96xf32> to vector<2x64xf32>
    %389 = arith.addf %387, %388 : vector<2x64xf32>
    %390 = arith.negf %389 : vector<2x64xf32>
    %391 = math.exp %390 : vector<2x64xf32>
    %cst_100 = arith.constant 1.000000e+00 : f32
    %392 = vector.broadcast %cst_100 : f32 to vector<2x64xf32>
    %393 = arith.addf %392, %391 : vector<2x64xf32>
    %394 = arith.divf %392, %393 : vector<2x64xf32>
    %395 = vector.extract_strided_slice %383 {offsets = [0, 64], sizes = [2, 32], strides = [1, 1]} : vector<2x96xf32> to vector<2x32xf32>
    %396 = vector.extract_strided_slice %394 {offsets = [0, 0], sizes = [2, 32], strides = [1, 1]} : vector<2x64xf32> to vector<2x32xf32>
    %397 = vector.extract_strided_slice %386 {offsets = [0, 64], sizes = [2, 32], strides = [1, 1]} : vector<2x96xf32> to vector<2x32xf32>
    %398 = arith.mulf %396, %397 : vector<2x32xf32>
    %399 = arith.addf %395, %398 : vector<2x32xf32>
    %400 = math.tanh %399 : vector<2x32xf32>
    %401 = vector.extract_strided_slice %394 {offsets = [0, 32], sizes = [2, 32], strides = [1, 1]} : vector<2x64xf32> to vector<2x32xf32>
    %402 = arith.subf %381, %400 : vector<2x32xf32>
    %403 = arith.mulf %401, %402 : vector<2x32xf32>
    %404 = arith.addf %400, %403 : vector<2x32xf32>
    %c56_101 = arith.constant 56 : index
    %c0_102 = arith.constant 0 : index
    %405 = vector.load %arg14[%c56_101, %c0_102] : memref<64x32xf32, #tpu.memory_space<vmem>>, vector<2x32xf32>
    tpu.vector_store %arg14[%c56_101, %c0_102], %404 {strides = array<i32>} : memref<64x32xf32, #tpu.memory_space<vmem>>, vector<2x32xf32>,
    %c1_103 = arith.constant 1 : index
    %c0_104 = arith.constant 0 : index
    %c0_105 = arith.constant 0 : index
    %406 = vector.load %arg12[%c1_103, %c0_104, %c0_105] : memref<3x2x32xf32, #tpu.memory_space<vmem>>, vector<1x2x32xf32>
    %407 = vector.shape_cast %406 : vector<1x2x32xf32> to vector<2x32xf32>
    %408 = vector.shape_cast %404 : vector<2x32xf32> to vector<1x2x32xf32>
    tpu.vector_store %arg12[%c1_103, %c0_104, %c0_105], %408 {strides = array<i32>} : memref<3x2x32xf32, #tpu.memory_space<vmem>>, vector<1x2x32xf32>,
    %c2 = arith.constant 2 : index
    %c0_106 = arith.constant 0 : index
    %c0_107 = arith.constant 0 : index
    %409 = vector.load %arg7[%c2, %c0_106, %c0_107] : memref<3x1x96xf32, #tpu.memory_space<vmem>>, vector<1x1x96xf32>
    %410 = vector.shape_cast %409 : vector<1x1x96xf32> to vector<1x96xf32>
    %c2_108 = arith.constant 2 : index
    %c0_109 = arith.constant 0 : index
    %c0_110 = arith.constant 0 : index
    %411 = vector.load %arg8[%c2_108, %c0_109, %c0_110] : memref<3x1x96xf32, #tpu.memory_space<vmem>>, vector<1x1x96xf32>
    %412 = vector.shape_cast %411 : vector<1x1x96xf32> to vector<1x96xf32>
    %c2_111 = arith.constant 2 : index
    %c0_112 = arith.constant 0 : index
    %c0_113 = arith.constant 0 : index
    %413 = vector.load %arg6[%c2_111, %c0_112, %c0_113] : memref<3x32x96xf32, #tpu.memory_space<vmem>>, vector<1x32x96xf32>
    %414 = vector.shape_cast %413 : vector<1x32x96xf32> to vector<32x96xf32>
    %c0_114 = arith.constant 0 : index
    %c0_115 = arith.constant 0 : index
    %415 = vector.load %arg14[%c0_114, %c0_115] : memref<64x32xf32, #tpu.memory_space<vmem>>, vector<64x32xf32>
    %c1_116 = arith.constant 1 : index
    %c0_117 = arith.constant 0 : index
    %c0_118 = arith.constant 0 : index
    %416 = vector.load %arg5[%c1_116, %c0_117, %c0_118] : memref<2x32x96xf32, #tpu.memory_space<vmem>>, vector<1x32x96xf32>
    %417 = vector.shape_cast %416 : vector<1x32x96xf32> to vector<32x96xf32>
    %cst_119 = arith.constant dense<0.000000e+00> : vector<64x96xf32>
    %418 = tpu.matmul %415, %417, %cst_119 {dimension_numbers = #tpu.dot_dimension_numbers<[1], [0], [0], [1], [0, 0, 1, 1], [], []>} : vector<64x32xf32>, vector<32x96xf32>, vector<64x96xf32> -> vector<64x96xf32>
    %419 = vector.broadcast %410 : vector<1x96xf32> to vector<64x96xf32>
    %420 = arith.addf %418, %419 : vector<64x96xf32>
    %c2_120 = arith.constant 2 : index
    %c0_121 = arith.constant 0 : index
    %c0_122 = arith.constant 0 : index
    %421 = vector.load %arg2[%c2_120, %c0_121, %c0_122] : memref<3x2x32xf32, #tpu.memory_space<vmem>>, vector<1x2x32xf32>
    %422 = vector.shape_cast %421 : vector<1x2x32xf32> to vector<2x32xf32>
    %423 = vector.extract_strided_slice %420 {offsets = [0, 0], sizes = [2, 96], strides = [1, 1]} : vector<64x96xf32> to vector<2x96xf32>
    %cst_123 = arith.constant dense<0.000000e+00> : vector<2x96xf32>
    %424 = tpu.matmul %422, %414, %cst_123 {dimension_numbers = #tpu.dot_dimension_numbers<[1], [0], [0], [1], [0, 0, 1, 1], [], []>} : vector<2x32xf32>, vector<32x96xf32>, vector<2x96xf32> -> vector<2x96xf32>
    %425 = vector.broadcast %412 : vector<1x96xf32> to vector<2x96xf32>
    %426 = arith.addf %424, %425 : vector<2x96xf32>
    %427 = vector.extract_strided_slice %423 {offsets = [0, 0], sizes = [2, 64], strides = [1, 1]} : vector<2x96xf32> to vector<2x64xf32>
    %428 = vector.extract_strided_slice %426 {offsets = [0, 0], sizes = [2, 64], strides = [1, 1]} : vector<2x96xf32> to vector<2x64xf32>
    %429 = arith.addf %427, %428 : vector<2x64xf32>
    %430 = arith.negf %429 : vector<2x64xf32>
    %431 = math.exp %430 : vector<2x64xf32>
    %cst_124 = arith.constant 1.000000e+00 : f32
    %432 = vector.broadcast %cst_124 : f32 to vector<2x64xf32>
    %433 = arith.addf %432, %431 : vector<2x64xf32>
    %434 = arith.divf %432, %433 : vector<2x64xf32>
    %435 = vector.extract_strided_slice %423 {offsets = [0, 64], sizes = [2, 32], strides = [1, 1]} : vector<2x96xf32> to vector<2x32xf32>
    %436 = vector.extract_strided_slice %434 {offsets = [0, 0], sizes = [2, 32], strides = [1, 1]} : vector<2x64xf32> to vector<2x32xf32>
    %437 = vector.extract_strided_slice %426 {offsets = [0, 64], sizes = [2, 32], strides = [1, 1]} : vector<2x96xf32> to vector<2x32xf32>
    %438 = arith.mulf %436, %437 : vector<2x32xf32>
    %439 = arith.addf %435, %438 : vector<2x32xf32>
    %440 = math.tanh %439 : vector<2x32xf32>
    %441 = vector.extract_strided_slice %434 {offsets = [0, 32], sizes = [2, 32], strides = [1, 1]} : vector<2x64xf32> to vector<2x32xf32>
    %442 = arith.subf %422, %440 : vector<2x32xf32>
    %443 = arith.mulf %441, %442 : vector<2x32xf32>
    %444 = arith.addf %440, %443 : vector<2x32xf32>
    %c0_125 = arith.constant 0 : index
    %c0_126 = arith.constant 0 : index
    %445 = vector.load %arg13[%c0_125, %c0_126] : memref<64x32xf32, #tpu.memory_space<vmem>>, vector<2x32xf32>
    tpu.vector_store %arg13[%c0_125, %c0_126], %444 {strides = array<i32>} : memref<64x32xf32, #tpu.memory_space<vmem>>, vector<2x32xf32>,
    %446 = vector.extract_strided_slice %420 {offsets = [8, 0], sizes = [2, 96], strides = [1, 1]} : vector<64x96xf32> to vector<2x96xf32>
    %cst_127 = arith.constant dense<0.000000e+00> : vector<2x96xf32>
    %447 = tpu.matmul %444, %414, %cst_127 {dimension_numbers = #tpu.dot_dimension_numbers<[1], [0], [0], [1], [0, 0, 1, 1], [], []>} : vector<2x32xf32>, vector<32x96xf32>, vector<2x96xf32> -> vector<2x96xf32>
    %448 = vector.broadcast %412 : vector<1x96xf32> to vector<2x96xf32>
    %449 = arith.addf %447, %448 : vector<2x96xf32>
    %450 = vector.extract_strided_slice %446 {offsets = [0, 0], sizes = [2, 64], strides = [1, 1]} : vector<2x96xf32> to vector<2x64xf32>
    %451 = vector.extract_strided_slice %449 {offsets = [0, 0], sizes = [2, 64], strides = [1, 1]} : vector<2x96xf32> to vector<2x64xf32>
    %452 = arith.addf %450, %451 : vector<2x64xf32>
    %453 = arith.negf %452 : vector<2x64xf32>
    %454 = math.exp %453 : vector<2x64xf32>
    %cst_128 = arith.constant 1.000000e+00 : f32
    %455 = vector.broadcast %cst_128 : f32 to vector<2x64xf32>
    %456 = arith.addf %455, %454 : vector<2x64xf32>
    %457 = arith.divf %455, %456 : vector<2x64xf32>
    %458 = vector.extract_strided_slice %446 {offsets = [0, 64], sizes = [2, 32], strides = [1, 1]} : vector<2x96xf32> to vector<2x32xf32>
    %459 = vector.extract_strided_slice %457 {offsets = [0, 0], sizes = [2, 32], strides = [1, 1]} : vector<2x64xf32> to vector<2x32xf32>
    %460 = vector.extract_strided_slice %449 {offsets = [0, 64], sizes = [2, 32], strides = [1, 1]} : vector<2x96xf32> to vector<2x32xf32>
    %461 = arith.mulf %459, %460 : vector<2x32xf32>
    %462 = arith.addf %458, %461 : vector<2x32xf32>
    %463 = math.tanh %462 : vector<2x32xf32>
    %464 = vector.extract_strided_slice %457 {offsets = [0, 32], sizes = [2, 32], strides = [1, 1]} : vector<2x64xf32> to vector<2x32xf32>
    %465 = arith.subf %444, %463 : vector<2x32xf32>
    %466 = arith.mulf %464, %465 : vector<2x32xf32>
    %467 = arith.addf %463, %466 : vector<2x32xf32>
    %c8_129 = arith.constant 8 : index
    %c0_130 = arith.constant 0 : index
    %468 = vector.load %arg13[%c8_129, %c0_130] : memref<64x32xf32, #tpu.memory_space<vmem>>, vector<2x32xf32>
    tpu.vector_store %arg13[%c8_129, %c0_130], %467 {strides = array<i32>} : memref<64x32xf32, #tpu.memory_space<vmem>>, vector<2x32xf32>,
    %469 = vector.extract_strided_slice %420 {offsets = [16, 0], sizes = [2, 96], strides = [1, 1]} : vector<64x96xf32> to vector<2x96xf32>
    %cst_131 = arith.constant dense<0.000000e+00> : vector<2x96xf32>
    %470 = tpu.matmul %467, %414, %cst_131 {dimension_numbers = #tpu.dot_dimension_numbers<[1], [0], [0], [1], [0, 0, 1, 1], [], []>} : vector<2x32xf32>, vector<32x96xf32>, vector<2x96xf32> -> vector<2x96xf32>
    %471 = vector.broadcast %412 : vector<1x96xf32> to vector<2x96xf32>
    %472 = arith.addf %470, %471 : vector<2x96xf32>
    %473 = vector.extract_strided_slice %469 {offsets = [0, 0], sizes = [2, 64], strides = [1, 1]} : vector<2x96xf32> to vector<2x64xf32>
    %474 = vector.extract_strided_slice %472 {offsets = [0, 0], sizes = [2, 64], strides = [1, 1]} : vector<2x96xf32> to vector<2x64xf32>
    %475 = arith.addf %473, %474 : vector<2x64xf32>
    %476 = arith.negf %475 : vector<2x64xf32>
    %477 = math.exp %476 : vector<2x64xf32>
    %cst_132 = arith.constant 1.000000e+00 : f32
    %478 = vector.broadcast %cst_132 : f32 to vector<2x64xf32>
    %479 = arith.addf %478, %477 : vector<2x64xf32>
    %480 = arith.divf %478, %479 : vector<2x64xf32>
    %481 = vector.extract_strided_slice %469 {offsets = [0, 64], sizes = [2, 32], strides = [1, 1]} : vector<2x96xf32> to vector<2x32xf32>
    %482 = vector.extract_strided_slice %480 {offsets = [0, 0], sizes = [2, 32], strides = [1, 1]} : vector<2x64xf32> to vector<2x32xf32>
    %483 = vector.extract_strided_slice %472 {offsets = [0, 64], sizes = [2, 32], strides = [1, 1]} : vector<2x96xf32> to vector<2x32xf32>
    %484 = arith.mulf %482, %483 : vector<2x32xf32>
    %485 = arith.addf %481, %484 : vector<2x32xf32>
    %486 = math.tanh %485 : vector<2x32xf32>
    %487 = vector.extract_strided_slice %480 {offsets = [0, 32], sizes = [2, 32], strides = [1, 1]} : vector<2x64xf32> to vector<2x32xf32>
    %488 = arith.subf %467, %486 : vector<2x32xf32>
    %489 = arith.mulf %487, %488 : vector<2x32xf32>
    %490 = arith.addf %486, %489 : vector<2x32xf32>
    %c16_133 = arith.constant 16 : index
    %c0_134 = arith.constant 0 : index
    %491 = vector.load %arg13[%c16_133, %c0_134] : memref<64x32xf32, #tpu.memory_space<vmem>>, vector<2x32xf32>
    tpu.vector_store %arg13[%c16_133, %c0_134], %490 {strides = array<i32>} : memref<64x32xf32, #tpu.memory_space<vmem>>, vector<2x32xf32>,
    %492 = vector.extract_strided_slice %420 {offsets = [24, 0], sizes = [2, 96], strides = [1, 1]} : vector<64x96xf32> to vector<2x96xf32>
    %cst_135 = arith.constant dense<0.000000e+00> : vector<2x96xf32>
    %493 = tpu.matmul %490, %414, %cst_135 {dimension_numbers = #tpu.dot_dimension_numbers<[1], [0], [0], [1], [0, 0, 1, 1], [], []>} : vector<2x32xf32>, vector<32x96xf32>, vector<2x96xf32> -> vector<2x96xf32>
    %494 = vector.broadcast %412 : vector<1x96xf32> to vector<2x96xf32>
    %495 = arith.addf %493, %494 : vector<2x96xf32>
    %496 = vector.extract_strided_slice %492 {offsets = [0, 0], sizes = [2, 64], strides = [1, 1]} : vector<2x96xf32> to vector<2x64xf32>
    %497 = vector.extract_strided_slice %495 {offsets = [0, 0], sizes = [2, 64], strides = [1, 1]} : vector<2x96xf32> to vector<2x64xf32>
    %498 = arith.addf %496, %497 : vector<2x64xf32>
    %499 = arith.negf %498 : vector<2x64xf32>
    %500 = math.exp %499 : vector<2x64xf32>
    %cst_136 = arith.constant 1.000000e+00 : f32
    %501 = vector.broadcast %cst_136 : f32 to vector<2x64xf32>
    %502 = arith.addf %501, %500 : vector<2x64xf32>
    %503 = arith.divf %501, %502 : vector<2x64xf32>
    %504 = vector.extract_strided_slice %492 {offsets = [0, 64], sizes = [2, 32], strides = [1, 1]} : vector<2x96xf32> to vector<2x32xf32>
    %505 = vector.extract_strided_slice %503 {offsets = [0, 0], sizes = [2, 32], strides = [1, 1]} : vector<2x64xf32> to vector<2x32xf32>
    %506 = vector.extract_strided_slice %495 {offsets = [0, 64], sizes = [2, 32], strides = [1, 1]} : vector<2x96xf32> to vector<2x32xf32>
    %507 = arith.mulf %505, %506 : vector<2x32xf32>
    %508 = arith.addf %504, %507 : vector<2x32xf32>
    %509 = math.tanh %508 : vector<2x32xf32>
    %510 = vector.extract_strided_slice %503 {offsets = [0, 32], sizes = [2, 32], strides = [1, 1]} : vector<2x64xf32> to vector<2x32xf32>
    %511 = arith.subf %490, %509 : vector<2x32xf32>
    %512 = arith.mulf %510, %511 : vector<2x32xf32>
    %513 = arith.addf %509, %512 : vector<2x32xf32>
    %c24_137 = arith.constant 24 : index
    %c0_138 = arith.constant 0 : index
    %514 = vector.load %arg13[%c24_137, %c0_138] : memref<64x32xf32, #tpu.memory_space<vmem>>, vector<2x32xf32>
    tpu.vector_store %arg13[%c24_137, %c0_138], %513 {strides = array<i32>} : memref<64x32xf32, #tpu.memory_space<vmem>>, vector<2x32xf32>,
    %515 = vector.extract_strided_slice %420 {offsets = [32, 0], sizes = [2, 96], strides = [1, 1]} : vector<64x96xf32> to vector<2x96xf32>
    %cst_139 = arith.constant dense<0.000000e+00> : vector<2x96xf32>
    %516 = tpu.matmul %513, %414, %cst_139 {dimension_numbers = #tpu.dot_dimension_numbers<[1], [0], [0], [1], [0, 0, 1, 1], [], []>} : vector<2x32xf32>, vector<32x96xf32>, vector<2x96xf32> -> vector<2x96xf32>
    %517 = vector.broadcast %412 : vector<1x96xf32> to vector<2x96xf32>
    %518 = arith.addf %516, %517 : vector<2x96xf32>
    %519 = vector.extract_strided_slice %515 {offsets = [0, 0], sizes = [2, 64], strides = [1, 1]} : vector<2x96xf32> to vector<2x64xf32>
    %520 = vector.extract_strided_slice %518 {offsets = [0, 0], sizes = [2, 64], strides = [1, 1]} : vector<2x96xf32> to vector<2x64xf32>
    %521 = arith.addf %519, %520 : vector<2x64xf32>
    %522 = arith.negf %521 : vector<2x64xf32>
    %523 = math.exp %522 : vector<2x64xf32>
    %cst_140 = arith.constant 1.000000e+00 : f32
    %524 = vector.broadcast %cst_140 : f32 to vector<2x64xf32>
    %525 = arith.addf %524, %523 : vector<2x64xf32>
    %526 = arith.divf %524, %525 : vector<2x64xf32>
    %527 = vector.extract_strided_slice %515 {offsets = [0, 64], sizes = [2, 32], strides = [1, 1]} : vector<2x96xf32> to vector<2x32xf32>
    %528 = vector.extract_strided_slice %526 {offsets = [0, 0], sizes = [2, 32], strides = [1, 1]} : vector<2x64xf32> to vector<2x32xf32>
    %529 = vector.extract_strided_slice %518 {offsets = [0, 64], sizes = [2, 32], strides = [1, 1]} : vector<2x96xf32> to vector<2x32xf32>
    %530 = arith.mulf %528, %529 : vector<2x32xf32>
    %531 = arith.addf %527, %530 : vector<2x32xf32>
    %532 = math.tanh %531 : vector<2x32xf32>
    %533 = vector.extract_strided_slice %526 {offsets = [0, 32], sizes = [2, 32], strides = [1, 1]} : vector<2x64xf32> to vector<2x32xf32>
    %534 = arith.subf %513, %532 : vector<2x32xf32>
    %535 = arith.mulf %533, %534 : vector<2x32xf32>
    %536 = arith.addf %532, %535 : vector<2x32xf32>
    %c32_141 = arith.constant 32 : index
    %c0_142 = arith.constant 0 : index
    %537 = vector.load %arg13[%c32_141, %c0_142] : memref<64x32xf32, #tpu.memory_space<vmem>>, vector<2x32xf32>
    tpu.vector_store %arg13[%c32_141, %c0_142], %536 {strides = array<i32>} : memref<64x32xf32, #tpu.memory_space<vmem>>, vector<2x32xf32>,
    %538 = vector.extract_strided_slice %420 {offsets = [40, 0], sizes = [2, 96], strides = [1, 1]} : vector<64x96xf32> to vector<2x96xf32>
    %cst_143 = arith.constant dense<0.000000e+00> : vector<2x96xf32>
    %539 = tpu.matmul %536, %414, %cst_143 {dimension_numbers = #tpu.dot_dimension_numbers<[1], [0], [0], [1], [0, 0, 1, 1], [], []>} : vector<2x32xf32>, vector<32x96xf32>, vector<2x96xf32> -> vector<2x96xf32>
    %540 = vector.broadcast %412 : vector<1x96xf32> to vector<2x96xf32>
    %541 = arith.addf %539, %540 : vector<2x96xf32>
    %542 = vector.extract_strided_slice %538 {offsets = [0, 0], sizes = [2, 64], strides = [1, 1]} : vector<2x96xf32> to vector<2x64xf32>
    %543 = vector.extract_strided_slice %541 {offsets = [0, 0], sizes = [2, 64], strides = [1, 1]} : vector<2x96xf32> to vector<2x64xf32>
    %544 = arith.addf %542, %543 : vector<2x64xf32>
    %545 = arith.negf %544 : vector<2x64xf32>
    %546 = math.exp %545 : vector<2x64xf32>
    %cst_144 = arith.constant 1.000000e+00 : f32
    %547 = vector.broadcast %cst_144 : f32 to vector<2x64xf32>
    %548 = arith.addf %547, %546 : vector<2x64xf32>
    %549 = arith.divf %547, %548 : vector<2x64xf32>
    %550 = vector.extract_strided_slice %538 {offsets = [0, 64], sizes = [2, 32], strides = [1, 1]} : vector<2x96xf32> to vector<2x32xf32>
    %551 = vector.extract_strided_slice %549 {offsets = [0, 0], sizes = [2, 32], strides = [1, 1]} : vector<2x64xf32> to vector<2x32xf32>
    %552 = vector.extract_strided_slice %541 {offsets = [0, 64], sizes = [2, 32], strides = [1, 1]} : vector<2x96xf32> to vector<2x32xf32>
    %553 = arith.mulf %551, %552 : vector<2x32xf32>
    %554 = arith.addf %550, %553 : vector<2x32xf32>
    %555 = math.tanh %554 : vector<2x32xf32>
    %556 = vector.extract_strided_slice %549 {offsets = [0, 32], sizes = [2, 32], strides = [1, 1]} : vector<2x64xf32> to vector<2x32xf32>
    %557 = arith.subf %536, %555 : vector<2x32xf32>
    %558 = arith.mulf %556, %557 : vector<2x32xf32>
    %559 = arith.addf %555, %558 : vector<2x32xf32>
    %c40_145 = arith.constant 40 : index
    %c0_146 = arith.constant 0 : index
    %560 = vector.load %arg13[%c40_145, %c0_146] : memref<64x32xf32, #tpu.memory_space<vmem>>, vector<2x32xf32>
    tpu.vector_store %arg13[%c40_145, %c0_146], %559 {strides = array<i32>} : memref<64x32xf32, #tpu.memory_space<vmem>>, vector<2x32xf32>,
    %561 = vector.extract_strided_slice %420 {offsets = [48, 0], sizes = [2, 96], strides = [1, 1]} : vector<64x96xf32> to vector<2x96xf32>
    %cst_147 = arith.constant dense<0.000000e+00> : vector<2x96xf32>
    %562 = tpu.matmul %559, %414, %cst_147 {dimension_numbers = #tpu.dot_dimension_numbers<[1], [0], [0], [1], [0, 0, 1, 1], [], []>} : vector<2x32xf32>, vector<32x96xf32>, vector<2x96xf32> -> vector<2x96xf32>
    %563 = vector.broadcast %412 : vector<1x96xf32> to vector<2x96xf32>
    %564 = arith.addf %562, %563 : vector<2x96xf32>
    %565 = vector.extract_strided_slice %561 {offsets = [0, 0], sizes = [2, 64], strides = [1, 1]} : vector<2x96xf32> to vector<2x64xf32>
    %566 = vector.extract_strided_slice %564 {offsets = [0, 0], sizes = [2, 64], strides = [1, 1]} : vector<2x96xf32> to vector<2x64xf32>
    %567 = arith.addf %565, %566 : vector<2x64xf32>
    %568 = arith.negf %567 : vector<2x64xf32>
    %569 = math.exp %568 : vector<2x64xf32>
    %cst_148 = arith.constant 1.000000e+00 : f32
    %570 = vector.broadcast %cst_148 : f32 to vector<2x64xf32>
    %571 = arith.addf %570, %569 : vector<2x64xf32>
    %572 = arith.divf %570, %571 : vector<2x64xf32>
    %573 = vector.extract_strided_slice %561 {offsets = [0, 64], sizes = [2, 32], strides = [1, 1]} : vector<2x96xf32> to vector<2x32xf32>
    %574 = vector.extract_strided_slice %572 {offsets = [0, 0], sizes = [2, 32], strides = [1, 1]} : vector<2x64xf32> to vector<2x32xf32>
    %575 = vector.extract_strided_slice %564 {offsets = [0, 64], sizes = [2, 32], strides = [1, 1]} : vector<2x96xf32> to vector<2x32xf32>
    %576 = arith.mulf %574, %575 : vector<2x32xf32>
    %577 = arith.addf %573, %576 : vector<2x32xf32>
    %578 = math.tanh %577 : vector<2x32xf32>
    %579 = vector.extract_strided_slice %572 {offsets = [0, 32], sizes = [2, 32], strides = [1, 1]} : vector<2x64xf32> to vector<2x32xf32>
    %580 = arith.subf %559, %578 : vector<2x32xf32>
    %581 = arith.mulf %579, %580 : vector<2x32xf32>
    %582 = arith.addf %578, %581 : vector<2x32xf32>
    %c48_149 = arith.constant 48 : index
    %c0_150 = arith.constant 0 : index
    %583 = vector.load %arg13[%c48_149, %c0_150] : memref<64x32xf32, #tpu.memory_space<vmem>>, vector<2x32xf32>
    tpu.vector_store %arg13[%c48_149, %c0_150], %582 {strides = array<i32>} : memref<64x32xf32, #tpu.memory_space<vmem>>, vector<2x32xf32>,
    %584 = vector.extract_strided_slice %420 {offsets = [56, 0], sizes = [2, 96], strides = [1, 1]} : vector<64x96xf32> to vector<2x96xf32>
    %cst_151 = arith.constant dense<0.000000e+00> : vector<2x96xf32>
    %585 = tpu.matmul %582, %414, %cst_151 {dimension_numbers = #tpu.dot_dimension_numbers<[1], [0], [0], [1], [0, 0, 1, 1], [], []>} : vector<2x32xf32>, vector<32x96xf32>, vector<2x96xf32> -> vector<2x96xf32>
    %586 = vector.broadcast %412 : vector<1x96xf32> to vector<2x96xf32>
    %587 = arith.addf %585, %586 : vector<2x96xf32>
    %588 = vector.extract_strided_slice %584 {offsets = [0, 0], sizes = [2, 64], strides = [1, 1]} : vector<2x96xf32> to vector<2x64xf32>
    %589 = vector.extract_strided_slice %587 {offsets = [0, 0], sizes = [2, 64], strides = [1, 1]} : vector<2x96xf32> to vector<2x64xf32>
    %590 = arith.addf %588, %589 : vector<2x64xf32>
    %591 = arith.negf %590 : vector<2x64xf32>
    %592 = math.exp %591 : vector<2x64xf32>
    %cst_152 = arith.constant 1.000000e+00 : f32
    %593 = vector.broadcast %cst_152 : f32 to vector<2x64xf32>
    %594 = arith.addf %593, %592 : vector<2x64xf32>
    %595 = arith.divf %593, %594 : vector<2x64xf32>
    %596 = vector.extract_strided_slice %584 {offsets = [0, 64], sizes = [2, 32], strides = [1, 1]} : vector<2x96xf32> to vector<2x32xf32>
    %597 = vector.extract_strided_slice %595 {offsets = [0, 0], sizes = [2, 32], strides = [1, 1]} : vector<2x64xf32> to vector<2x32xf32>
    %598 = vector.extract_strided_slice %587 {offsets = [0, 64], sizes = [2, 32], strides = [1, 1]} : vector<2x96xf32> to vector<2x32xf32>
    %599 = arith.mulf %597, %598 : vector<2x32xf32>
    %600 = arith.addf %596, %599 : vector<2x32xf32>
    %601 = math.tanh %600 : vector<2x32xf32>
    %602 = vector.extract_strided_slice %595 {offsets = [0, 32], sizes = [2, 32], strides = [1, 1]} : vector<2x64xf32> to vector<2x32xf32>
    %603 = arith.subf %582, %601 : vector<2x32xf32>
    %604 = arith.mulf %602, %603 : vector<2x32xf32>
    %605 = arith.addf %601, %604 : vector<2x32xf32>
    %c56_153 = arith.constant 56 : index
    %c0_154 = arith.constant 0 : index
    %606 = vector.load %arg13[%c56_153, %c0_154] : memref<64x32xf32, #tpu.memory_space<vmem>>, vector<2x32xf32>
    tpu.vector_store %arg13[%c56_153, %c0_154], %605 {strides = array<i32>} : memref<64x32xf32, #tpu.memory_space<vmem>>, vector<2x32xf32>,
    %c2_155 = arith.constant 2 : index
    %c0_156 = arith.constant 0 : index
    %c0_157 = arith.constant 0 : index
    %607 = vector.load %arg12[%c2_155, %c0_156, %c0_157] : memref<3x2x32xf32, #tpu.memory_space<vmem>>, vector<1x2x32xf32>
    %608 = vector.shape_cast %607 : vector<1x2x32xf32> to vector<2x32xf32>
    %609 = vector.shape_cast %605 : vector<2x32xf32> to vector<1x2x32xf32>
    tpu.vector_store %arg12[%c2_155, %c0_156, %c0_157], %609 {strides = array<i32>} : memref<3x2x32xf32, #tpu.memory_space<vmem>>, vector<1x2x32xf32>,
    %c0_158 = arith.constant 0 : index
    %c0_159 = arith.constant 0 : index
    %610 = vector.load %arg13[%c0_158, %c0_159] : memref<64x32xf32, #tpu.memory_space<vmem>>, vector<64x32xf32>
    %c0_160 = arith.constant 0 : index
    %c0_161 = arith.constant 0 : index
    %611 = vector.load %arg9[%c0_160, %c0_161] : memref<32x128xf32, #tpu.memory_space<vmem>>, vector<32x128xf32>
    %cst_162 = arith.constant dense<0.000000e+00> : vector<64x128xf32>
    %612 = tpu.matmul %610, %611, %cst_162 {dimension_numbers = #tpu.dot_dimension_numbers<[1], [0], [0], [1], [0, 0, 1, 1], [], []>} : vector<64x32xf32>, vector<32x128xf32>, vector<64x128xf32> -> vector<64x128xf32>
    %c0_163 = arith.constant 0 : index
    %c0_164 = arith.constant 0 : index
    %613 = vector.load %arg10[%c0_163, %c0_164] : memref<1x128xf32, #tpu.memory_space<vmem>>, vector<1x128xf32>
    %614 = vector.broadcast %613 : vector<1x128xf32> to vector<64x128xf32>
    %615 = arith.addf %612, %614 : vector<64x128xf32>
    %c0_165 = arith.constant 0 : index
    %c0_166 = arith.constant 0 : index
    %616 = vector.load %arg11[%c0_165, %c0_166] : memref<64x128xf32, #tpu.memory_space<vmem>>, vector<64x128xf32>
    tpu.vector_store %arg11[%c0_165, %c0_166], %615 {strides = array<i32>} : memref<64x128xf32, #tpu.memory_space<vmem>>, vector<64x128xf32>,
    return
  }
}

</mosaic_0001>

<llo_original>
// kernel: gru_dynamic_forward.1
$region0: #{gru_dynamic_forward.1}
  #allocation0 [shape = 'u32[]', space=smem, size = 0x4, offset = 0x4, fixed_abs, tag = 'smem constant byte address 0x4 - core index']
  #allocation1 [shape = 'u32[72,128]{1,0:T(1,128)}', space=vmem, size = 0x9000, scoped, tag = 'internal scratch']
  #allocation2 [shape = 'f32[64,32]{1,0:T(8,128)}', space=vmem, size = 0x8000, scoped, tag = 'scratch operand']
  #allocation3 [shape = 'f32[64,32]{1,0:T(8,128)}', space=vmem, size = 0x8000, scoped, tag = 'scratch operand']
  %s0 = inlined_call_operand.vmem [shape: f32[64,8], index: 0, kind: input, shape index: {}]
  %s1 = inlined_call_operand.vmem [shape: f32[64,8], index: 1, kind: input, shape index: {}]
  %s2 = inlined_call_operand.vmem [shape: f32[3,2,32], index: 2, kind: input, shape index: {}, may-alias: {2,12}]
  %s3 = inlined_call_operand.vmem [shape: f32[8,96], index: 3, kind: input, shape index: {}]
  %s4 = inlined_call_operand.vmem [shape: f32[8,96], index: 4, kind: input, shape index: {}]
  %s5 = inlined_call_operand.vmem [shape: f32[2,32,96], index: 5, kind: input, shape index: {}]
  %s6 = inlined_call_operand.vmem [shape: f32[3,32,96], index: 6, kind: input, shape index: {}]
  %s7 = inlined_call_operand.hbm [shape: f32[3,1,96], index: 7, kind: input, shape index: {}]
  %s8 = inlined_call_operand.hbm [shape: f32[3,1,96], index: 8, kind: input, shape index: {}]
  %s9 = inlined_call_operand.vmem [shape: f32[32,128], index: 9, kind: input, shape index: {}]
  %s10 = inlined_call_operand.vmem [shape: f32[1,128], index: 10, kind: input, shape index: {}]
  %s11 = inlined_call_operand.vmem [shape: f32[64,128], index: 11, kind: output, shape index: {0}]
  %s12 = inlined_call_operand.vmem [shape: f32[3,2,32], index: 12, kind: output, shape index: {1}, may-alias: {2,12}]
  %13 = xla_tuple %s11, %s12
  %s14 = sld [smem:[#allocation0]]
  $region70: #{gru_dynamic_forward.1} parent=0
    _
  %s16 = ssub.s32 1, %s14
  %s17 = scalar_select 0, %s16, %s14
  $region1: #{gru_dynamic_forward.1} parent=0
    #allocation4 [shape = 'u8[1536]{0}', space=vmem, size = 0x800, scoped, tag = 'input window, operand 7, single buffered']
    #allocation5 [shape = 's32[1]{0}', space=sflag, size = 0x4, scoped, tag = 'scoped memory for gru_dynamic_forward.1']
    #allocation6 [shape = 'u8[1536]{0}', space=vmem, size = 0x800, scoped, tag = 'input window, operand 8, single buffered']
    #allocation7 [shape = 's32[1]{0}', space=sflag, size = 0x4, scoped, tag = 'scoped memory for gru_dynamic_forward.1']
    %18 = vsyncpa [#allocation5], 0
    %19 = vsyncpa [#allocation7], 0
    // Predicated region
    $region2: #{gru_dynamic_forward.1} parent=1 // pred_check
      _
    $region3: #{gru_dynamic_forward.1} parent=1 // pred_check_branch
      %21 = sbr.rel (0) target = $region5
    $region4: #{gru_dynamic_forward.1} parent=1 // pred_region
      _
    $region5: #{gru_dynamic_forward.1} parent=1 // pred_fallthru
      _
    // Predicated region
    $region6: #{gru_dynamic_forward.1} parent=1 // pred_check
      _
    $region7: #{gru_dynamic_forward.1} parent=1 // pred_check_branch
      %23 = sbr.rel (0) target = $region9
    $region8: #{gru_dynamic_forward.1} parent=1 // pred_region
      _
    $region9: #{gru_dynamic_forward.1} parent=1 // pred_fallthru
      _
    // Predicated region
    $region10: #{gru_dynamic_forward.1} parent=1 // pred_check
      _
    $region11: #{gru_dynamic_forward.1} parent=1 // pred_check_branch
      %25 = sbr.rel (0) target = $region13
    $region12: #{gru_dynamic_forward.1} parent=1 // pred_region
      _
    $region13: #{gru_dynamic_forward.1} parent=1 // pred_fallthru
      _
    // Predicated region
    $region14: #{gru_dynamic_forward.1} parent=1 // pred_check
      _
    $region15: #{gru_dynamic_forward.1} parent=1 // pred_check_branch
      %27 = sbr.rel (0) target = $region17
    $region16: #{gru_dynamic_forward.1} parent=1 // pred_region
      _
    $region17: #{gru_dynamic_forward.1} parent=1 // pred_fallthru
      _
    // Predicated region
    $region18: #{gru_dynamic_forward.1} parent=1 // pred_check
      _
    $region19: #{gru_dynamic_forward.1} parent=1 // pred_check_branch
      %29 = sbr.rel (0) target = $region21
    $region20: #{gru_dynamic_forward.1} parent=1 // pred_region
      _
    $region21: #{gru_dynamic_forward.1} parent=1 // pred_fallthru
      _
    // Predicated region
    $region22: #{gru_dynamic_forward.1} parent=1 // pred_check
      _
    $region23: #{gru_dynamic_forward.1} parent=1 // pred_check_branch
      %31 = sbr.rel (0) target = $region25
    $region24: #{gru_dynamic_forward.1} parent=1 // pred_region
      _
    $region25: #{gru_dynamic_forward.1} parent=1 // pred_fallthru
      _
    // Predicated region
    $region26: #{gru_dynamic_forward.1} parent=1 // pred_check
      _
    $region27: #{gru_dynamic_forward.1} parent=1 // pred_check_branch
      %33 = sbr.rel (0) target = $region29
    $region28: #{gru_dynamic_forward.1} parent=1 // pred_region
      _
    $region29: #{gru_dynamic_forward.1} parent=1 // pred_fallthru
      _
    // Predicated region
    $region30: #{gru_dynamic_forward.1} parent=1 // pred_check
      _
    $region31: #{gru_dynamic_forward.1} parent=1 // pred_check_branch
      %35 = sbr.rel (0) target = $region33
    $region32: #{gru_dynamic_forward.1} parent=1 // pred_region
      %37 = vsyncadd [#allocation5], 0
      %s38 = sshll.u32 %s7, 4
      %s39 = int_to_ptr.hbm [resolvable:$true] %s38
      %s40 = sshll.u32 [#allocation4], 4
      %s41 = int_to_ptr.vmem [resolvable:$true] %s40
      %46 = dma.hbm_to_vmem [thread:$0]  %s39, 48, %s41, [#allocation5], 16, 16, 1
    $region33: #{gru_dynamic_forward.1} parent=1 // pred_fallthru
      _
    // Predicated region
    $region34: #{gru_dynamic_forward.1} parent=1 // pred_check
      _
    $region35: #{gru_dynamic_forward.1} parent=1 // pred_check_branch
      %48 = sbr.rel (0) target = $region37
    $region36: #{gru_dynamic_forward.1} parent=1 // pred_region
      %50 = vsyncadd [#allocation7], 0
      %s51 = sshll.u32 %s8, 4
      %s52 = int_to_ptr.hbm [resolvable:$true] %s51
      %s53 = sshll.u32 [#allocation6], 4
      %s54 = int_to_ptr.vmem [resolvable:$true] %s53
      %59 = dma.hbm_to_vmem [thread:$0]  %s52, 48, %s54, [#allocation7], 16, 16, 1
    $region37: #{gru_dynamic_forward.1} parent=1 // pred_fallthru
      _
    // Predicated region
    $region38: #{gru_dynamic_forward.1} parent=1 // pred_check
      _
    $region39: #{gru_dynamic_forward.1} parent=1 // pred_check_branch
      %61 = sbr.rel (0) target = $region41
    $region40: #{gru_dynamic_forward.1} parent=1 // pred_region
      _
    $region41: #{gru_dynamic_forward.1} parent=1 // pred_fallthru
      _
    // Predicated region
    $region42: #{gru_dynamic_forward.1} parent=1 // pred_check
      _
    $region43: #{gru_dynamic_forward.1} parent=1 // pred_check_branch
      %63 = sbr.rel (0) target = $region45
    $region44: #{gru_dynamic_forward.1} parent=1 // pred_region
      _
    $region45: #{gru_dynamic_forward.1} parent=1 // pred_fallthru
      _
    // Predicated region
    $region46: #{gru_dynamic_forward.1} parent=1 // pred_check
      _
    $region47: #{gru_dynamic_forward.1} parent=1 // pred_check_branch
      %65 = sbr.rel (0) target = $region49
    $region48: #{gru_dynamic_forward.1} parent=1 // pred_region
      %67 = dma.done [#allocation5], 48
    $region49: #{gru_dynamic_forward.1} parent=1 // pred_fallthru
      _
    // Predicated region
    $region50: #{gru_dynamic_forward.1} parent=1 // pred_check
      _
    $region51: #{gru_dynamic_forward.1} parent=1 // pred_check_branch
      %69 = sbr.rel (0) target = $region53
    $region52: #{gru_dynamic_forward.1} parent=1 // pred_region
      %71 = dma.done [#allocation7], 48
    $region53: #{gru_dynamic_forward.1} parent=1 // pred_fallthru
      _
    %vm72 = vcmask 261120
    %73 = vst.msk [vmem:[#allocation2] sm:$0xff] %vm72, 0.0
    %74 = vst.msk [vmem:[#allocation2 + $0x8] sm:$0xff] %vm72, 0.0
    %75 = vst.msk [vmem:[#allocation2 + $0x10] sm:$0xff] %vm72, 0.0
    %76 = vst.msk [vmem:[#allocation2 + $0x18] sm:$0xff] %vm72, 0.0
    %77 = vst.msk [vmem:[#allocation2 + $0x20] sm:$0xff] %vm72, 0.0
    %78 = vst.msk [vmem:[#allocation2 + $0x28] sm:$0xff] %vm72, 0.0
    %79 = vst.msk [vmem:[#allocation2 + $0x30] sm:$0xff] %vm72, 0.0
    %80 = vst.msk [vmem:[#allocation2 + $0x38] sm:$0xff] %vm72, 0.0
    %81 = vst.msk [vmem:[#allocation3] sm:$0xff] %vm72, 0.0
    %82 = vst.msk [vmem:[#allocation3 + $0x8] sm:$0xff] %vm72, 0.0
    %83 = vst.msk [vmem:[#allocation3 + $0x10] sm:$0xff] %vm72, 0.0
    %84 = vst.msk [vmem:[#allocation3 + $0x18] sm:$0xff] %vm72, 0.0
    %85 = vst.msk [vmem:[#allocation3 + $0x20] sm:$0xff] %vm72, 0.0
    %86 = vst.msk [vmem:[#allocation3 + $0x28] sm:$0xff] %vm72, 0.0
    %87 = vst.msk [vmem:[#allocation3 + $0x30] sm:$0xff] %vm72, 0.0
    %88 = vst.msk [vmem:[#allocation3 + $0x38] sm:$0xff] %vm72, 0.0
    %v89 = vld [vmem:[#allocation4] sm:$0x1]
    %v90 = vld [vmem:[#allocation6] sm:$0x1]
    %v91 = vld [vmem:[%s6] sm:$0xff]
    %v92 = vld [vmem:[%s6 + $0x8] sm:$0xff]
    %v93 = vld [vmem:[%s6 + $0x10] sm:$0xff]
    %v94 = vld [vmem:[%s6 + $0x18] sm:$0xff]
    %v95 = vld [vmem:[%s0] sm:$0xff]
    %v96 = vld [vmem:[%s0 + $0x8] sm:$0xff]
    %v97 = vld [vmem:[%s0 + $0x10] sm:$0xff]
    %v98 = vld [vmem:[%s0 + $0x18] sm:$0xff]
    %v99 = vld [vmem:[%s0 + $0x20] sm:$0xff]
    %v100 = vld [vmem:[%s0 + $0x28] sm:$0xff]
    %v101 = vld [vmem:[%s0 + $0x30] sm:$0xff]
    %v102 = vld [vmem:[%s0 + $0x38] sm:$0xff]
    %v103 = vld [vmem:[%s3] sm:$0xff]
    %v104 = vld [vmem:[%s1] sm:$0xff]
    %v105 = vld [vmem:[%s1 + $0x8] sm:$0xff]
    %v106 = vld [vmem:[%s1 + $0x10] sm:$0xff]
    %v107 = vld [vmem:[%s1 + $0x18] sm:$0xff]
    %v108 = vld [vmem:[%s1 + $0x20] sm:$0xff]
    %v109 = vld [vmem:[%s1 + $0x28] sm:$0xff]
    %v110 = vld [vmem:[%s1 + $0x30] sm:$0xff]
    %v111 = vld [vmem:[%s1 + $0x38] sm:$0xff]
    %v112 = vld [vmem:[%s4] sm:$0xff]
    %vm113 = vcmask 64512
    %v115 = vsel %vm113, %v104, 0
    %v118 = vsel %vm113, %v105, 0
    %v121 = vsel %vm113, %v106, 0
    %v124 = vsel %vm113, %v107, 0
    %v127 = vsel %vm113, %v108, 0
    %v130 = vsel %vm113, %v109, 0
    %v133 = vsel %vm113, %v110, 0
    %v136 = vsel %vm113, %v111, 0
    %138 = vmatpush.msra.mxu0 0.0
    %139 = vmatpush.msra.mxu0 0.0
    %140 = vmatpush.msra.mxu0 0.0
    %141 = vmatpush.msra.mxu0 0.0
    %142 = vmatpush.msra.mxu0 0.0
    %143 = vmatpush.msra.mxu0 0.0
    %144 = vmatpush.msra.mxu0 0.0
    %145 = vmatpush.msra.mxu0 0.0
    %146 = vmatpush.msra.mxu0 0.0
    %147 = vmatpush.msra.mxu0 0.0
    %148 = vmatpush.msra.mxu0 0.0
    %149 = vmatpush.msra.mxu0 0.0
    %150 = vmatpush.msra.mxu0 0.0
    %151 = vmatpush.msra.mxu0 0.0
    %152 = vmatpush.msra.mxu0 0.0
    %153 = vmatpush.msra.mxu0 %v112
    %154 = vmatmul.f32.gmra.mxu0 %v115
    %v155 = vpop.f32.mrf.mxu0
    %v156 = vadd.f32 0.0, %v155
    %157 = vmatmul.f32.gmra.mxu0 %v118
    %v158 = vpop.f32.mrf.mxu0
    %v159 = vadd.f32 0.0, %v158
    %160 = vmatmul.f32.gmra.mxu0 %v121
    %v161 = vpop.f32.mrf.mxu0
    %v162 = vadd.f32 0.0, %v161
    %163 = vmatmul.f32.gmra.mxu0 %v124
    %v164 = vpop.f32.mrf.mxu0
    %v165 = vadd.f32 0.0, %v164
    %166 = vmatmul.f32.gmra.mxu0 %v127
    %v167 = vpop.f32.mrf.mxu0
    %v168 = vadd.f32 0.0, %v167
    %169 = vmatmul.f32.gmra.mxu0 %v130
    %v170 = vpop.f32.mrf.mxu0
    %v171 = vadd.f32 0.0, %v170
    %172 = vmatmul.f32.gmra.mxu0 %v133
    %v173 = vpop.f32.mrf.mxu0
    %v174 = vadd.f32 0.0, %v173
    %175 = vmatmul.f32.gmra.mxu0 %v136
    %v176 = vpop.f32.mrf.mxu0
    %v177 = vadd.f32 0.0, %v176
    %178 = vdwg.mxu0
    %v180 = vsel %vm113, %v95, 0
    %v183 = vsel %vm113, %v96, 0
    %v186 = vsel %vm113, %v97, 0
    %v189 = vsel %vm113, %v98, 0
    %v192 = vsel %vm113, %v99, 0
    %v195 = vsel %vm113, %v100, 0
    %v198 = vsel %vm113, %v101, 0
    %v201 = vsel %vm113, %v102, 0
    %203 = vmatpush.msra.mxu0 0.0
    %204 = vmatpush.msra.mxu0 0.0
    %205 = vmatpush.msra.mxu0 0.0
    %206 = vmatpush.msra.mxu0 0.0
    %207 = vmatpush.msra.mxu0 0.0
    %208 = vmatpush.msra.mxu0 0.0
    %209 = vmatpush.msra.mxu0 0.0
    %210 = vmatpush.msra.mxu0 0.0
    %211 = vmatpush.msra.mxu0 0.0
    %212 = vmatpush.msra.mxu0 0.0
    %213 = vmatpush.msra.mxu0 0.0
    %214 = vmatpush.msra.mxu0 0.0
    %215 = vmatpush.msra.mxu0 0.0
    %216 = vmatpush.msra.mxu0 0.0
    %217 = vmatpush.msra.mxu0 0.0
    %218 = vmatpush.msra.mxu0 %v103
    %219 = vmatmul.f32.gmra.mxu0 %v180
    %v220 = vpop.f32.mrf.mxu0
    %v221 = vadd.f32 %v156, %v220
    %222 = vmatmul.f32.gmra.mxu0 %v183
    %v223 = vpop.f32.mrf.mxu0
    %v224 = vadd.f32 %v159, %v223
    %225 = vmatmul.f32.gmra.mxu0 %v186
    %v226 = vpop.f32.mrf.mxu0
    %v227 = vadd.f32 %v162, %v226
    %228 = vmatmul.f32.gmra.mxu0 %v189
    %v229 = vpop.f32.mrf.mxu0
    %v230 = vadd.f32 %v165, %v229
    %231 = vmatmul.f32.gmra.mxu0 %v192
    %v232 = vpop.f32.mrf.mxu0
    %v233 = vadd.f32 %v168, %v232
    %234 = vmatmul.f32.gmra.mxu0 %v195
    %v235 = vpop.f32.mrf.mxu0
    %v236 = vadd.f32 %v171, %v235
    %237 = vmatmul.f32.gmra.mxu0 %v198
    %v238 = vpop.f32.mrf.mxu0
    %v239 = vadd.f32 %v174, %v238
    %240 = vmatmul.f32.gmra.mxu0 %v201
    %v241 = vpop.f32.mrf.mxu0
    %v242 = vadd.f32 %v177, %v241
    %243 = vdwg.mxu0
    %v245 = vperm.slane %v89, 0
    %v247 = vadd.f32 %v221, %v245
    %v248 = vadd.f32 %v224, %v245
    %v249 = vadd.f32 %v227, %v245
    %v250 = vadd.f32 %v230, %v245
    %v251 = vadd.f32 %v233, %v245
    %v252 = vadd.f32 %v236, %v245
    %v253 = vadd.f32 %v239, %v245
    %v254 = vadd.f32 %v242, %v245
    %v255 = vld [vmem:[%s2] sm:$0x3]
    %v257 = vperm.slane %v90, 0
    %v260 = vsel %vm72, %v255, 0
    %262 = vmatpush.msra.mxu0 0.0
    %263 = vmatpush.msra.mxu0 0.0
    %264 = vmatpush.msra.mxu0 0.0
    %265 = vmatpush.msra.mxu0 0.0
    %266 = vmatpush.msra.mxu0 0.0
    %267 = vmatpush.msra.mxu0 0.0
    %268 = vmatpush.msra.mxu0 0.0
    %269 = vmatpush.msra.mxu0 0.0
    %270 = vmatpush.msra.mxu0 0.0
    %271 = vmatpush.msra.mxu0 0.0
    %272 = vmatpush.msra.mxu0 0.0
    %273 = vmatpush.msra.mxu0 0.0
    %274 = vmatpush.msra.mxu0 %v94
    %275 = vmatpush.msra.mxu0 %v93
    %276 = vmatpush.msra.mxu0 %v92
    %277 = vmatpush.msra.mxu0 %v91
    %278 = vmatmul.f32.gmra.mxu0 %v260
    %v279 = vpop.f32.mrf.mxu0
    %v280 = vadd.f32 %v257, %v279
    %281 = vdwg.mxu0
    %v282 = vadd.f32 %v247, %v280
    %v283 = vxor.u32 %v282, 2147483648
    %v284 = vmul.f32 %v283, 1.442695
    %v285 = vpow.pop %v284
    %v286 = vadd.f32 %v285, 1.0
    %v287 = vrcp.pop %v286
    %v288 = vmul.f32 %v286, %v287
    %v289 = vsub.f32 1.0, %v288
    %v290 = vmul.f32 %v287, %v289
    %v291 = vadd.f32 %v287, %v290
    %vm292 = vweird.f32 %v286
    %vm293 = vweird.f32 %v287
    %vm294 = vmor %vm292, %vm293
    %v295 = vsel %vm294, %v287, %v291
    %v296 = vand.u32 2147483647, %v286
    %vm297 = vcmp.eq.f32.partialorder %v296, 8.507059e+37
    %v298 = vand.u32 %v286, 2147483648
    %v299 = vor.u32 1.1754944e-38, %v298
    %v300 = vsel %vm297, %v299, %v295
    %v301 = vmul.f32 1.0, %v300
    %303 = vrot.lane.b32.xlu0 %v280, 64
    %v304 = vpop.permute.xlu0 %303
    %v306 = vmul.f32 %v301, %v304
    %308 = vrot.lane.b32.xlu0 %v306, 64
    %v309 = vpop.permute.xlu0 %308
    %v311 = vadd.f32 %v247, %v309
    %v312 = vtanh.pop %v311
    %314 = vrot.lane.b32.xlu0 %v312, 64
    %v315 = vpop.permute.xlu0 %314
    %v317 = vsub.f32 %v255, %v315
    %319 = vrot.lane.b32.xlu0 %v317, 32
    %v320 = vpop.permute.xlu0 %319
    %v322 = vmul.f32 %v301, %v320
    %324 = vrot.lane.b32.xlu0 %v322, 32
    %v325 = vpop.permute.xlu0 %324
    %v327 = vadd.f32 %v312, %v325
    %329 = vrot.lane.b32.xlu0 %v327, 64
    %v330 = vpop.permute.xlu0 %329
    %vm332 = vcmask 254976
    %333 = vst.msk [vmem:[#allocation2] sm:$0x3] %vm332, %v330
    %v334 = vsel %vm72, %v330, 0
    %336 = vmatpush.msra.mxu0 0.0
    %337 = vmatpush.msra.mxu0 0.0
    %338 = vmatpush.msra.mxu0 0.0
    %339 = vmatpush.msra.mxu0 0.0
    %340 = vmatpush.msra.mxu0 0.0
    %341 = vmatpush.msra.mxu0 0.0
    %342 = vmatpush.msra.mxu0 0.0
    %343 = vmatpush.msra.mxu0 0.0
    %344 = vmatpush.msra.mxu0 0.0
    %345 = vmatpush.msra.mxu0 0.0
    %346 = vmatpush.msra.mxu0 0.0
    %347 = vmatpush.msra.mxu0 0.0
    %348 = vmatpush.msra.mxu0 %v94
    %349 = vmatpush.msra.mxu0 %v93
    %350 = vmatpush.msra.mxu0 %v92
    %351 = vmatpush.msra.mxu0 %v91
    %352 = vmatmul.f32.gmra.mxu0 %v334
    %v353 = vpop.f32.mrf.mxu0
    %v354 = vadd.f32 %v257, %v353
    %355 = vdwg.mxu0
    %v356 = vadd.f32 %v248, %v354
    %v357 = vxor.u32 %v356, 2147483648
    %v358 = vmul.f32 %v357, 1.442695
    %v359 = vpow.pop %v358
    %v360 = vadd.f32 %v359, 1.0
    %v361 = vrcp.pop %v360
    %v362 = vmul.f32 %v360, %v361
    %v363 = vsub.f32 1.0, %v362
    %v364 = vmul.f32 %v361, %v363
    %v365 = vadd.f32 %v361, %v364
    %vm366 = vweird.f32 %v360
    %vm367 = vweird.f32 %v361
    %vm368 = vmor %vm366, %vm367
    %v369 = vsel %vm368, %v361, %v365
    %v370 = vand.u32 2147483647, %v360
    %vm371 = vcmp.eq.f32.partialorder %v370, 8.507059e+37
    %v372 = vand.u32 %v360, 2147483648
    %v373 = vor.u32 1.1754944e-38, %v372
    %v374 = vsel %vm371, %v373, %v369
    %v375 = vmul.f32 1.0, %v374
    %377 = vrot.lane.b32.xlu0 %v354, 64
    %v378 = vpop.permute.xlu0 %377
    %v380 = vmul.f32 %v375, %v378
    %382 = vrot.lane.b32.xlu0 %v380, 64
    %v383 = vpop.permute.xlu0 %382
    %v385 = vadd.f32 %v248, %v383
    %v386 = vtanh.pop %v385
    %v387 = vsub.f32 %v327, %v386
    %389 = vrot.lane.b32.xlu0 %v387, 96
    %v390 = vpop.permute.xlu0 %389
    %v392 = vmul.f32 %v375, %v390
    %394 = vrot.lane.b32.xlu0 %v392, 32
    %v395 = vpop.permute.xlu0 %394
    %v397 = vadd.f32 %v386, %v395
    %399 = vrot.lane.b32.xlu0 %v397, 64
    %v400 = vpop.permute.xlu0 %399
    %402 = vst.msk [vmem:[#allocation2 + $0x8] sm:$0x3] %vm332, %v400
    %v403 = vsel %vm72, %v400, 0
    %405 = vmatpush.msra.mxu0 0.0
    %406 = vmatpush.msra.mxu0 0.0
    %407 = vmatpush.msra.mxu0 0.0
    %408 = vmatpush.msra.mxu0 0.0
    %409 = vmatpush.msra.mxu0 0.0
    %410 = vmatpush.msra.mxu0 0.0
    %411 = vmatpush.msra.mxu0 0.0
    %412 = vmatpush.msra.mxu0 0.0
    %413 = vmatpush.msra.mxu0 0.0
    %414 = vmatpush.msra.mxu0 0.0
    %415 = vmatpush.msra.mxu0 0.0
    %416 = vmatpush.msra.mxu0 0.0
    %417 = vmatpush.msra.mxu0 %v94
    %418 = vmatpush.msra.mxu0 %v93
    %419 = vmatpush.msra.mxu0 %v92
    %420 = vmatpush.msra.mxu0 %v91
    %421 = vmatmul.f32.gmra.mxu0 %v403
    %v422 = vpop.f32.mrf.mxu0
    %v423 = vadd.f32 %v257, %v422
    %424 = vdwg.mxu0
    %v425 = vadd.f32 %v249, %v423
    %v426 = vxor.u32 %v425, 2147483648
    %v427 = vmul.f32 %v426, 1.442695
    %v428 = vpow.pop %v427
    %v429 = vadd.f32 %v428, 1.0
    %v430 = vrcp.pop %v429
    %v431 = vmul.f32 %v429, %v430
    %v432 = vsub.f32 1.0, %v431
    %v433 = vmul.f32 %v430, %v432
    %v434 = vadd.f32 %v430, %v433
    %vm435 = vweird.f32 %v429
    %vm436 = vweird.f32 %v430
    %vm437 = vmor %vm435, %vm436
    %v438 = vsel %vm437, %v430, %v434
    %v439 = vand.u32 2147483647, %v429
    %vm440 = vcmp.eq.f32.partialorder %v439, 8.507059e+37
    %v441 = vand.u32 %v429, 2147483648
    %v442 = vor.u32 1.1754944e-38, %v441
    %v443 = vsel %vm440, %v442, %v438
    %v444 = vmul.f32 1.0, %v443
    %446 = vrot.lane.b32.xlu0 %v423, 64
    %v447 = vpop.permute.xlu0 %446
    %v449 = vmul.f32 %v444, %v447
    %451 = vrot.lane.b32.xlu0 %v449, 64
    %v452 = vpop.permute.xlu0 %451
    %v454 = vadd.f32 %v249, %v452
    %v455 = vtanh.pop %v454
    %v456 = vsub.f32 %v397, %v455
    %458 = vrot.lane.b32.xlu0 %v456, 96
    %v459 = vpop.permute.xlu0 %458
    %v461 = vmul.f32 %v444, %v459
    %463 = vrot.lane.b32.xlu0 %v461, 32
    %v464 = vpop.permute.xlu0 %463
    %v466 = vadd.f32 %v455, %v464
    %468 = vrot.lane.b32.xlu0 %v466, 64
    %v469 = vpop.permute.xlu0 %468
    %471 = vst.msk [vmem:[#allocation2 + $0x10] sm:$0x3] %vm332, %v469
    %v472 = vsel %vm72, %v469, 0
    %474 = vmatpush.msra.mxu0 0.0
    %475 = vmatpush.msra.mxu0 0.0
    %476 = vmatpush.msra.mxu0 0.0
    %477 = vmatpush.msra.mxu0 0.0
    %478 = vmatpush.msra.mxu0 0.0
    %479 = vmatpush.msra.mxu0 0.0
    %480 = vmatpush.msra.mxu0 0.0
    %481 = vmatpush.msra.mxu0 0.0
    %482 = vmatpush.msra.mxu0 0.0
    %483 = vmatpush.msra.mxu0 0.0
    %484 = vmatpush.msra.mxu0 0.0
    %485 = vmatpush.msra.mxu0 0.0
    %486 = vmatpush.msra.mxu0 %v94
    %487 = vmatpush.msra.mxu0 %v93
    %488 = vmatpush.msra.mxu0 %v92
    %489 = vmatpush.msra.mxu0 %v91
    %490 = vmatmul.f32.gmra.mxu0 %v472
    %v491 = vpop.f32.mrf.mxu0
    %v492 = vadd.f32 %v257, %v491
    %493 = vdwg.mxu0
    %v494 = vadd.f32 %v250, %v492
    %v495 = vxor.u32 %v494, 2147483648
    %v496 = vmul.f32 %v495, 1.442695
    %v497 = vpow.pop %v496
    %v498 = vadd.f32 %v497, 1.0
    %v499 = vrcp.pop %v498
    %v500 = vmul.f32 %v498, %v499
    %v501 = vsub.f32 1.0, %v500
    %v502 = vmul.f32 %v499, %v501
    %v503 = vadd.f32 %v499, %v502
    %vm504 = vweird.f32 %v498
    %vm505 = vweird.f32 %v499
    %vm506 = vmor %vm504, %vm505
    %v507 = vsel %vm506, %v499, %v503
    %v508 = vand.u32 2147483647, %v498
    %vm509 = vcmp.eq.f32.partialorder %v508, 8.507059e+37
    %v510 = vand.u32 %v498, 2147483648
    %v511 = vor.u32 1.1754944e-38, %v510
    %v512 = vsel %vm509, %v511, %v507
    %v513 = vmul.f32 1.0, %v512
    %515 = vrot.lane.b32.xlu0 %v492, 64
    %v516 = vpop.permute.xlu0 %515
    %v518 = vmul.f32 %v513, %v516
    %520 = vrot.lane.b32.xlu0 %v518, 64
    %v521 = vpop.permute.xlu0 %520
    %v523 = vadd.f32 %v250, %v521
    %v524 = vtanh.pop %v523
    %v525 = vsub.f32 %v466, %v524
    %527 = vrot.lane.b32.xlu0 %v525, 96
    %v528 = vpop.permute.xlu0 %527
    %v530 = vmul.f32 %v513, %v528
    %532 = vrot.lane.b32.xlu0 %v530, 32
    %v533 = vpop.permute.xlu0 %532
    %v535 = vadd.f32 %v524, %v533
    %537 = vrot.lane.b32.xlu0 %v535, 64
    %v538 = vpop.permute.xlu0 %537
    %540 = vst.msk [vmem:[#allocation2 + $0x18] sm:$0x3] %vm332, %v538
    %v541 = vsel %vm72, %v538, 0
    %543 = vmatpush.msra.mxu0 0.0
    %544 = vmatpush.msra.mxu0 0.0
    %545 = vmatpush.msra.mxu0 0.0
    %546 = vmatpush.msra.mxu0 0.0
    %547 = vmatpush.msra.mxu0 0.0
    %548 = vmatpush.msra.mxu0 0.0
    %549 = vmatpush.msra.mxu0 0.0
    %550 = vmatpush.msra.mxu0 0.0
    %551 = vmatpush.msra.mxu0 0.0
    %552 = vmatpush.msra.mxu0 0.0
    %553 = vmatpush.msra.mxu0 0.0
    %554 = vmatpush.msra.mxu0 0.0
    %555 = vmatpush.msra.mxu0 %v94
    %556 = vmatpush.msra.mxu0 %v93
    %557 = vmatpush.msra.mxu0 %v92
    %558 = vmatpush.msra.mxu0 %v91
    %559 = vmatmul.f32.gmra.mxu0 %v541
    %v560 = vpop.f32.mrf.mxu0
    %v561 = vadd.f32 %v257, %v560
    %562 = vdwg.mxu0
    %v563 = vadd.f32 %v251, %v561
    %v564 = vxor.u32 %v563, 2147483648
    %v565 = vmul.f32 %v564, 1.442695
    %v566 = vpow.pop %v565
    %v567 = vadd.f32 %v566, 1.0
    %v568 = vrcp.pop %v567
    %v569 = vmul.f32 %v567, %v568
    %v570 = vsub.f32 1.0, %v569
    %v571 = vmul.f32 %v568, %v570
    %v572 = vadd.f32 %v568, %v571
    %vm573 = vweird.f32 %v567
    %vm574 = vweird.f32 %v568
    %vm575 = vmor %vm573, %vm574
    %v576 = vsel %vm575, %v568, %v572
    %v577 = vand.u32 2147483647, %v567
    %vm578 = vcmp.eq.f32.partialorder %v577, 8.507059e+37
    %v579 = vand.u32 %v567, 2147483648
    %v580 = vor.u32 1.1754944e-38, %v579
    %v581 = vsel %vm578, %v580, %v576
    %v582 = vmul.f32 1.0, %v581
    %584 = vrot.lane.b32.xlu0 %v561, 64
    %v585 = vpop.permute.xlu0 %584
    %v587 = vmul.f32 %v582, %v585
    %589 = vrot.lane.b32.xlu0 %v587, 64
    %v590 = vpop.permute.xlu0 %589
    %v592 = vadd.f32 %v251, %v590
    %v593 = vtanh.pop %v592
    %v594 = vsub.f32 %v535, %v593
    %596 = vrot.lane.b32.xlu0 %v594, 96
    %v597 = vpop.permute.xlu0 %596
    %v599 = vmul.f32 %v582, %v597
    %601 = vrot.lane.b32.xlu0 %v599, 32
    %v602 = vpop.permute.xlu0 %601
    %v604 = vadd.f32 %v593, %v602
    %606 = vrot.lane.b32.xlu0 %v604, 64
    %v607 = vpop.permute.xlu0 %606
    %609 = vst.msk [vmem:[#allocation2 + $0x20] sm:$0x3] %vm332, %v607
    %v610 = vsel %vm72, %v607, 0
    %612 = vmatpush.msra.mxu0 0.0
    %613 = vmatpush.msra.mxu0 0.0
    %614 = vmatpush.msra.mxu0 0.0
    %615 = vmatpush.msra.mxu0 0.0
    %616 = vmatpush.msra.mxu0 0.0
    %617 = vmatpush.msra.mxu0 0.0
    %618 = vmatpush.msra.mxu0 0.0
    %619 = vmatpush.msra.mxu0 0.0
    %620 = vmatpush.msra.mxu0 0.0
    %621 = vmatpush.msra.mxu0 0.0
    %622 = vmatpush.msra.mxu0 0.0
    %623 = vmatpush.msra.mxu0 0.0
    %624 = vmatpush.msra.mxu0 %v94
    %625 = vmatpush.msra.mxu0 %v93
    %626 = vmatpush.msra.mxu0 %v92
    %627 = vmatpush.msra.mxu0 %v91
    %628 = vmatmul.f32.gmra.mxu0 %v610
    %v629 = vpop.f32.mrf.mxu0
    %v630 = vadd.f32 %v257, %v629
    %631 = vdwg.mxu0
    %v632 = vadd.f32 %v252, %v630
    %v633 = vxor.u32 %v632, 2147483648
    %v634 = vmul.f32 %v633, 1.442695
    %v635 = vpow.pop %v634
    %v636 = vadd.f32 %v635, 1.0
    %v637 = vrcp.pop %v636
    %v638 = vmul.f32 %v636, %v637
    %v639 = vsub.f32 1.0, %v638
    %v640 = vmul.f32 %v637, %v639
    %v641 = vadd.f32 %v637, %v640
    %vm642 = vweird.f32 %v636
    %vm643 = vweird.f32 %v637
    %vm644 = vmor %vm642, %vm643
    %v645 = vsel %vm644, %v637, %v641
    %v646 = vand.u32 2147483647, %v636
    %vm647 = vcmp.eq.f32.partialorder %v646, 8.507059e+37
    %v648 = vand.u32 %v636, 2147483648
    %v649 = vor.u32 1.1754944e-38, %v648
    %v650 = vsel %vm647, %v649, %v645
    %v651 = vmul.f32 1.0, %v650
    %653 = vrot.lane.b32.xlu0 %v630, 64
    %v654 = vpop.permute.xlu0 %653
    %v656 = vmul.f32 %v651, %v654
    %658 = vrot.lane.b32.xlu0 %v656, 64
    %v659 = vpop.permute.xlu0 %658
    %v661 = vadd.f32 %v252, %v659
    %v662 = vtanh.pop %v661
    %v663 = vsub.f32 %v604, %v662
    %665 = vrot.lane.b32.xlu0 %v663, 96
    %v666 = vpop.permute.xlu0 %665
    %v668 = vmul.f32 %v651, %v666
    %670 = vrot.lane.b32.xlu0 %v668, 32
    %v671 = vpop.permute.xlu0 %670
    %v673 = vadd.f32 %v662, %v671
    %675 = vrot.lane.b32.xlu0 %v673, 64
    %v676 = vpop.permute.xlu0 %675
    %678 = vst.msk [vmem:[#allocation2 + $0x28] sm:$0x3] %vm332, %v676
    %v679 = vsel %vm72, %v676, 0
    %681 = vmatpush.msra.mxu0 0.0
    %682 = vmatpush.msra.mxu0 0.0
    %683 = vmatpush.msra.mxu0 0.0
    %684 = vmatpush.msra.mxu0 0.0
    %685 = vmatpush.msra.mxu0 0.0
    %686 = vmatpush.msra.mxu0 0.0
    %687 = vmatpush.msra.mxu0 0.0
    %688 = vmatpush.msra.mxu0 0.0
    %689 = vmatpush.msra.mxu0 0.0
    %690 = vmatpush.msra.mxu0 0.0
    %691 = vmatpush.msra.mxu0 0.0
    %692 = vmatpush.msra.mxu0 0.0
    %693 = vmatpush.msra.mxu0 %v94
    %694 = vmatpush.msra.mxu0 %v93
    %695 = vmatpush.msra.mxu0 %v92
    %696 = vmatpush.msra.mxu0 %v91
    %697 = vmatmul.f32.gmra.mxu0 %v679
    %v698 = vpop.f32.mrf.mxu0
    %v699 = vadd.f32 %v257, %v698
    %700 = vdwg.mxu0
    %v701 = vadd.f32 %v253, %v699
    %v702 = vxor.u32 %v701, 2147483648
    %v703 = vmul.f32 %v702, 1.442695
    %v704 = vpow.pop %v703
    %v705 = vadd.f32 %v704, 1.0
    %v706 = vrcp.pop %v705
    %v707 = vmul.f32 %v705, %v706
    %v708 = vsub.f32 1.0, %v707
    %v709 = vmul.f32 %v706, %v708
    %v710 = vadd.f32 %v706, %v709
    %vm711 = vweird.f32 %v705
    %vm712 = vweird.f32 %v706
    %vm713 = vmor %vm711, %vm712
    %v714 = vsel %vm713, %v706, %v710
    %v715 = vand.u32 2147483647, %v705
    %vm716 = vcmp.eq.f32.partialorder %v715, 8.507059e+37
    %v717 = vand.u32 %v705, 2147483648
    %v718 = vor.u32 1.1754944e-38, %v717
    %v719 = vsel %vm716, %v718, %v714
    %v720 = vmul.f32 1.0, %v719
    %722 = vrot.lane.b32.xlu0 %v699, 64
    %v723 = vpop.permute.xlu0 %722
    %v725 = vmul.f32 %v720, %v723
    %727 = vrot.lane.b32.xlu0 %v725, 64
    %v728 = vpop.permute.xlu0 %727
    %v730 = vadd.f32 %v253, %v728
    %v731 = vtanh.pop %v730
    %v732 = vsub.f32 %v673, %v731
    %734 = vrot.lane.b32.xlu0 %v732, 96
    %v735 = vpop.permute.xlu0 %734
    %v737 = vmul.f32 %v720, %v735
    %739 = vrot.lane.b32.xlu0 %v737, 32
    %v740 = vpop.permute.xlu0 %739
    %v742 = vadd.f32 %v731, %v740
    %744 = vrot.lane.b32.xlu0 %v742, 64
    %v745 = vpop.permute.xlu0 %744
    %747 = vst.msk [vmem:[#allocation2 + $0x30] sm:$0x3] %vm332, %v745
    %v748 = vsel %vm72, %v745, 0
    %750 = vmatpush.msra.mxu0 0.0
    %751 = vmatpush.msra.mxu0 0.0
    %752 = vmatpush.msra.mxu0 0.0
    %753 = vmatpush.msra.mxu0 0.0
    %754 = vmatpush.msra.mxu0 0.0
    %755 = vmatpush.msra.mxu0 0.0
    %756 = vmatpush.msra.mxu0 0.0
    %757 = vmatpush.msra.mxu0 0.0
    %758 = vmatpush.msra.mxu0 0.0
    %759 = vmatpush.msra.mxu0 0.0
    %760 = vmatpush.msra.mxu0 0.0
    %761 = vmatpush.msra.mxu0 0.0
    %762 = vmatpush.msra.mxu0 %v94
    %763 = vmatpush.msra.mxu0 %v93
    %764 = vmatpush.msra.mxu0 %v92
    %765 = vmatpush.msra.mxu0 %v91
    %766 = vmatmul.f32.gmra.mxu0 %v748
    %v767 = vpop.f32.mrf.mxu0
    %v768 = vadd.f32 %v257, %v767
    %769 = vdwg.mxu0
    %v770 = vadd.f32 %v254, %v768
    %v771 = vxor.u32 %v770, 2147483648
    %v772 = vmul.f32 %v771, 1.442695
    %v773 = vpow.pop %v772
    %v774 = vadd.f32 %v773, 1.0
    %v775 = vrcp.pop %v774
    %v776 = vmul.f32 %v774, %v775
    %v777 = vsub.f32 1.0, %v776
    %v778 = vmul.f32 %v775, %v777
    %v779 = vadd.f32 %v775, %v778
    %vm780 = vweird.f32 %v774
    %vm781 = vweird.f32 %v775
    %vm782 = vmor %vm780, %vm781
    %v783 = vsel %vm782, %v775, %v779
    %v784 = vand.u32 2147483647, %v774
    %vm785 = vcmp.eq.f32.partialorder %v784, 8.507059e+37
    %v786 = vand.u32 %v774, 2147483648
    %v787 = vor.u32 1.1754944e-38, %v786
    %v788 = vsel %vm785, %v787, %v783
    %v789 = vmul.f32 1.0, %v788
    %791 = vrot.lane.b32.xlu0 %v768, 64
    %v792 = vpop.permute.xlu0 %791
    %v794 = vmul.f32 %v789, %v792
    %796 = vrot.lane.b32.xlu0 %v794, 64
    %v797 = vpop.permute.xlu0 %796
    %v799 = vadd.f32 %v254, %v797
    %v800 = vtanh.pop %v799
    %v801 = vsub.f32 %v742, %v800
    %803 = vrot.lane.b32.xlu0 %v801, 96
    %v804 = vpop.permute.xlu0 %803
    %v806 = vmul.f32 %v789, %v804
    %808 = vrot.lane.b32.xlu0 %v806, 32
    %v809 = vpop.permute.xlu0 %808
    %v811 = vadd.f32 %v800, %v809
    %813 = vrot.lane.b32.xlu0 %v811, 64
    %v814 = vpop.permute.xlu0 %813
    %816 = vst.msk [vmem:[#allocation2 + $0x38] sm:$0x3] %vm332, %v814
    %817 = vst.msk [vmem:[%s12] sm:$0x3] %vm332, %v814
    %s818 = scalar_lea.vmem [#allocation4], 1
    %v819 = vld [vmem:[%s818] sm:$0x1]
    %s820 = scalar_lea.vmem [#allocation6], 1
    %v821 = vld [vmem:[%s820] sm:$0x1]
    %s822 = scalar_lea.vmem %s6, 32
    %v823 = vld [vmem:[%s822] sm:$0xff]
    %v824 = vld [vmem:[%s822 + $0x8] sm:$0xff]
    %v825 = vld [vmem:[%s822 + $0x10] sm:$0xff]
    %v826 = vld [vmem:[%s822 + $0x18] sm:$0xff]
    %v827 = vld [vmem:[#allocation2] sm:$0xff]
    %v828 = vld [vmem:[#allocation2 + $0x8] sm:$0xff]
    %v829 = vld [vmem:[#allocation2 + $0x10] sm:$0xff]
    %v830 = vld [vmem:[#allocation2 + $0x18] sm:$0xff]
    %v831 = vld [vmem:[#allocation2 + $0x20] sm:$0xff]
    %v832 = vld [vmem:[#allocation2 + $0x28] sm:$0xff]
    %v833 = vld [vmem:[#allocation2 + $0x30] sm:$0xff]
    %v834 = vld [vmem:[#allocation2 + $0x38] sm:$0xff]
    %v835 = vld [vmem:[%s5] sm:$0xff]
    %v836 = vld [vmem:[%s5 + $0x8] sm:$0xff]
    %v837 = vld [vmem:[%s5 + $0x10] sm:$0xff]
    %v838 = vld [vmem:[%s5 + $0x18] sm:$0xff]
    %v840 = vperm.slane %v819, 0
    %v843 = vsel %vm72, %v827, 0
    %v846 = vsel %vm72, %v828, 0
    %v849 = vsel %vm72, %v829, 0
    %v852 = vsel %vm72, %v830, 0
    %v855 = vsel %vm72, %v831, 0
    %v858 = vsel %vm72, %v832, 0
    %v861 = vsel %vm72, %v833, 0
    %v864 = vsel %vm72, %v834, 0
    %866 = vmatpush.msra.mxu0 0.0
    %867 = vmatpush.msra.mxu0 0.0
    %868 = vmatpush.msra.mxu0 0.0
    %869 = vmatpush.msra.mxu0 0.0
    %870 = vmatpush.msra.mxu0 0.0
    %871 = vmatpush.msra.mxu0 0.0
    %872 = vmatpush.msra.mxu0 0.0
    %873 = vmatpush.msra.mxu0 0.0
    %874 = vmatpush.msra.mxu0 0.0
    %875 = vmatpush.msra.mxu0 0.0
    %876 = vmatpush.msra.mxu0 0.0
    %877 = vmatpush.msra.mxu0 0.0
    %878 = vmatpush.msra.mxu0 %v838
    %879 = vmatpush.msra.mxu0 %v837
    %880 = vmatpush.msra.mxu0 %v836
    %881 = vmatpush.msra.mxu0 %v835
    %882 = vmatmul.f32.gmra.mxu0 %v843
    %v883 = vpop.f32.mrf.mxu0
    %v884 = vadd.f32 %v840, %v883
    %885 = vmatmul.f32.gmra.mxu0 %v846
    %v886 = vpop.f32.mrf.mxu0
    %v887 = vadd.f32 %v840, %v886
    %888 = vmatmul.f32.gmra.mxu0 %v849
    %v889 = vpop.f32.mrf.mxu0
    %v890 = vadd.f32 %v840, %v889
    %891 = vmatmul.f32.gmra.mxu0 %v852
    %v892 = vpop.f32.mrf.mxu0
    %v893 = vadd.f32 %v840, %v892
    %894 = vmatmul.f32.gmra.mxu0 %v855
    %v895 = vpop.f32.mrf.mxu0
    %v896 = vadd.f32 %v840, %v895
    %897 = vmatmul.f32.gmra.mxu0 %v858
    %v898 = vpop.f32.mrf.mxu0
    %v899 = vadd.f32 %v840, %v898
    %900 = vmatmul.f32.gmra.mxu0 %v861
    %v901 = vpop.f32.mrf.mxu0
    %v902 = vadd.f32 %v840, %v901
    %903 = vmatmul.f32.gmra.mxu0 %v864
    %v904 = vpop.f32.mrf.mxu0
    %v905 = vadd.f32 %v840, %v904
    %906 = vdwg.mxu0
    %s907 = scalar_lea.vmem %s2, 2
    %v908 = vld [vmem:[%s907] sm:$0x3]
    %v910 = vperm.slane %v821, 0
    %v913 = vsel %vm72, %v908, 0
    %915 = vmatpush.msra.mxu0 0.0
    %916 = vmatpush.msra.mxu0 0.0
    %917 = vmatpush.msra.mxu0 0.0
    %918 = vmatpush.msra.mxu0 0.0
    %919 = vmatpush.msra.mxu0 0.0
    %920 = vmatpush.msra.mxu0 0.0
    %921 = vmatpush.msra.mxu0 0.0
    %922 = vmatpush.msra.mxu0 0.0
    %923 = vmatpush.msra.mxu0 0.0
    %924 = vmatpush.msra.mxu0 0.0
    %925 = vmatpush.msra.mxu0 0.0
    %926 = vmatpush.msra.mxu0 0.0
    %927 = vmatpush.msra.mxu0 %v826
    %928 = vmatpush.msra.mxu0 %v825
    %929 = vmatpush.msra.mxu0 %v824
    %930 = vmatpush.msra.mxu0 %v823
    %931 = vmatmul.f32.gmra.mxu0 %v913
    %v932 = vpop.f32.mrf.mxu0
    %v933 = vadd.f32 %v910, %v932
    %934 = vdwg.mxu0
    %v935 = vadd.f32 %v884, %v933
    %v936 = vxor.u32 %v935, 2147483648
    %v937 = vmul.f32 %v936, 1.442695
    %v938 = vpow.pop %v937
    %v939 = vadd.f32 %v938, 1.0
    %v940 = vrcp.pop %v939
    %v941 = vmul.f32 %v939, %v940
    %v942 = vsub.f32 1.0, %v941
    %v943 = vmul.f32 %v940, %v942
    %v944 = vadd.f32 %v940, %v943
    %vm945 = vweird.f32 %v939
    %vm946 = vweird.f32 %v940
    %vm947 = vmor %vm945, %vm946
    %v948 = vsel %vm947, %v940, %v944
    %v949 = vand.u32 2147483647, %v939
    %vm950 = vcmp.eq.f32.partialorder %v949, 8.507059e+37
    %v951 = vand.u32 %v939, 2147483648
    %v952 = vor.u32 1.1754944e-38, %v951
    %v953 = vsel %vm950, %v952, %v948
    %v954 = vmul.f32 1.0, %v953
    %956 = vrot.lane.b32.xlu0 %v933, 64
    %v957 = vpop.permute.xlu0 %956
    %v959 = vmul.f32 %v954, %v957
    %961 = vrot.lane.b32.xlu0 %v959, 64
    %v962 = vpop.permute.xlu0 %961
    %v964 = vadd.f32 %v884, %v962
    %v965 = vtanh.pop %v964
    %967 = vrot.lane.b32.xlu0 %v965, 64
    %v968 = vpop.permute.xlu0 %967
    %v970 = vsub.f32 %v908, %v968
    %972 = vrot.lane.b32.xlu0 %v970, 32
    %v973 = vpop.permute.xlu0 %972
    %v975 = vmul.f32 %v954, %v973
    %977 = vrot.lane.b32.xlu0 %v975, 32
    %v978 = vpop.permute.xlu0 %977
    %v980 = vadd.f32 %v965, %v978
    %982 = vrot.lane.b32.xlu0 %v980, 64
    %v983 = vpop.permute.xlu0 %982
    %985 = vst.msk [vmem:[#allocation3] sm:$0x3] %vm332, %v983
    %v986 = vsel %vm72, %v983, 0
    %988 = vmatpush.msra.mxu0 0.0
    %989 = vmatpush.msra.mxu0 0.0
    %990 = vmatpush.msra.mxu0 0.0
    %991 = vmatpush.msra.mxu0 0.0
    %992 = vmatpush.msra.mxu0 0.0
    %993 = vmatpush.msra.mxu0 0.0
    %994 = vmatpush.msra.mxu0 0.0
    %995 = vmatpush.msra.mxu0 0.0
    %996 = vmatpush.msra.mxu0 0.0
    %997 = vmatpush.msra.mxu0 0.0
    %998 = vmatpush.msra.mxu0 0.0
    %999 = vmatpush.msra.mxu0 0.0
    %1000 = vmatpush.msra.mxu0 %v826
    %1001 = vmatpush.msra.mxu0 %v825
    %1002 = vmatpush.msra.mxu0 %v824
    %1003 = vmatpush.msra.mxu0 %v823
    %1004 = vmatmul.f32.gmra.mxu0 %v986
    %v1005 = vpop.f32.mrf.mxu0
    %v1006 = vadd.f32 %v910, %v1005
    %1007 = vdwg.mxu0
    %v1008 = vadd.f32 %v887, %v1006
    %v1009 = vxor.u32 %v1008, 2147483648
    %v1010 = vmul.f32 %v1009, 1.442695
    %v1011 = vpow.pop %v1010
    %v1012 = vadd.f32 %v1011, 1.0
    %v1013 = vrcp.pop %v1012
    %v1014 = vmul.f32 %v1012, %v1013
    %v1015 = vsub.f32 1.0, %v1014
    %v1016 = vmul.f32 %v1013, %v1015
    %v1017 = vadd.f32 %v1013, %v1016
    %vm1018 = vweird.f32 %v1012
    %vm1019 = vweird.f32 %v1013
    %vm1020 = vmor %vm1018, %vm1019
    %v1021 = vsel %vm1020, %v1013, %v1017
    %v1022 = vand.u32 2147483647, %v1012
    %vm1023 = vcmp.eq.f32.partialorder %v1022, 8.507059e+37
    %v1024 = vand.u32 %v1012, 2147483648
    %v1025 = vor.u32 1.1754944e-38, %v1024
    %v1026 = vsel %vm1023, %v1025, %v1021
    %v1027 = vmul.f32 1.0, %v1026
    %1029 = vrot.lane.b32.xlu0 %v1006, 64
    %v1030 = vpop.permute.xlu0 %1029
    %v1032 = vmul.f32 %v1027, %v1030
    %1034 = vrot.lane.b32.xlu0 %v1032, 64
    %v1035 = vpop.permute.xlu0 %1034
    %v1037 = vadd.f32 %v887, %v1035
    %v1038 = vtanh.pop %v1037
    %v1039 = vsub.f32 %v980, %v1038
    %1041 = vrot.lane.b32.xlu0 %v1039, 96
    %v1042 = vpop.permute.xlu0 %1041
    %v1044 = vmul.f32 %v1027, %v1042
    %1046 = vrot.lane.b32.xlu0 %v1044, 32
    %v1047 = vpop.permute.xlu0 %1046
    %v1049 = vadd.f32 %v1038, %v1047
    %1051 = vrot.lane.b32.xlu0 %v1049, 64
    %v1052 = vpop.permute.xlu0 %1051
    %1054 = vst.msk [vmem:[#allocation3 + $0x8] sm:$0x3] %vm332, %v1052
    %v1055 = vsel %vm72, %v1052, 0
    %1057 = vmatpush.msra.mxu0 0.0
    %1058 = vmatpush.msra.mxu0 0.0
    %1059 = vmatpush.msra.mxu0 0.0
    %1060 = vmatpush.msra.mxu0 0.0
    %1061 = vmatpush.msra.mxu0 0.0
    %1062 = vmatpush.msra.mxu0 0.0
    %1063 = vmatpush.msra.mxu0 0.0
    %1064 = vmatpush.msra.mxu0 0.0
    %1065 = vmatpush.msra.mxu0 0.0
    %1066 = vmatpush.msra.mxu0 0.0
    %1067 = vmatpush.msra.mxu0 0.0
    %1068 = vmatpush.msra.mxu0 0.0
    %1069 = vmatpush.msra.mxu0 %v826
    %1070 = vmatpush.msra.mxu0 %v825
    %1071 = vmatpush.msra.mxu0 %v824
    %1072 = vmatpush.msra.mxu0 %v823
    %1073 = vmatmul.f32.gmra.mxu0 %v1055
    %v1074 = vpop.f32.mrf.mxu0
    %v1075 = vadd.f32 %v910, %v1074
    %1076 = vdwg.mxu0
    %v1077 = vadd.f32 %v890, %v1075
    %v1078 = vxor.u32 %v1077, 2147483648
    %v1079 = vmul.f32 %v1078, 1.442695
    %v1080 = vpow.pop %v1079
    %v1081 = vadd.f32 %v1080, 1.0
    %v1082 = vrcp.pop %v1081
    %v1083 = vmul.f32 %v1081, %v1082
    %v1084 = vsub.f32 1.0, %v1083
    %v1085 = vmul.f32 %v1082, %v1084
    %v1086 = vadd.f32 %v1082, %v1085
    %vm1087 = vweird.f32 %v1081
    %vm1088 = vweird.f32 %v1082
    %vm1089 = vmor %vm1087, %vm1088
    %v1090 = vsel %vm1089, %v1082, %v1086
    %v1091 = vand.u32 2147483647, %v1081
    %vm1092 = vcmp.eq.f32.partialorder %v1091, 8.507059e+37
    %v1093 = vand.u32 %v1081, 2147483648
    %v1094 = vor.u32 1.1754944e-38, %v1093
    %v1095 = vsel %vm1092, %v1094, %v1090
    %v1096 = vmul.f32 1.0, %v1095
    %1098 = vrot.lane.b32.xlu0 %v1075, 64
    %v1099 = vpop.permute.xlu0 %1098
    %v1101 = vmul.f32 %v1096, %v1099
    %1103 = vrot.lane.b32.xlu0 %v1101, 64
    %v1104 = vpop.permute.xlu0 %1103
    %v1106 = vadd.f32 %v890, %v1104
    %v1107 = vtanh.pop %v1106
    %v1108 = vsub.f32 %v1049, %v1107
    %1110 = vrot.lane.b32.xlu0 %v1108, 96
    %v1111 = vpop.permute.xlu0 %1110
    %v1113 = vmul.f32 %v1096, %v1111
    %1115 = vrot.lane.b32.xlu0 %v1113, 32
    %v1116 = vpop.permute.xlu0 %1115
    %v1118 = vadd.f32 %v1107, %v1116
    %1120 = vrot.lane.b32.xlu0 %v1118, 64
    %v1121 = vpop.permute.xlu0 %1120
    %1123 = vst.msk [vmem:[#allocation3 + $0x10] sm:$0x3] %vm332, %v1121
    %v1124 = vsel %vm72, %v1121, 0
    %1126 = vmatpush.msra.mxu0 0.0
    %1127 = vmatpush.msra.mxu0 0.0
    %1128 = vmatpush.msra.mxu0 0.0
    %1129 = vmatpush.msra.mxu0 0.0
    %1130 = vmatpush.msra.mxu0 0.0
    %1131 = vmatpush.msra.mxu0 0.0
    %1132 = vmatpush.msra.mxu0 0.0
    %1133 = vmatpush.msra.mxu0 0.0
    %1134 = vmatpush.msra.mxu0 0.0
    %1135 = vmatpush.msra.mxu0 0.0
    %1136 = vmatpush.msra.mxu0 0.0
    %1137 = vmatpush.msra.mxu0 0.0
    %1138 = vmatpush.msra.mxu0 %v826
    %1139 = vmatpush.msra.mxu0 %v825
    %1140 = vmatpush.msra.mxu0 %v824
    %1141 = vmatpush.msra.mxu0 %v823
    %1142 = vmatmul.f32.gmra.mxu0 %v1124
    %v1143 = vpop.f32.mrf.mxu0
    %v1144 = vadd.f32 %v910, %v1143
    %1145 = vdwg.mxu0
    %v1146 = vadd.f32 %v893, %v1144
    %v1147 = vxor.u32 %v1146, 2147483648
    %v1148 = vmul.f32 %v1147, 1.442695
    %v1149 = vpow.pop %v1148
    %v1150 = vadd.f32 %v1149, 1.0
    %v1151 = vrcp.pop %v1150
    %v1152 = vmul.f32 %v1150, %v1151
    %v1153 = vsub.f32 1.0, %v1152
    %v1154 = vmul.f32 %v1151, %v1153
    %v1155 = vadd.f32 %v1151, %v1154
    %vm1156 = vweird.f32 %v1150
    %vm1157 = vweird.f32 %v1151
    %vm1158 = vmor %vm1156, %vm1157
    %v1159 = vsel %vm1158, %v1151, %v1155
    %v1160 = vand.u32 2147483647, %v1150
    %vm1161 = vcmp.eq.f32.partialorder %v1160, 8.507059e+37
    %v1162 = vand.u32 %v1150, 2147483648
    %v1163 = vor.u32 1.1754944e-38, %v1162
    %v1164 = vsel %vm1161, %v1163, %v1159
    %v1165 = vmul.f32 1.0, %v1164
    %1167 = vrot.lane.b32.xlu0 %v1144, 64
    %v1168 = vpop.permute.xlu0 %1167
    %v1170 = vmul.f32 %v1165, %v1168
    %1172 = vrot.lane.b32.xlu0 %v1170, 64
    %v1173 = vpop.permute.xlu0 %1172
    %v1175 = vadd.f32 %v893, %v1173
    %v1176 = vtanh.pop %v1175
    %v1177 = vsub.f32 %v1118, %v1176
    %1179 = vrot.lane.b32.xlu0 %v1177, 96
    %v1180 = vpop.permute.xlu0 %1179
    %v1182 = vmul.f32 %v1165, %v1180
    %1184 = vrot.lane.b32.xlu0 %v1182, 32
    %v1185 = vpop.permute.xlu0 %1184
    %v1187 = vadd.f32 %v1176, %v1185
    %1189 = vrot.lane.b32.xlu0 %v1187, 64
    %v1190 = vpop.permute.xlu0 %1189
    %1192 = vst.msk [vmem:[#allocation3 + $0x18] sm:$0x3] %vm332, %v1190
    %v1193 = vsel %vm72, %v1190, 0
    %1195 = vmatpush.msra.mxu0 0.0
    %1196 = vmatpush.msra.mxu0 0.0
    %1197 = vmatpush.msra.mxu0 0.0
    %1198 = vmatpush.msra.mxu0 0.0
    %1199 = vmatpush.msra.mxu0 0.0
    %1200 = vmatpush.msra.mxu0 0.0
    %1201 = vmatpush.msra.mxu0 0.0
    %1202 = vmatpush.msra.mxu0 0.0
    %1203 = vmatpush.msra.mxu0 0.0
    %1204 = vmatpush.msra.mxu0 0.0
    %1205 = vmatpush.msra.mxu0 0.0
    %1206 = vmatpush.msra.mxu0 0.0
    %1207 = vmatpush.msra.mxu0 %v826
    %1208 = vmatpush.msra.mxu0 %v825
    %1209 = vmatpush.msra.mxu0 %v824
    %1210 = vmatpush.msra.mxu0 %v823
    %1211 = vmatmul.f32.gmra.mxu0 %v1193
    %v1212 = vpop.f32.mrf.mxu0
    %v1213 = vadd.f32 %v910, %v1212
    %1214 = vdwg.mxu0
    %v1215 = vadd.f32 %v896, %v1213
    %v1216 = vxor.u32 %v1215, 2147483648
    %v1217 = vmul.f32 %v1216, 1.442695
    %v1218 = vpow.pop %v1217
    %v1219 = vadd.f32 %v1218, 1.0
    %v1220 = vrcp.pop %v1219
    %v1221 = vmul.f32 %v1219, %v1220
    %v1222 = vsub.f32 1.0, %v1221
    %v1223 = vmul.f32 %v1220, %v1222
    %v1224 = vadd.f32 %v1220, %v1223
    %vm1225 = vweird.f32 %v1219
    %vm1226 = vweird.f32 %v1220
    %vm1227 = vmor %vm1225, %vm1226
    %v1228 = vsel %vm1227, %v1220, %v1224
    %v1229 = vand.u32 2147483647, %v1219
    %vm1230 = vcmp.eq.f32.partialorder %v1229, 8.507059e+37
    %v1231 = vand.u32 %v1219, 2147483648
    %v1232 = vor.u32 1.1754944e-38, %v1231
    %v1233 = vsel %vm1230, %v1232, %v1228
    %v1234 = vmul.f32 1.0, %v1233
    %1236 = vrot.lane.b32.xlu0 %v1213, 64
    %v1237 = vpop.permute.xlu0 %1236
    %v1239 = vmul.f32 %v1234, %v1237
    %1241 = vrot.lane.b32.xlu0 %v1239, 64
    %v1242 = vpop.permute.xlu0 %1241
    %v1244 = vadd.f32 %v896, %v1242
    %v1245 = vtanh.pop %v1244
    %v1246 = vsub.f32 %v1187, %v1245
    %1248 = vrot.lane.b32.xlu0 %v1246, 96
    %v1249 = vpop.permute.xlu0 %1248
    %v1251 = vmul.f32 %v1234, %v1249
    %1253 = vrot.lane.b32.xlu0 %v1251, 32
    %v1254 = vpop.permute.xlu0 %1253
    %v1256 = vadd.f32 %v1245, %v1254
    %1258 = vrot.lane.b32.xlu0 %v1256, 64
    %v1259 = vpop.permute.xlu0 %1258
    %1261 = vst.msk [vmem:[#allocation3 + $0x20] sm:$0x3] %vm332, %v1259
    %v1262 = vsel %vm72, %v1259, 0
    %1264 = vmatpush.msra.mxu0 0.0
    %1265 = vmatpush.msra.mxu0 0.0
    %1266 = vmatpush.msra.mxu0 0.0
    %1267 = vmatpush.msra.mxu0 0.0
    %1268 = vmatpush.msra.mxu0 0.0
    %1269 = vmatpush.msra.mxu0 0.0
    %1270 = vmatpush.msra.mxu0 0.0
    %1271 = vmatpush.msra.mxu0 0.0
    %1272 = vmatpush.msra.mxu0 0.0
    %1273 = vmatpush.msra.mxu0 0.0
    %1274 = vmatpush.msra.mxu0 0.0
    %1275 = vmatpush.msra.mxu0 0.0
    %1276 = vmatpush.msra.mxu0 %v826
    %1277 = vmatpush.msra.mxu0 %v825
    %1278 = vmatpush.msra.mxu0 %v824
    %1279 = vmatpush.msra.mxu0 %v823
    %1280 = vmatmul.f32.gmra.mxu0 %v1262
    %v1281 = vpop.f32.mrf.mxu0
    %v1282 = vadd.f32 %v910, %v1281
    %1283 = vdwg.mxu0
    %v1284 = vadd.f32 %v899, %v1282
    %v1285 = vxor.u32 %v1284, 2147483648
    %v1286 = vmul.f32 %v1285, 1.442695
    %v1287 = vpow.pop %v1286
    %v1288 = vadd.f32 %v1287, 1.0
    %v1289 = vrcp.pop %v1288
    %v1290 = vmul.f32 %v1288, %v1289
    %v1291 = vsub.f32 1.0, %v1290
    %v1292 = vmul.f32 %v1289, %v1291
    %v1293 = vadd.f32 %v1289, %v1292
    %vm1294 = vweird.f32 %v1288
    %vm1295 = vweird.f32 %v1289
    %vm1296 = vmor %vm1294, %vm1295
    %v1297 = vsel %vm1296, %v1289, %v1293
    %v1298 = vand.u32 2147483647, %v1288
    %vm1299 = vcmp.eq.f32.partialorder %v1298, 8.507059e+37
    %v1300 = vand.u32 %v1288, 2147483648
    %v1301 = vor.u32 1.1754944e-38, %v1300
    %v1302 = vsel %vm1299, %v1301, %v1297
    %v1303 = vmul.f32 1.0, %v1302
    %1305 = vrot.lane.b32.xlu0 %v1282, 64
    %v1306 = vpop.permute.xlu0 %1305
    %v1308 = vmul.f32 %v1303, %v1306
    %1310 = vrot.lane.b32.xlu0 %v1308, 64
    %v1311 = vpop.permute.xlu0 %1310
    %v1313 = vadd.f32 %v899, %v1311
    %v1314 = vtanh.pop %v1313
    %v1315 = vsub.f32 %v1256, %v1314
    %1317 = vrot.lane.b32.xlu0 %v1315, 96
    %v1318 = vpop.permute.xlu0 %1317
    %v1320 = vmul.f32 %v1303, %v1318
    %1322 = vrot.lane.b32.xlu0 %v1320, 32
    %v1323 = vpop.permute.xlu0 %1322
    %v1325 = vadd.f32 %v1314, %v1323
    %1327 = vrot.lane.b32.xlu0 %v1325, 64
    %v1328 = vpop.permute.xlu0 %1327
    %1330 = vst.msk [vmem:[#allocation3 + $0x28] sm:$0x3] %vm332, %v1328
    %v1331 = vsel %vm72, %v1328, 0
    %1333 = vmatpush.msra.mxu0 0.0
    %1334 = vmatpush.msra.mxu0 0.0
    %1335 = vmatpush.msra.mxu0 0.0
    %1336 = vmatpush.msra.mxu0 0.0
    %1337 = vmatpush.msra.mxu0 0.0
    %1338 = vmatpush.msra.mxu0 0.0
    %1339 = vmatpush.msra.mxu0 0.0
    %1340 = vmatpush.msra.mxu0 0.0
    %1341 = vmatpush.msra.mxu0 0.0
    %1342 = vmatpush.msra.mxu0 0.0
    %1343 = vmatpush.msra.mxu0 0.0
    %1344 = vmatpush.msra.mxu0 0.0
    %1345 = vmatpush.msra.mxu0 %v826
    %1346 = vmatpush.msra.mxu0 %v825
    %1347 = vmatpush.msra.mxu0 %v824
    %1348 = vmatpush.msra.mxu0 %v823
    %1349 = vmatmul.f32.gmra.mxu0 %v1331
    %v1350 = vpop.f32.mrf.mxu0
    %v1351 = vadd.f32 %v910, %v1350
    %1352 = vdwg.mxu0
    %v1353 = vadd.f32 %v902, %v1351
    %v1354 = vxor.u32 %v1353, 2147483648
    %v1355 = vmul.f32 %v1354, 1.442695
    %v1356 = vpow.pop %v1355
    %v1357 = vadd.f32 %v1356, 1.0
    %v1358 = vrcp.pop %v1357
    %v1359 = vmul.f32 %v1357, %v1358
    %v1360 = vsub.f32 1.0, %v1359
    %v1361 = vmul.f32 %v1358, %v1360
    %v1362 = vadd.f32 %v1358, %v1361
    %vm1363 = vweird.f32 %v1357
    %vm1364 = vweird.f32 %v1358
    %vm1365 = vmor %vm1363, %vm1364
    %v1366 = vsel %vm1365, %v1358, %v1362
    %v1367 = vand.u32 2147483647, %v1357
    %vm1368 = vcmp.eq.f32.partialorder %v1367, 8.507059e+37
    %v1369 = vand.u32 %v1357, 2147483648
    %v1370 = vor.u32 1.1754944e-38, %v1369
    %v1371 = vsel %vm1368, %v1370, %v1366
    %v1372 = vmul.f32 1.0, %v1371
    %1374 = vrot.lane.b32.xlu0 %v1351, 64
    %v1375 = vpop.permute.xlu0 %1374
    %v1377 = vmul.f32 %v1372, %v1375
    %1379 = vrot.lane.b32.xlu0 %v1377, 64
    %v1380 = vpop.permute.xlu0 %1379
    %v1382 = vadd.f32 %v902, %v1380
    %v1383 = vtanh.pop %v1382
    %v1384 = vsub.f32 %v1325, %v1383
    %1386 = vrot.lane.b32.xlu0 %v1384, 96
    %v1387 = vpop.permute.xlu0 %1386
    %v1389 = vmul.f32 %v1372, %v1387
    %1391 = vrot.lane.b32.xlu0 %v1389, 32
    %v1392 = vpop.permute.xlu0 %1391
    %v1394 = vadd.f32 %v1383, %v1392
    %1396 = vrot.lane.b32.xlu0 %v1394, 64
    %v1397 = vpop.permute.xlu0 %1396
    %1399 = vst.msk [vmem:[#allocation3 + $0x30] sm:$0x3] %vm332, %v1397
    %v1400 = vsel %vm72, %v1397, 0
    %1402 = vmatpush.msra.mxu0 0.0
    %1403 = vmatpush.msra.mxu0 0.0
    %1404 = vmatpush.msra.mxu0 0.0
    %1405 = vmatpush.msra.mxu0 0.0
    %1406 = vmatpush.msra.mxu0 0.0
    %1407 = vmatpush.msra.mxu0 0.0
    %1408 = vmatpush.msra.mxu0 0.0
    %1409 = vmatpush.msra.mxu0 0.0
    %1410 = vmatpush.msra.mxu0 0.0
    %1411 = vmatpush.msra.mxu0 0.0
    %1412 = vmatpush.msra.mxu0 0.0
    %1413 = vmatpush.msra.mxu0 0.0
    %1414 = vmatpush.msra.mxu0 %v826
    %1415 = vmatpush.msra.mxu0 %v825
    %1416 = vmatpush.msra.mxu0 %v824
    %1417 = vmatpush.msra.mxu0 %v823
    %1418 = vmatmul.f32.gmra.mxu0 %v1400
    %v1419 = vpop.f32.mrf.mxu0
    %v1420 = vadd.f32 %v910, %v1419
    %1421 = vdwg.mxu0
    %v1422 = vadd.f32 %v905, %v1420
    %v1423 = vxor.u32 %v1422, 2147483648
    %v1424 = vmul.f32 %v1423, 1.442695
    %v1425 = vpow.pop %v1424
    %v1426 = vadd.f32 %v1425, 1.0
    %v1427 = vrcp.pop %v1426
    %v1428 = vmul.f32 %v1426, %v1427
    %v1429 = vsub.f32 1.0, %v1428
    %v1430 = vmul.f32 %v1427, %v1429
    %v1431 = vadd.f32 %v1427, %v1430
    %vm1432 = vweird.f32 %v1426
    %vm1433 = vweird.f32 %v1427
    %vm1434 = vmor %vm1432, %vm1433
    %v1435 = vsel %vm1434, %v1427, %v1431
    %v1436 = vand.u32 2147483647, %v1426
    %vm1437 = vcmp.eq.f32.partialorder %v1436, 8.507059e+37
    %v1438 = vand.u32 %v1426, 2147483648
    %v1439 = vor.u32 1.1754944e-38, %v1438
    %v1440 = vsel %vm1437, %v1439, %v1435
    %v1441 = vmul.f32 1.0, %v1440
    %1443 = vrot.lane.b32.xlu0 %v1420, 64
    %v1444 = vpop.permute.xlu0 %1443
    %v1446 = vmul.f32 %v1441, %v1444
    %1448 = vrot.lane.b32.xlu0 %v1446, 64
    %v1449 = vpop.permute.xlu0 %1448
    %v1451 = vadd.f32 %v905, %v1449
    %v1452 = vtanh.pop %v1451
    %v1453 = vsub.f32 %v1394, %v1452
    %1455 = vrot.lane.b32.xlu0 %v1453, 96
    %v1456 = vpop.permute.xlu0 %1455
    %v1458 = vmul.f32 %v1441, %v1456
    %1460 = vrot.lane.b32.xlu0 %v1458, 32
    %v1461 = vpop.permute.xlu0 %1460
    %v1463 = vadd.f32 %v1452, %v1461
    %1465 = vrot.lane.b32.xlu0 %v1463, 64
    %v1466 = vpop.permute.xlu0 %1465
    %1468 = vst.msk [vmem:[#allocation3 + $0x38] sm:$0x3] %vm332, %v1466
    %s1469 = scalar_lea.vmem %s12, 2
    %1470 = vst.msk [vmem:[%s1469] sm:$0x3] %vm332, %v1466
    %s1471 = scalar_lea.vmem [#allocation4], 2
    %v1472 = vld [vmem:[%s1471] sm:$0x1]
    %s1473 = scalar_lea.vmem [#allocation6], 2
    %v1474 = vld [vmem:[%s1473] sm:$0x1]
    %s1475 = scalar_lea.vmem %s6, 64
    %v1476 = vld [vmem:[%s1475] sm:$0xff]
    %v1477 = vld [vmem:[%s1475 + $0x8] sm:$0xff]
    %v1478 = vld [vmem:[%s1475 + $0x10] sm:$0xff]
    %v1479 = vld [vmem:[%s1475 + $0x18] sm:$0xff]
    %v1480 = vld [vmem:[#allocation3] sm:$0xff]
    %v1481 = vld [vmem:[#allocation3 + $0x8] sm:$0xff]
    %v1482 = vld [vmem:[#allocation3 + $0x10] sm:$0xff]
    %v1483 = vld [vmem:[#allocation3 + $0x18] sm:$0xff]
    %v1484 = vld [vmem:[#allocation3 + $0x20] sm:$0xff]
    %v1485 = vld [vmem:[#allocation3 + $0x28] sm:$0xff]
    %v1486 = vld [vmem:[#allocation3 + $0x30] sm:$0xff]
    %v1487 = vld [vmem:[#allocation3 + $0x38] sm:$0xff]
    %s1488 = scalar_lea.vmem %s5, 32
    %v1489 = vld [vmem:[%s1488] sm:$0xff]
    %v1490 = vld [vmem:[%s1488 + $0x8] sm:$0xff]
    %v1491 = vld [vmem:[%s1488 + $0x10] sm:$0xff]
    %v1492 = vld [vmem:[%s1488 + $0x18] sm:$0xff]
    %v1494 = vperm.slane %v1472, 0
    %v1497 = vsel %vm72, %v1480, 0
    %v1500 = vsel %vm72, %v1481, 0
    %v1503 = vsel %vm72, %v1482, 0
    %v1506 = vsel %vm72, %v1483, 0
    %v1509 = vsel %vm72, %v1484, 0
    %v1512 = vsel %vm72, %v1485, 0
    %v1515 = vsel %vm72, %v1486, 0
    %v1518 = vsel %vm72, %v1487, 0
    %1520 = vmatpush.msra.mxu0 0.0
    %1521 = vmatpush.msra.mxu0 0.0
    %1522 = vmatpush.msra.mxu0 0.0
    %1523 = vmatpush.msra.mxu0 0.0
    %1524 = vmatpush.msra.mxu0 0.0
    %1525 = vmatpush.msra.mxu0 0.0
    %1526 = vmatpush.msra.mxu0 0.0
    %1527 = vmatpush.msra.mxu0 0.0
    %1528 = vmatpush.msra.mxu0 0.0
    %1529 = vmatpush.msra.mxu0 0.0
    %1530 = vmatpush.msra.mxu0 0.0
    %1531 = vmatpush.msra.mxu0 0.0
    %1532 = vmatpush.msra.mxu0 %v1492
    %1533 = vmatpush.msra.mxu0 %v1491
    %1534 = vmatpush.msra.mxu0 %v1490
    %1535 = vmatpush.msra.mxu0 %v1489
    %1536 = vmatmul.f32.gmra.mxu0 %v1497
    %v1537 = vpop.f32.mrf.mxu0
    %v1538 = vadd.f32 %v1494, %v1537
    %1539 = vmatmul.f32.gmra.mxu0 %v1500
    %v1540 = vpop.f32.mrf.mxu0
    %v1541 = vadd.f32 %v1494, %v1540
    %1542 = vmatmul.f32.gmra.mxu0 %v1503
    %v1543 = vpop.f32.mrf.mxu0
    %v1544 = vadd.f32 %v1494, %v1543
    %1545 = vmatmul.f32.gmra.mxu0 %v1506
    %v1546 = vpop.f32.mrf.mxu0
    %v1547 = vadd.f32 %v1494, %v1546
    %1548 = vmatmul.f32.gmra.mxu0 %v1509
    %v1549 = vpop.f32.mrf.mxu0
    %v1550 = vadd.f32 %v1494, %v1549
    %1551 = vmatmul.f32.gmra.mxu0 %v1512
    %v1552 = vpop.f32.mrf.mxu0
    %v1553 = vadd.f32 %v1494, %v1552
    %1554 = vmatmul.f32.gmra.mxu0 %v1515
    %v1555 = vpop.f32.mrf.mxu0
    %v1556 = vadd.f32 %v1494, %v1555
    %1557 = vmatmul.f32.gmra.mxu0 %v1518
    %v1558 = vpop.f32.mrf.mxu0
    %v1559 = vadd.f32 %v1494, %v1558
    %1560 = vdwg.mxu0
    %s1561 = scalar_lea.vmem %s2, 4
    %v1562 = vld [vmem:[%s1561] sm:$0x3]
    %v1564 = vperm.slane %v1474, 0
    %v1567 = vsel %vm72, %v1562, 0
    %1569 = vmatpush.msra.mxu0 0.0
    %1570 = vmatpush.msra.mxu0 0.0
    %1571 = vmatpush.msra.mxu0 0.0
    %1572 = vmatpush.msra.mxu0 0.0
    %1573 = vmatpush.msra.mxu0 0.0
    %1574 = vmatpush.msra.mxu0 0.0
    %1575 = vmatpush.msra.mxu0 0.0
    %1576 = vmatpush.msra.mxu0 0.0
    %1577 = vmatpush.msra.mxu0 0.0
    %1578 = vmatpush.msra.mxu0 0.0
    %1579 = vmatpush.msra.mxu0 0.0
    %1580 = vmatpush.msra.mxu0 0.0
    %1581 = vmatpush.msra.mxu0 %v1479
    %1582 = vmatpush.msra.mxu0 %v1478
    %1583 = vmatpush.msra.mxu0 %v1477
    %1584 = vmatpush.msra.mxu0 %v1476
    %1585 = vmatmul.f32.gmra.mxu0 %v1567
    %v1586 = vpop.f32.mrf.mxu0
    %v1587 = vadd.f32 %v1564, %v1586
    %1588 = vdwg.mxu0
    %v1589 = vadd.f32 %v1538, %v1587
    %v1590 = vxor.u32 %v1589, 2147483648
    %v1591 = vmul.f32 %v1590, 1.442695
    %v1592 = vpow.pop %v1591
    %v1593 = vadd.f32 %v1592, 1.0
    %v1594 = vrcp.pop %v1593
    %v1595 = vmul.f32 %v1593, %v1594
    %v1596 = vsub.f32 1.0, %v1595
    %v1597 = vmul.f32 %v1594, %v1596
    %v1598 = vadd.f32 %v1594, %v1597
    %vm1599 = vweird.f32 %v1593
    %vm1600 = vweird.f32 %v1594
    %vm1601 = vmor %vm1599, %vm1600
    %v1602 = vsel %vm1601, %v1594, %v1598
    %v1603 = vand.u32 2147483647, %v1593
    %vm1604 = vcmp.eq.f32.partialorder %v1603, 8.507059e+37
    %v1605 = vand.u32 %v1593, 2147483648
    %v1606 = vor.u32 1.1754944e-38, %v1605
    %v1607 = vsel %vm1604, %v1606, %v1602
    %v1608 = vmul.f32 1.0, %v1607
    %1610 = vrot.lane.b32.xlu0 %v1587, 64
    %v1611 = vpop.permute.xlu0 %1610
    %v1613 = vmul.f32 %v1608, %v1611
    %1615 = vrot.lane.b32.xlu0 %v1613, 64
    %v1616 = vpop.permute.xlu0 %1615
    %v1618 = vadd.f32 %v1538, %v1616
    %v1619 = vtanh.pop %v1618
    %1621 = vrot.lane.b32.xlu0 %v1619, 64
    %v1622 = vpop.permute.xlu0 %1621
    %v1624 = vsub.f32 %v1562, %v1622
    %1626 = vrot.lane.b32.xlu0 %v1624, 32
    %v1627 = vpop.permute.xlu0 %1626
    %v1629 = vmul.f32 %v1608, %v1627
    %1631 = vrot.lane.b32.xlu0 %v1629, 32
    %v1632 = vpop.permute.xlu0 %1631
    %v1634 = vadd.f32 %v1619, %v1632
    %1636 = vrot.lane.b32.xlu0 %v1634, 64
    %v1637 = vpop.permute.xlu0 %1636
    %1639 = vst.msk [vmem:[#allocation2] sm:$0x3] %vm332, %v1637
    %v1640 = vsel %vm72, %v1637, 0
    %1642 = vmatpush.msra.mxu0 0.0
    %1643 = vmatpush.msra.mxu0 0.0
    %1644 = vmatpush.msra.mxu0 0.0
    %1645 = vmatpush.msra.mxu0 0.0
    %1646 = vmatpush.msra.mxu0 0.0
    %1647 = vmatpush.msra.mxu0 0.0
    %1648 = vmatpush.msra.mxu0 0.0
    %1649 = vmatpush.msra.mxu0 0.0
    %1650 = vmatpush.msra.mxu0 0.0
    %1651 = vmatpush.msra.mxu0 0.0
    %1652 = vmatpush.msra.mxu0 0.0
    %1653 = vmatpush.msra.mxu0 0.0
    %1654 = vmatpush.msra.mxu0 %v1479
    %1655 = vmatpush.msra.mxu0 %v1478
    %1656 = vmatpush.msra.mxu0 %v1477
    %1657 = vmatpush.msra.mxu0 %v1476
    %1658 = vmatmul.f32.gmra.mxu0 %v1640
    %v1659 = vpop.f32.mrf.mxu0
    %v1660 = vadd.f32 %v1564, %v1659
    %1661 = vdwg.mxu0
    %v1662 = vadd.f32 %v1541, %v1660
    %v1663 = vxor.u32 %v1662, 2147483648
    %v1664 = vmul.f32 %v1663, 1.442695
    %v1665 = vpow.pop %v1664
    %v1666 = vadd.f32 %v1665, 1.0
    %v1667 = vrcp.pop %v1666
    %v1668 = vmul.f32 %v1666, %v1667
    %v1669 = vsub.f32 1.0, %v1668
    %v1670 = vmul.f32 %v1667, %v1669
    %v1671 = vadd.f32 %v1667, %v1670
    %vm1672 = vweird.f32 %v1666
    %vm1673 = vweird.f32 %v1667
    %vm1674 = vmor %vm1672, %vm1673
    %v1675 = vsel %vm1674, %v1667, %v1671
    %v1676 = vand.u32 2147483647, %v1666
    %vm1677 = vcmp.eq.f32.partialorder %v1676, 8.507059e+37
    %v1678 = vand.u32 %v1666, 2147483648
    %v1679 = vor.u32 1.1754944e-38, %v1678
    %v1680 = vsel %vm1677, %v1679, %v1675
    %v1681 = vmul.f32 1.0, %v1680
    %1683 = vrot.lane.b32.xlu0 %v1660, 64
    %v1684 = vpop.permute.xlu0 %1683
    %v1686 = vmul.f32 %v1681, %v1684
    %1688 = vrot.lane.b32.xlu0 %v1686, 64
    %v1689 = vpop.permute.xlu0 %1688
    %v1691 = vadd.f32 %v1541, %v1689
    %v1692 = vtanh.pop %v1691
    %v1693 = vsub.f32 %v1634, %v1692
    %1695 = vrot.lane.b32.xlu0 %v1693, 96
    %v1696 = vpop.permute.xlu0 %1695
    %v1698 = vmul.f32 %v1681, %v1696
    %1700 = vrot.lane.b32.xlu0 %v1698, 32
    %v1701 = vpop.permute.xlu0 %1700
    %v1703 = vadd.f32 %v1692, %v1701
    %1705 = vrot.lane.b32.xlu0 %v1703, 64
    %v1706 = vpop.permute.xlu0 %1705
    %1708 = vst.msk [vmem:[#allocation2 + $0x8] sm:$0x3] %vm332, %v1706
    %v1709 = vsel %vm72, %v1706, 0
    %1711 = vmatpush.msra.mxu0 0.0
    %1712 = vmatpush.msra.mxu0 0.0
    %1713 = vmatpush.msra.mxu0 0.0
    %1714 = vmatpush.msra.mxu0 0.0
    %1715 = vmatpush.msra.mxu0 0.0
    %1716 = vmatpush.msra.mxu0 0.0
    %1717 = vmatpush.msra.mxu0 0.0
    %1718 = vmatpush.msra.mxu0 0.0
    %1719 = vmatpush.msra.mxu0 0.0
    %1720 = vmatpush.msra.mxu0 0.0
    %1721 = vmatpush.msra.mxu0 0.0
    %1722 = vmatpush.msra.mxu0 0.0
    %1723 = vmatpush.msra.mxu0 %v1479
    %1724 = vmatpush.msra.mxu0 %v1478
    %1725 = vmatpush.msra.mxu0 %v1477
    %1726 = vmatpush.msra.mxu0 %v1476
    %1727 = vmatmul.f32.gmra.mxu0 %v1709
    %v1728 = vpop.f32.mrf.mxu0
    %v1729 = vadd.f32 %v1564, %v1728
    %1730 = vdwg.mxu0
    %v1731 = vadd.f32 %v1544, %v1729
    %v1732 = vxor.u32 %v1731, 2147483648
    %v1733 = vmul.f32 %v1732, 1.442695
    %v1734 = vpow.pop %v1733
    %v1735 = vadd.f32 %v1734, 1.0
    %v1736 = vrcp.pop %v1735
    %v1737 = vmul.f32 %v1735, %v1736
    %v1738 = vsub.f32 1.0, %v1737
    %v1739 = vmul.f32 %v1736, %v1738
    %v1740 = vadd.f32 %v1736, %v1739
    %vm1741 = vweird.f32 %v1735
    %vm1742 = vweird.f32 %v1736
    %vm1743 = vmor %vm1741, %vm1742
    %v1744 = vsel %vm1743, %v1736, %v1740
    %v1745 = vand.u32 2147483647, %v1735
    %vm1746 = vcmp.eq.f32.partialorder %v1745, 8.507059e+37
    %v1747 = vand.u32 %v1735, 2147483648
    %v1748 = vor.u32 1.1754944e-38, %v1747
    %v1749 = vsel %vm1746, %v1748, %v1744
    %v1750 = vmul.f32 1.0, %v1749
    %1752 = vrot.lane.b32.xlu0 %v1729, 64
    %v1753 = vpop.permute.xlu0 %1752
    %v1755 = vmul.f32 %v1750, %v1753
    %1757 = vrot.lane.b32.xlu0 %v1755, 64
    %v1758 = vpop.permute.xlu0 %1757
    %v1760 = vadd.f32 %v1544, %v1758
    %v1761 = vtanh.pop %v1760
    %v1762 = vsub.f32 %v1703, %v1761
    %1764 = vrot.lane.b32.xlu0 %v1762, 96
    %v1765 = vpop.permute.xlu0 %1764
    %v1767 = vmul.f32 %v1750, %v1765
    %1769 = vrot.lane.b32.xlu0 %v1767, 32
    %v1770 = vpop.permute.xlu0 %1769
    %v1772 = vadd.f32 %v1761, %v1770
    %1774 = vrot.lane.b32.xlu0 %v1772, 64
    %v1775 = vpop.permute.xlu0 %1774
    %1777 = vst.msk [vmem:[#allocation2 + $0x10] sm:$0x3] %vm332, %v1775
    %v1778 = vsel %vm72, %v1775, 0
    %1780 = vmatpush.msra.mxu0 0.0
    %1781 = vmatpush.msra.mxu0 0.0
    %1782 = vmatpush.msra.mxu0 0.0
    %1783 = vmatpush.msra.mxu0 0.0
    %1784 = vmatpush.msra.mxu0 0.0
    %1785 = vmatpush.msra.mxu0 0.0
    %1786 = vmatpush.msra.mxu0 0.0
    %1787 = vmatpush.msra.mxu0 0.0
    %1788 = vmatpush.msra.mxu0 0.0
    %1789 = vmatpush.msra.mxu0 0.0
    %1790 = vmatpush.msra.mxu0 0.0
    %1791 = vmatpush.msra.mxu0 0.0
    %1792 = vmatpush.msra.mxu0 %v1479
    %1793 = vmatpush.msra.mxu0 %v1478
    %1794 = vmatpush.msra.mxu0 %v1477
    %1795 = vmatpush.msra.mxu0 %v1476
    %1796 = vmatmul.f32.gmra.mxu0 %v1778
    %v1797 = vpop.f32.mrf.mxu0
    %v1798 = vadd.f32 %v1564, %v1797
    %1799 = vdwg.mxu0
    %v1800 = vadd.f32 %v1547, %v1798
    %v1801 = vxor.u32 %v1800, 2147483648
    %v1802 = vmul.f32 %v1801, 1.442695
    %v1803 = vpow.pop %v1802
    %v1804 = vadd.f32 %v1803, 1.0
    %v1805 = vrcp.pop %v1804
    %v1806 = vmul.f32 %v1804, %v1805
    %v1807 = vsub.f32 1.0, %v1806
    %v1808 = vmul.f32 %v1805, %v1807
    %v1809 = vadd.f32 %v1805, %v1808
    %vm1810 = vweird.f32 %v1804
    %vm1811 = vweird.f32 %v1805
    %vm1812 = vmor %vm1810, %vm1811
    %v1813 = vsel %vm1812, %v1805, %v1809
    %v1814 = vand.u32 2147483647, %v1804
    %vm1815 = vcmp.eq.f32.partialorder %v1814, 8.507059e+37
    %v1816 = vand.u32 %v1804, 2147483648
    %v1817 = vor.u32 1.1754944e-38, %v1816
    %v1818 = vsel %vm1815, %v1817, %v1813
    %v1819 = vmul.f32 1.0, %v1818
    %1821 = vrot.lane.b32.xlu0 %v1798, 64
    %v1822 = vpop.permute.xlu0 %1821
    %v1824 = vmul.f32 %v1819, %v1822
    %1826 = vrot.lane.b32.xlu0 %v1824, 64
    %v1827 = vpop.permute.xlu0 %1826
    %v1829 = vadd.f32 %v1547, %v1827
    %v1830 = vtanh.pop %v1829
    %v1831 = vsub.f32 %v1772, %v1830
    %1833 = vrot.lane.b32.xlu0 %v1831, 96
    %v1834 = vpop.permute.xlu0 %1833
    %v1836 = vmul.f32 %v1819, %v1834
    %1838 = vrot.lane.b32.xlu0 %v1836, 32
    %v1839 = vpop.permute.xlu0 %1838
    %v1841 = vadd.f32 %v1830, %v1839
    %1843 = vrot.lane.b32.xlu0 %v1841, 64
    %v1844 = vpop.permute.xlu0 %1843
    %1846 = vst.msk [vmem:[#allocation2 + $0x18] sm:$0x3] %vm332, %v1844
    %v1847 = vsel %vm72, %v1844, 0
    %1849 = vmatpush.msra.mxu0 0.0
    %1850 = vmatpush.msra.mxu0 0.0
    %1851 = vmatpush.msra.mxu0 0.0
    %1852 = vmatpush.msra.mxu0 0.0
    %1853 = vmatpush.msra.mxu0 0.0
    %1854 = vmatpush.msra.mxu0 0.0
    %1855 = vmatpush.msra.mxu0 0.0
    %1856 = vmatpush.msra.mxu0 0.0
    %1857 = vmatpush.msra.mxu0 0.0
    %1858 = vmatpush.msra.mxu0 0.0
    %1859 = vmatpush.msra.mxu0 0.0
    %1860 = vmatpush.msra.mxu0 0.0
    %1861 = vmatpush.msra.mxu0 %v1479
    %1862 = vmatpush.msra.mxu0 %v1478
    %1863 = vmatpush.msra.mxu0 %v1477
    %1864 = vmatpush.msra.mxu0 %v1476
    %1865 = vmatmul.f32.gmra.mxu0 %v1847
    %v1866 = vpop.f32.mrf.mxu0
    %v1867 = vadd.f32 %v1564, %v1866
    %1868 = vdwg.mxu0
    %v1869 = vadd.f32 %v1550, %v1867
    %v1870 = vxor.u32 %v1869, 2147483648
    %v1871 = vmul.f32 %v1870, 1.442695
    %v1872 = vpow.pop %v1871
    %v1873 = vadd.f32 %v1872, 1.0
    %v1874 = vrcp.pop %v1873
    %v1875 = vmul.f32 %v1873, %v1874
    %v1876 = vsub.f32 1.0, %v1875
    %v1877 = vmul.f32 %v1874, %v1876
    %v1878 = vadd.f32 %v1874, %v1877
    %vm1879 = vweird.f32 %v1873
    %vm1880 = vweird.f32 %v1874
    %vm1881 = vmor %vm1879, %vm1880
    %v1882 = vsel %vm1881, %v1874, %v1878
    %v1883 = vand.u32 2147483647, %v1873
    %vm1884 = vcmp.eq.f32.partialorder %v1883, 8.507059e+37
    %v1885 = vand.u32 %v1873, 2147483648
    %v1886 = vor.u32 1.1754944e-38, %v1885
    %v1887 = vsel %vm1884, %v1886, %v1882
    %v1888 = vmul.f32 1.0, %v1887
    %1890 = vrot.lane.b32.xlu0 %v1867, 64
    %v1891 = vpop.permute.xlu0 %1890
    %v1893 = vmul.f32 %v1888, %v1891
    %1895 = vrot.lane.b32.xlu0 %v1893, 64
    %v1896 = vpop.permute.xlu0 %1895
    %v1898 = vadd.f32 %v1550, %v1896
    %v1899 = vtanh.pop %v1898
    %v1900 = vsub.f32 %v1841, %v1899
    %1902 = vrot.lane.b32.xlu0 %v1900, 96
    %v1903 = vpop.permute.xlu0 %1902
    %v1905 = vmul.f32 %v1888, %v1903
    %1907 = vrot.lane.b32.xlu0 %v1905, 32
    %v1908 = vpop.permute.xlu0 %1907
    %v1910 = vadd.f32 %v1899, %v1908
    %1912 = vrot.lane.b32.xlu0 %v1910, 64
    %v1913 = vpop.permute.xlu0 %1912
    %1915 = vst.msk [vmem:[#allocation2 + $0x20] sm:$0x3] %vm332, %v1913
    %v1916 = vsel %vm72, %v1913, 0
    %1918 = vmatpush.msra.mxu0 0.0
    %1919 = vmatpush.msra.mxu0 0.0
    %1920 = vmatpush.msra.mxu0 0.0
    %1921 = vmatpush.msra.mxu0 0.0
    %1922 = vmatpush.msra.mxu0 0.0
    %1923 = vmatpush.msra.mxu0 0.0
    %1924 = vmatpush.msra.mxu0 0.0
    %1925 = vmatpush.msra.mxu0 0.0
    %1926 = vmatpush.msra.mxu0 0.0
    %1927 = vmatpush.msra.mxu0 0.0
    %1928 = vmatpush.msra.mxu0 0.0
    %1929 = vmatpush.msra.mxu0 0.0
    %1930 = vmatpush.msra.mxu0 %v1479
    %1931 = vmatpush.msra.mxu0 %v1478
    %1932 = vmatpush.msra.mxu0 %v1477
    %1933 = vmatpush.msra.mxu0 %v1476
    %1934 = vmatmul.f32.gmra.mxu0 %v1916
    %v1935 = vpop.f32.mrf.mxu0
    %v1936 = vadd.f32 %v1564, %v1935
    %1937 = vdwg.mxu0
    %v1938 = vadd.f32 %v1553, %v1936
    %v1939 = vxor.u32 %v1938, 2147483648
    %v1940 = vmul.f32 %v1939, 1.442695
    %v1941 = vpow.pop %v1940
    %v1942 = vadd.f32 %v1941, 1.0
    %v1943 = vrcp.pop %v1942
    %v1944 = vmul.f32 %v1942, %v1943
    %v1945 = vsub.f32 1.0, %v1944
    %v1946 = vmul.f32 %v1943, %v1945
    %v1947 = vadd.f32 %v1943, %v1946
    %vm1948 = vweird.f32 %v1942
    %vm1949 = vweird.f32 %v1943
    %vm1950 = vmor %vm1948, %vm1949
    %v1951 = vsel %vm1950, %v1943, %v1947
    %v1952 = vand.u32 2147483647, %v1942
    %vm1953 = vcmp.eq.f32.partialorder %v1952, 8.507059e+37
    %v1954 = vand.u32 %v1942, 2147483648
    %v1955 = vor.u32 1.1754944e-38, %v1954
    %v1956 = vsel %vm1953, %v1955, %v1951
    %v1957 = vmul.f32 1.0, %v1956
    %1959 = vrot.lane.b32.xlu0 %v1936, 64
    %v1960 = vpop.permute.xlu0 %1959
    %v1962 = vmul.f32 %v1957, %v1960
    %1964 = vrot.lane.b32.xlu0 %v1962, 64
    %v1965 = vpop.permute.xlu0 %1964
    %v1967 = vadd.f32 %v1553, %v1965
    %v1968 = vtanh.pop %v1967
    %v1969 = vsub.f32 %v1910, %v1968
    %1971 = vrot.lane.b32.xlu0 %v1969, 96
    %v1972 = vpop.permute.xlu0 %1971
    %v1974 = vmul.f32 %v1957, %v1972
    %1976 = vrot.lane.b32.xlu0 %v1974, 32
    %v1977 = vpop.permute.xlu0 %1976
    %v1979 = vadd.f32 %v1968, %v1977
    %1981 = vrot.lane.b32.xlu0 %v1979, 64
    %v1982 = vpop.permute.xlu0 %1981
    %1984 = vst.msk [vmem:[#allocation2 + $0x28] sm:$0x3] %vm332, %v1982
    %v1985 = vsel %vm72, %v1982, 0
    %1987 = vmatpush.msra.mxu0 0.0
    %1988 = vmatpush.msra.mxu0 0.0
    %1989 = vmatpush.msra.mxu0 0.0
    %1990 = vmatpush.msra.mxu0 0.0
    %1991 = vmatpush.msra.mxu0 0.0
    %1992 = vmatpush.msra.mxu0 0.0
    %1993 = vmatpush.msra.mxu0 0.0
    %1994 = vmatpush.msra.mxu0 0.0
    %1995 = vmatpush.msra.mxu0 0.0
    %1996 = vmatpush.msra.mxu0 0.0
    %1997 = vmatpush.msra.mxu0 0.0
    %1998 = vmatpush.msra.mxu0 0.0
    %1999 = vmatpush.msra.mxu0 %v1479
    %2000 = vmatpush.msra.mxu0 %v1478
    %2001 = vmatpush.msra.mxu0 %v1477
    %2002 = vmatpush.msra.mxu0 %v1476
    %2003 = vmatmul.f32.gmra.mxu0 %v1985
    %v2004 = vpop.f32.mrf.mxu0
    %v2005 = vadd.f32 %v1564, %v2004
    %2006 = vdwg.mxu0
    %v2007 = vadd.f32 %v1556, %v2005
    %v2008 = vxor.u32 %v2007, 2147483648
    %v2009 = vmul.f32 %v2008, 1.442695
    %v2010 = vpow.pop %v2009
    %v2011 = vadd.f32 %v2010, 1.0
    %v2012 = vrcp.pop %v2011
    %v2013 = vmul.f32 %v2011, %v2012
    %v2014 = vsub.f32 1.0, %v2013
    %v2015 = vmul.f32 %v2012, %v2014
    %v2016 = vadd.f32 %v2012, %v2015
    %vm2017 = vweird.f32 %v2011
    %vm2018 = vweird.f32 %v2012
    %vm2019 = vmor %vm2017, %vm2018
    %v2020 = vsel %vm2019, %v2012, %v2016
    %v2021 = vand.u32 2147483647, %v2011
    %vm2022 = vcmp.eq.f32.partialorder %v2021, 8.507059e+37
    %v2023 = vand.u32 %v2011, 2147483648
    %v2024 = vor.u32 1.1754944e-38, %v2023
    %v2025 = vsel %vm2022, %v2024, %v2020
    %v2026 = vmul.f32 1.0, %v2025
    %2028 = vrot.lane.b32.xlu0 %v2005, 64
    %v2029 = vpop.permute.xlu0 %2028
    %v2031 = vmul.f32 %v2026, %v2029
    %2033 = vrot.lane.b32.xlu0 %v2031, 64
    %v2034 = vpop.permute.xlu0 %2033
    %v2036 = vadd.f32 %v1556, %v2034
    %v2037 = vtanh.pop %v2036
    %v2038 = vsub.f32 %v1979, %v2037
    %2040 = vrot.lane.b32.xlu0 %v2038, 96
    %v2041 = vpop.permute.xlu0 %2040
    %v2043 = vmul.f32 %v2026, %v2041
    %2045 = vrot.lane.b32.xlu0 %v2043, 32
    %v2046 = vpop.permute.xlu0 %2045
    %v2048 = vadd.f32 %v2037, %v2046
    %2050 = vrot.lane.b32.xlu0 %v2048, 64
    %v2051 = vpop.permute.xlu0 %2050
    %2053 = vst.msk [vmem:[#allocation2 + $0x30] sm:$0x3] %vm332, %v2051
    %v2054 = vsel %vm72, %v2051, 0
    %2056 = vmatpush.msra.mxu0 0.0
    %2057 = vmatpush.msra.mxu0 0.0
    %2058 = vmatpush.msra.mxu0 0.0
    %2059 = vmatpush.msra.mxu0 0.0
    %2060 = vmatpush.msra.mxu0 0.0
    %2061 = vmatpush.msra.mxu0 0.0
    %2062 = vmatpush.msra.mxu0 0.0
    %2063 = vmatpush.msra.mxu0 0.0
    %2064 = vmatpush.msra.mxu0 0.0
    %2065 = vmatpush.msra.mxu0 0.0
    %2066 = vmatpush.msra.mxu0 0.0
    %2067 = vmatpush.msra.mxu0 0.0
    %2068 = vmatpush.msra.mxu0 %v1479
    %2069 = vmatpush.msra.mxu0 %v1478
    %2070 = vmatpush.msra.mxu0 %v1477
    %2071 = vmatpush.msra.mxu0 %v1476
    %2072 = vmatmul.f32.gmra.mxu0 %v2054
    %v2073 = vpop.f32.mrf.mxu0
    %v2074 = vadd.f32 %v1564, %v2073
    %2075 = vdwg.mxu0
    %v2076 = vadd.f32 %v1559, %v2074
    %v2077 = vxor.u32 %v2076, 2147483648
    %v2078 = vmul.f32 %v2077, 1.442695
    %v2079 = vpow.pop %v2078
    %v2080 = vadd.f32 %v2079, 1.0
    %v2081 = vrcp.pop %v2080
    %v2082 = vmul.f32 %v2080, %v2081
    %v2083 = vsub.f32 1.0, %v2082
    %v2084 = vmul.f32 %v2081, %v2083
    %v2085 = vadd.f32 %v2081, %v2084
    %vm2086 = vweird.f32 %v2080
    %vm2087 = vweird.f32 %v2081
    %vm2088 = vmor %vm2086, %vm2087
    %v2089 = vsel %vm2088, %v2081, %v2085
    %v2090 = vand.u32 2147483647, %v2080
    %vm2091 = vcmp.eq.f32.partialorder %v2090, 8.507059e+37
    %v2092 = vand.u32 %v2080, 2147483648
    %v2093 = vor.u32 1.1754944e-38, %v2092
    %v2094 = vsel %vm2091, %v2093, %v2089
    %v2095 = vmul.f32 1.0, %v2094
    %2097 = vrot.lane.b32.xlu0 %v2074, 64
    %v2098 = vpop.permute.xlu0 %2097
    %v2100 = vmul.f32 %v2095, %v2098
    %2102 = vrot.lane.b32.xlu0 %v2100, 64
    %v2103 = vpop.permute.xlu0 %2102
    %v2105 = vadd.f32 %v1559, %v2103
    %v2106 = vtanh.pop %v2105
    %v2107 = vsub.f32 %v2048, %v2106
    %2109 = vrot.lane.b32.xlu0 %v2107, 96
    %v2110 = vpop.permute.xlu0 %2109
    %v2112 = vmul.f32 %v2095, %v2110
    %2114 = vrot.lane.b32.xlu0 %v2112, 32
    %v2115 = vpop.permute.xlu0 %2114
    %v2117 = vadd.f32 %v2106, %v2115
    %2119 = vrot.lane.b32.xlu0 %v2117, 64
    %v2120 = vpop.permute.xlu0 %2119
    %2122 = vst.msk [vmem:[#allocation2 + $0x38] sm:$0x3] %vm332, %v2120
    %s2123 = scalar_lea.vmem %s12, 4
    %2124 = vst.msk [vmem:[%s2123] sm:$0x3] %vm332, %v2120
    %v2125 = vld [vmem:[#allocation2] sm:$0xff]
    %v2126 = vld [vmem:[#allocation2 + $0x8] sm:$0xff]
    %v2127 = vld [vmem:[#allocation2 + $0x10] sm:$0xff]
    %v2128 = vld [vmem:[#allocation2 + $0x18] sm:$0xff]
    %v2129 = vld [vmem:[#allocation2 + $0x20] sm:$0xff]
    %v2130 = vld [vmem:[#allocation2 + $0x28] sm:$0xff]
    %v2131 = vld [vmem:[#allocation2 + $0x30] sm:$0xff]
    %v2132 = vld [vmem:[#allocation2 + $0x38] sm:$0xff]
    %v2133 = vld [vmem:[%s9] sm:$0xff]
    %v2134 = vld [vmem:[%s9 + $0x8] sm:$0xff]
    %v2135 = vld [vmem:[%s9 + $0x10] sm:$0xff]
    %v2136 = vld [vmem:[%s9 + $0x18] sm:$0xff]
    %v2137 = vld [vmem:[%s10] sm:$0x1]
    %v2139 = vperm.slane %v2137, 0
    %v2142 = vsel %vm72, %v2125, 0
    %v2145 = vsel %vm72, %v2126, 0
    %v2148 = vsel %vm72, %v2127, 0
    %v2151 = vsel %vm72, %v2128, 0
    %v2154 = vsel %vm72, %v2129, 0
    %v2157 = vsel %vm72, %v2130, 0
    %v2160 = vsel %vm72, %v2131, 0
    %v2163 = vsel %vm72, %v2132, 0
    %2165 = vmatpush.msra.mxu0 0.0
    %2166 = vmatpush.msra.mxu0 0.0
    %2167 = vmatpush.msra.mxu0 0.0
    %2168 = vmatpush.msra.mxu0 0.0
    %2169 = vmatpush.msra.mxu0 0.0
    %2170 = vmatpush.msra.mxu0 0.0
    %2171 = vmatpush.msra.mxu0 0.0
    %2172 = vmatpush.msra.mxu0 0.0
    %2173 = vmatpush.msra.mxu0 0.0
    %2174 = vmatpush.msra.mxu0 0.0
    %2175 = vmatpush.msra.mxu0 0.0
    %2176 = vmatpush.msra.mxu0 0.0
    %2177 = vmatpush.msra.mxu0 %v2136
    %2178 = vmatpush.msra.mxu0 %v2135
    %2179 = vmatpush.msra.mxu0 %v2134
    %2180 = vmatpush.msra.mxu0 %v2133
    %2181 = vmatmul.f32.gmra.mxu0 %v2142
    %v2182 = vpop.f32.mrf.mxu0
    %v2183 = vadd.f32 %v2139, %v2182
    %2184 = vmatmul.f32.gmra.mxu0 %v2145
    %v2185 = vpop.f32.mrf.mxu0
    %v2186 = vadd.f32 %v2139, %v2185
    %2187 = vmatmul.f32.gmra.mxu0 %v2148
    %v2188 = vpop.f32.mrf.mxu0
    %v2189 = vadd.f32 %v2139, %v2188
    %2190 = vmatmul.f32.gmra.mxu0 %v2151
    %v2191 = vpop.f32.mrf.mxu0
    %v2192 = vadd.f32 %v2139, %v2191
    %2193 = vmatmul.f32.gmra.mxu0 %v2154
    %v2194 = vpop.f32.mrf.mxu0
    %v2195 = vadd.f32 %v2139, %v2194
    %2196 = vmatmul.f32.gmra.mxu0 %v2157
    %v2197 = vpop.f32.mrf.mxu0
    %v2198 = vadd.f32 %v2139, %v2197
    %2199 = vmatmul.f32.gmra.mxu0 %v2160
    %v2200 = vpop.f32.mrf.mxu0
    %v2201 = vadd.f32 %v2139, %v2200
    %2202 = vmatmul.f32.gmra.mxu0 %v2163
    %v2203 = vpop.f32.mrf.mxu0
    %v2204 = vadd.f32 %v2139, %v2203
    %2205 = vdwg.mxu0
    %2206 = vst [vmem:[%s11] sm:$0xff] %v2183
    %2207 = vst [vmem:[%s11 + $0x8] sm:$0xff] %v2186
    %2208 = vst [vmem:[%s11 + $0x10] sm:$0xff] %v2189
    %2209 = vst [vmem:[%s11 + $0x18] sm:$0xff] %v2192
    %2210 = vst [vmem:[%s11 + $0x20] sm:$0xff] %v2195
    %2211 = vst [vmem:[%s11 + $0x28] sm:$0xff] %v2198
    %2212 = vst [vmem:[%s11 + $0x30] sm:$0xff] %v2201
    %2213 = vst [vmem:[%s11 + $0x38] sm:$0xff] %v2204
    // Predicated region
    $region54: #{gru_dynamic_forward.1} parent=1 // pred_check
      _
    $region55: #{gru_dynamic_forward.1} parent=1 // pred_check_branch
      %2215 = sbr.rel (0) target = $region57
    $region56: #{gru_dynamic_forward.1} parent=1 // pred_region
      _
    $region57: #{gru_dynamic_forward.1} parent=1 // pred_fallthru
      _
    // Predicated region
    $region58: #{gru_dynamic_forward.1} parent=1 // pred_check
      _
    $region59: #{gru_dynamic_forward.1} parent=1 // pred_check_branch
      %2217 = sbr.rel (0) target = $region61
    $region60: #{gru_dynamic_forward.1} parent=1 // pred_region
      _
    $region61: #{gru_dynamic_forward.1} parent=1 // pred_fallthru
      _
    // Predicated region
    $region62: #{gru_dynamic_forward.1} parent=1 // pred_check
      _
    $region63: #{gru_dynamic_forward.1} parent=1 // pred_check_branch
      %2219 = sbr.rel (0) target = $region65
    $region64: #{gru_dynamic_forward.1} parent=1 // pred_region
      _
    $region65: #{gru_dynamic_forward.1} parent=1 // pred_fallthru
      _
    // Predicated region
    $region66: #{gru_dynamic_forward.1} parent=1 // pred_check
      _
    $region67: #{gru_dynamic_forward.1} parent=1 // pred_check_branch
      %2221 = sbr.rel (0) target = $region69
    $region68: #{gru_dynamic_forward.1} parent=1 // pred_region
      _
    $region69: #{gru_dynamic_forward.1} parent=1 // pred_fallthru
      _
    %2222 = vsyncpa [#allocation5], 1
    %2223 = vsyncpa [#allocation7], 1

</llo_original>
